<compile_context>
chip_gen: v7x
topology: tpu7x:2x2x1
jax: 0.10.0
libtpu: 0.0.40
codegen_flags: <defaults>
</compile_context>

<pallas_src>
import math
import functools

import jax
import jax.numpy as jnp
from jax import lax
from jax.experimental import pallas as pl
from jax.experimental.pallas import tpu as pltpu


# ----------------------------------------------------------------------------
# Kernel 1: ChanLayerNorm3d + 1x1x1 QKV conv + fused per-head L2 norm of q, k.
# ----------------------------------------------------------------------------
def _ln_qkv_kernel(x_ref, g_ref, b_ref, w_ref, gmat_ref, o_ref, *, eps, qk_cols):
    x = x_ref[...].astype(jnp.float32)                         # (tm, C)
    mean = jnp.mean(x, axis=-1, keepdims=True)
    var = jnp.mean((x - mean) ** 2, axis=-1, keepdims=True)    # unbiased=False
    xn = (x - mean) / jnp.sqrt(var + eps)
    xn = xn * g_ref[...] + b_ref[...]

    # 1x1x1 conv == per-row matmul (kept f32: top-k probe fidelity, HBM-bound).
    qkv = jnp.dot(xn, w_ref[...], preferred_element_type=jnp.float32)  # (tm, CO_pad)

    # F.normalize(q/k, dim=head-channel): per-head sum of squares via a
    # constant group-selector matmul (keeps the reduction on the MXU, no
    # cross-lane reshuffles), then divide by max(norm, 1e-12) on q/k columns.
    gs = jnp.dot(qkv * qkv, gmat_ref[...], preferred_element_type=jnp.float32)
    col = lax.broadcasted_iota(jnp.int32, (1, qkv.shape[-1]), 1)
    den = jnp.where(col < qk_cols, jnp.maximum(jnp.sqrt(gs), 1e-12), 1.0)
    o_ref[...] = qkv / den


def ln_qkv_norm(x_rows, g, b, w_qkv, *, heads, dim_head, eps=1e-5, tm=1024):
    M, C = x_rows.shape
    inner = heads * dim_head
    CO = 3 * inner
    CO_pad = pl.cdiv(CO, 128) * 128                   # lane-dense output columns

    tm = min(tm, pl.cdiv(M, 8) * 8)
    M_pad = pl.cdiv(M, tm) * tm
    x_pad = x_rows
    if M_pad != M:                                    # pad rows instead of assert
        x_pad = jnp.zeros((M_pad, C), x_rows.dtype).at[:M].set(x_rows)

    w_pad = jnp.zeros((C, CO_pad), jnp.float32).at[:, :CO].set(w_qkv)

    cols = jnp.arange(CO_pad)
    gmat = ((cols[:, None] // dim_head) == (cols[None, :] // dim_head)) & (
        cols[None, :] < 2 * inner
    )
    gmat = gmat.astype(jnp.float32)                   # (CO_pad, CO_pad), VMEM-resident

    out = pl.pallas_call(
        functools.partial(_ln_qkv_kernel, eps=eps, qk_cols=2 * inner),
        out_shape=jax.ShapeDtypeStruct((M_pad, CO_pad), jnp.float32),
        grid_spec=pltpu.PrefetchScalarGridSpec(
            num_scalar_prefetch=0,
            grid=(M_pad // tm,),
            in_specs=[
                pl.BlockSpec((tm, C), lambda i: (i, 0)),
                pl.BlockSpec((1, C), lambda i: (0, 0)),
                pl.BlockSpec((1, C), lambda i: (0, 0)),
                pl.BlockSpec((C, CO_pad), lambda i: (0, 0)),
                pl.BlockSpec((CO_pad, CO_pad), lambda i: (0, 0)),
            ],
            out_specs=pl.BlockSpec((tm, CO_pad), lambda i: (i, 0)),
        ),
        compiler_params=pltpu.CompilerParams(dimension_semantics=("parallel",)),
    )(x_pad, g, b, w_pad, gmat)
    return out[:M, :CO]


# ----------------------------------------------------------------------------
# Kernel 2: attention over flattened (pruned) tokens, tiled over Nq.
#   sim = q @ k^T ; attn = softmax(sim) ; out = attn @ v   (no scale, p=0 drop)
#   K/V index_maps depend only on the head axis -> VMEM-resident across Nq tiles.
#   Output stored in bf16 (memory-bound tail; accepted tolerance vs reference).
# ----------------------------------------------------------------------------
def _attn_kernel(q_ref, k_ref, v_ref, o_ref):
    q = q_ref[0]                                               # (tq, c)  bf16
    k = k_ref[0]                                               # (Nk, c)  bf16
    v = v_ref[0]                                               # (Nk, c)  bf16
    sim = lax.dot_general(q, k, (((1,), (1,)), ((), ())),
                          preferred_element_type=jnp.float32)  # (tq, Nk) f32
    sim = sim - jnp.max(sim, axis=-1, keepdims=True)
    p = jnp.exp(sim)
    inv = pl.reciprocal(jnp.sum(p, axis=-1, keepdims=True), approx=True)
    attn = (p * inv).astype(v.dtype)
    out = lax.dot_general(attn, v, (((1,), (0,)), ((), ())),
                          preferred_element_type=jnp.float32)  # (tq, c) f32
    o_ref[0] = out.astype(o_ref.dtype)                         # bf16 store


def attention(q_flat, k_flat, v_flat, *, tq=256):
    BH, Nq, c = q_flat.shape
    _, Nk, _ = k_flat.shape
    tq = min(tq, pl.cdiv(Nq, 8) * 8)
    Nq_pad = pl.cdiv(Nq, tq) * tq
    if Nq_pad != Nq:
        q_flat = jnp.zeros((BH, Nq_pad, c), q_flat.dtype).at[:, :Nq].set(q_flat)

    out = pl.pallas_call(
        _attn_kernel,
        out_shape=jax.ShapeDtypeStruct((BH, Nq_pad, c), jnp.bfloat16),
        grid_spec=pltpu.PrefetchScalarGridSpec(
            num_scalar_prefetch=0,
            grid=(BH, Nq_pad // tq),
            in_specs=[
                pl.BlockSpec((1, tq, c), lambda i, j: (i, j, 0)),
                # K/V depend only on the head index -> stay VMEM-resident
                # across all Nq tiles of that head (no re-DMA).
                pl.BlockSpec((1, Nk, c), lambda i, j: (i, 0, 0)),
                pl.BlockSpec((1, Nk, c), lambda i, j: (i, 0, 0)),
            ],
            out_specs=pl.BlockSpec((1, tq, c), lambda i, j: (i, j, 0)),
        ),
        compiler_params=pltpu.CompilerParams(
            dimension_semantics=("parallel", "parallel"),
            vmem_limit_bytes=48 * 1024 * 1024,
        ),
    )(q_flat, k_flat, v_flat)
    return out[:, :Nq]


# ----------------------------------------------------------------------------
# Kernel 3: output 1x1x1 conv, presented as a lane-dense (…, G*dim) matmul.
# ----------------------------------------------------------------------------
def _proj_kernel(x_ref, w_ref, b_ref, o_ref):
    x = x_ref[...]
    if x.dtype != jnp.bfloat16:                       # static dtype check
        x = x.astype(jnp.bfloat16)
    acc = jnp.dot(x, w_ref[...], preferred_element_type=jnp.float32)
    o_ref[...] = acc + b_ref[...]


def proj_out(x_rows, w, bias, *, tm_g=512):
    M, CI = x_rows.shape
    CO = w.shape[1]
    # Fold G consecutive rows into one kernel row so the stored last dim is a
    # multiple of 128 lanes (dense vst instead of masked stores on CO=dim).
    G = 128 // math.gcd(CO, 128)
    w_big = jnp.kron(jnp.eye(G, dtype=jnp.float32), w).astype(jnp.bfloat16)  # (G*CI, G*CO)
    b_big = jnp.tile(bias.reshape(1, CO), (1, G)).astype(jnp.float32)        # (1, G*CO)

    Mg = pl.cdiv(M, G)
    tm_g = min(tm_g, pl.cdiv(Mg, 8) * 8)
    Mg_pad = pl.cdiv(Mg, tm_g) * tm_g
    M_pad = Mg_pad * G
    x_pad = x_rows
    if M_pad != M:
        x_pad = jnp.zeros((M_pad, CI), x_rows.dtype).at[:M].set(x_rows)
    x_g = x_pad.reshape(Mg_pad, G * CI)               # pure reshape, no transpose

    out = pl.pallas_call(
        _proj_kernel,
        out_shape=jax.ShapeDtypeStruct((Mg_pad, G * CO), jnp.float32),
        grid_spec=pltpu.PrefetchScalarGridSpec(
            num_scalar_prefetch=0,
            grid=(Mg_pad // tm_g,),
            in_specs=[
                pl.BlockSpec((tm_g, G * CI), lambda i: (i, 0)),
                pl.BlockSpec((G * CI, G * CO), lambda i: (0, 0)),
                pl.BlockSpec((1, G * CO), lambda i: (0, 0)),
            ],
            out_specs=pl.BlockSpec((tm_g, G * CO), lambda i: (i, 0)),
        ),
        compiler_params=pltpu.CompilerParams(dimension_semantics=("parallel",)),
    )(x_g, w_big, b_big)
    return out.reshape(M_pad, CO)[:M]


# ----------------------------------------------------------------------------
# DPSA3d forward (plain-JAX glue around the Pallas kernels).
# ----------------------------------------------------------------------------
def dpsa3d_forward(x, params, *, heads, dim_head,
                   depth_top_k=-1, height_top_k=-1, width_top_k=-1):
    # x: (B, dim, D, H, W) float32 — NCDHW, matching the PyTorch module.
    b, dim, D0, H0, W0 = x.shape
    inner = heads * dim_head
    c = dim_head

    depth_top_k = depth_top_k if depth_top_k != -1 else int(math.ceil(D0 ** 0.5))
    height_top_k = height_top_k if height_top_k != -1 else int(math.ceil(H0 ** 0.5))
    width_top_k = width_top_k if width_top_k != -1 else int(math.ceil(W0 ** 0.5))

    # --- LayerNorm + to_qkv + per-head L2 norm of q/k (Pallas kernel) ---
    x_rows = jnp.transpose(x, (0, 2, 3, 4, 1)).reshape(b * D0 * H0 * W0, dim)
    qkv_rows = ln_qkv_norm(x_rows, params["ln_g"], params["ln_b"], params["w_qkv"],
                           heads=heads, dim_head=dim_head)      # (M, 3*inner) f32

    # split into per-head channels-last tensors: (b*heads, D, H, W, c)
    # TODO(synk): q could be fed to the attention kernel straight from the
    #             (M, CO_pad) slab, but the 16-column head slice violates the
    #             128-lane BlockSpec constraint; kept materialized.
    qkv = qkv_rows.reshape(b, D0, H0, W0, 3, heads, c)
    qkv = jnp.transpose(qkv, (4, 0, 5, 1, 2, 3, 6)).reshape(
        3, b * heads, D0, H0, W0, c)
    q, k, v = qkv[0], qkv[1], qkv[2]
    bh = b * heads

    q_abs = jnp.abs(q)
    D, H, W = D0, H0, W0

    # --- depth pruning ---
    if depth_top_k < D:
        score = jnp.sum(jnp.sum(q_abs, axis=(2, 3)) * jnp.sum(jnp.abs(k), axis=(2, 3)),
                        axis=-1)                                # (bh, D)
        _, idx = lax.top_k(score, depth_top_k)
        idx = jnp.broadcast_to(idx[:, :, None, None, None],
                               (bh, depth_top_k, H, W, c))
        k = jnp.take_along_axis(k, idx, axis=1)
        v = jnp.take_along_axis(v, idx, axis=1)
        D = depth_top_k

    # --- height pruning ---
    if height_top_k < H:
        score = jnp.sum(jnp.sum(q_abs, axis=(1, 3)) * jnp.sum(jnp.abs(k), axis=(1, 3)),
                        axis=-1)                                # (bh, H)
        _, idx = lax.top_k(score, height_top_k)
        idx = jnp.broadcast_to(idx[:, None, :, None, None],
                               (bh, D, height_top_k, W, c))
        k = jnp.take_along_axis(k, idx, axis=2)
        v = jnp.take_along_axis(v, idx, axis=2)
        H = height_top_k

    # --- width pruning ---
    if width_top_k < W:
        score = jnp.sum(jnp.sum(q_abs, axis=(1, 2)) * jnp.sum(jnp.abs(k), axis=(1, 2)),
                        axis=-1)                                # (bh, W)
        _, idx = lax.top_k(score, width_top_k)
        idx = jnp.broadcast_to(idx[:, None, None, :, None],
                               (bh, D, H, width_top_k, c))
        k = jnp.take_along_axis(k, idx, axis=3)
        v = jnp.take_along_axis(v, idx, axis=3)
        W = width_top_k

    # flatten_to_hidden_dim is a pure reshape in channels-last layout
    Nq = D0 * H0 * W0
    q_flat = q.reshape(bh, Nq, c)
    k_flat = k.reshape(bh, D * H * W, c)
    v_flat = v.reshape(bh, D * H * W, c)

    # --- attention (Pallas kernel, bf16 operands / f32 accumulation / bf16 out) ---
    out_flat = attention(q_flat.astype(jnp.bfloat16),
                         k_flat.astype(jnp.bfloat16),
                         v_flat.astype(jnp.bfloat16))           # (bh, Nq, c) bf16

    # Reproduce the reference's raw .view of contiguous (bh, Nq, c) memory as
    # (bh, c, D0, H0, W0) exactly (byte reinterpretation, NOT a transpose).
    out = out_flat.reshape(bh, c, D0, H0, W0).reshape(b, inner, D0, H0, W0)

    # --- to_out 1x1x1 conv (Pallas kernel) ---
    out_rows = jnp.transpose(out, (0, 2, 3, 4, 1)).reshape(b * D0 * H0 * W0, inner)
    y_rows = proj_out(out_rows, params["w_out"], params["b_out"])
    y = jnp.transpose(y_rows.reshape(b, D0, H0, W0, dim), (0, 4, 1, 2, 3))
    return y  # (B, dim, D0, H0, W0)


# ----------------------------------------------------------------------------
# Main
# ----------------------------------------------------------------------------
if __name__ == "__main__":
    B, DIM, D, H, W = 2, 8, 4, 8, 8
    HEADS, DIM_HEAD = 2, 16
    INNER = HEADS * DIM_HEAD

    key = jax.random.PRNGKey(0)
    kx, kq, ko, kb = jax.random.split(key, 4)

    x = jax.random.normal(kx, (B, DIM, D, H, W), dtype=jnp.float32)

    params = {
        # ChanLayerNorm3d: g=ones, b=zeros, stored as (1, dim)
        "ln_g": jnp.ones((1, DIM), dtype=jnp.float32),
        "ln_b": jnp.zeros((1, DIM), dtype=jnp.float32),
        # to_qkv: Conv3d(dim, 3*inner, 1, bias=False) -> (dim, 3*inner)
        "w_qkv": 0.02 * jax.random.normal(kq, (DIM, 3 * INNER), dtype=jnp.float32),
        # to_out: Conv3d(inner, dim, 1) -> (inner, dim) + (1, dim) bias
        "w_out": 0.02 * jax.random.normal(ko, (INNER, DIM), dtype=jnp.float32),
        "b_out": 0.01 * jax.random.normal(kb, (1, DIM), dtype=jnp.float32),
    }

    fwd = jax.jit(functools.partial(dpsa3d_forward, heads=HEADS, dim_head=DIM_HEAD))
    y = fwd(x, params)
    jax.block_until_ready(y)
    assert y.shape == (B, DIM, D, H, W)
    assert bool(jnp.all(jnp.isfinite(y)))
    print("KERNEL_OK")
</pallas_src>

<mosaic_0001>
module attributes {stable_mosaic.version = 11 : i64} {
  func.func private @main(%arg0: i32) attributes {dimension_semantics = [#tpu.dimension_semantics<core_parallel>], iteration_bounds = array<i64: 2>, tpu.core_type = #tpu.core_type<sc_scalar_subcore>, window_params = []} {
    return
  }
}

module attributes {stable_mosaic.version = 11 : i64} {
  func.func private @main(%arg0: i32) attributes {dimension_semantics = [#tpu.dimension_semantics<core_parallel>], iteration_bounds = array<i64: 2>, tpu.core_type = #tpu.core_type<sc_scalar_subcore>, window_params = []} {
    return
  }
}

module attributes {stable_mosaic.version = 11 : i64} {
  func.func @_ln_qkv_kernel(%arg0: i32, %arg1: memref<512x8xf32, #tpu.memory_space<vmem>>, %arg2: memref<1x8xf32, #tpu.memory_space<vmem>>, %arg3: memref<1x8xf32, #tpu.memory_space<vmem>>, %arg4: memref<8x128xf32, #tpu.memory_space<vmem>>, %arg5: memref<128x128xf32, #tpu.memory_space<vmem>>, %arg6: memref<512x128xf32, #tpu.memory_space<vmem>>) attributes {dimension_semantics = [#tpu.dimension_semantics<parallel>], iteration_bounds = array<i64: 1>, scalar_prefetch = 0 : i64, scratch_operands = 0 : i64, tpu.core_type = #tpu.core_type<tc>, window_params = [{transform_indices = @transform_0, window_bounds = array<i64: 512, 8>}, {pipeline_mode = #tpu.pipeline_mode<synchronous>, transform_indices = @transform_1, window_bounds = array<i64: 1, 8>}, {pipeline_mode = #tpu.pipeline_mode<synchronous>, transform_indices = @transform_2, window_bounds = array<i64: 1, 8>}, {pipeline_mode = #tpu.pipeline_mode<synchronous>, transform_indices = @transform_3, window_bounds = array<i64: 8, 128>}, {pipeline_mode = #tpu.pipeline_mode<synchronous>, transform_indices = @transform_4, window_bounds = array<i64: 128, 128>}, {transform_indices = @transform_5, window_bounds = array<i64: 512, 128>}]} {
    %c0 = arith.constant 0 : index
    %c0_0 = arith.constant 0 : index
    %0 = vector.load %arg1[%c0, %c0_0] : memref<512x8xf32, #tpu.memory_space<vmem>>, vector<512x8xf32>
    %cst = arith.constant dense<0.000000e+00> : vector<512xf32>
    %1 = vector.multi_reduction <add>, %0, %cst [1] : vector<512x8xf32> to vector<512xf32>
    %2 = vector.shape_cast %1 : vector<512xf32> to vector<512x1xf32>
    %cst_1 = arith.constant 8.000000e+00 : f32
    %3 = vector.broadcast %cst_1 : f32 to vector<512x1xf32>
    %4 = arith.divf %2, %3 : vector<512x1xf32>
    %5 = vector.broadcast %4 : vector<512x1xf32> to vector<512x8xf32>
    %6 = arith.subf %0, %5 : vector<512x8xf32>
    %7 = arith.mulf %6, %6 : vector<512x8xf32>
    %cst_2 = arith.constant dense<0.000000e+00> : vector<512xf32>
    %8 = vector.multi_reduction <add>, %7, %cst_2 [1] : vector<512x8xf32> to vector<512xf32>
    %9 = vector.shape_cast %8 : vector<512xf32> to vector<512x1xf32>
    %cst_3 = arith.constant 8.000000e+00 : f32
    %10 = vector.broadcast %cst_3 : f32 to vector<512x1xf32>
    %11 = arith.divf %9, %10 : vector<512x1xf32>
    %12 = vector.broadcast %4 : vector<512x1xf32> to vector<512x8xf32>
    %13 = arith.subf %0, %12 : vector<512x8xf32>
    %cst_4 = arith.constant 9.99999974E-6 : f32
    %14 = vector.broadcast %cst_4 : f32 to vector<512x1xf32>
    %15 = arith.addf %11, %14 : vector<512x1xf32>
    %16 = math.sqrt %15 : vector<512x1xf32>
    %17 = vector.broadcast %16 : vector<512x1xf32> to vector<512x8xf32>
    %18 = arith.divf %13, %17 : vector<512x8xf32>
    %c0_5 = arith.constant 0 : index
    %c0_6 = arith.constant 0 : index
    %19 = vector.load %arg2[%c0_5, %c0_6] : memref<1x8xf32, #tpu.memory_space<vmem>>, vector<1x8xf32>
    %20 = vector.broadcast %19 : vector<1x8xf32> to vector<512x8xf32>
    %21 = arith.mulf %18, %20 : vector<512x8xf32>
    %c0_7 = arith.constant 0 : index
    %c0_8 = arith.constant 0 : index
    %22 = vector.load %arg3[%c0_7, %c0_8] : memref<1x8xf32, #tpu.memory_space<vmem>>, vector<1x8xf32>
    %23 = vector.broadcast %22 : vector<1x8xf32> to vector<512x8xf32>
    %24 = arith.addf %21, %23 : vector<512x8xf32>
    %c0_9 = arith.constant 0 : index
    %c0_10 = arith.constant 0 : index
    %25 = vector.load %arg4[%c0_9, %c0_10] : memref<8x128xf32, #tpu.memory_space<vmem>>, vector<8x128xf32>
    %cst_11 = arith.constant dense<0.000000e+00> : vector<512x128xf32>
    %26 = tpu.matmul %24, %25, %cst_11 {dimension_numbers = #tpu.dot_dimension_numbers<[1], [0], [0], [1], [0, 0, 1, 1], [], []>} : vector<512x8xf32>, vector<8x128xf32>, vector<512x128xf32> -> vector<512x128xf32>
    %27 = arith.mulf %26, %26 : vector<512x128xf32>
    %c0_12 = arith.constant 0 : index
    %c0_13 = arith.constant 0 : index
    %28 = vector.load %arg5[%c0_12, %c0_13] : memref<128x128xf32, #tpu.memory_space<vmem>>, vector<128x128xf32>
    %cst_14 = arith.constant dense<0.000000e+00> : vector<512x128xf32>
    %29 = tpu.matmul %27, %28, %cst_14 {dimension_numbers = #tpu.dot_dimension_numbers<[1], [0], [0], [1], [0, 0, 1, 1], [], []>} : vector<512x128xf32>, vector<128x128xf32>, vector<512x128xf32> -> vector<512x128xf32>
    %30 = tpu.iota {dimensions = array<i32: 1>} : vector<1x128xi32>
    %c64_i32 = arith.constant 64 : i32
    %31 = vector.broadcast %c64_i32 : i32 to vector<1x128xi32>
    %32 = arith.cmpi slt, %30, %31 : vector<1x128xi32>
    %33 = math.sqrt %29 : vector<512x128xf32>
    %cst_15 = arith.constant 9.99999996E-13 : f32
    %34 = vector.broadcast %cst_15 : f32 to vector<512x128xf32>
    %35 = arith.maximumf %33, %34 : vector<512x128xf32>
    %cst_16 = arith.constant 1.000000e+00 : f32
    %36 = vector.shape_cast %32 : vector<1x128xi1> to vector<1x128xi1>
    %37 = vector.broadcast %36 : vector<1x128xi1> to vector<512x128xi1>
    %38 = vector.broadcast %cst_16 : f32 to vector<512x128xf32>
    %39 = arith.select %37, %35, %38 : vector<512x128xi1>, vector<512x128xf32>
    %40 = arith.divf %26, %39 : vector<512x128xf32>
    %c0_17 = arith.constant 0 : index
    %c0_18 = arith.constant 0 : index
    %41 = vector.load %arg6[%c0_17, %c0_18] : memref<512x128xf32, #tpu.memory_space<vmem>>, vector<512x128xf32>
    tpu.vector_store %arg6[%c0_17, %c0_18], %40 {strides = array<i32>} : memref<512x128xf32, #tpu.memory_space<vmem>>, vector<512x128xf32>,
    return
  }
  func.func @transform_0(%arg0: i32) -> (i32, i32) {
    %c0_i32 = arith.constant 0 : i32
    %c0_i32_0 = arith.constant 0 : i32
    return %arg0, %c0_i32 : i32, i32
  }
  func.func @transform_1(%arg0: i32) -> (i32, i32) {
    %c0_i32 = arith.constant 0 : i32
    %c0_i32_0 = arith.constant 0 : i32
    %c0_i32_1 = arith.constant 0 : i32
    return %c0_i32, %c0_i32_0 : i32, i32
  }
  func.func @transform_2(%arg0: i32) -> (i32, i32) {
    %c0_i32 = arith.constant 0 : i32
    %c0_i32_0 = arith.constant 0 : i32
    %c0_i32_1 = arith.constant 0 : i32
    return %c0_i32, %c0_i32_0 : i32, i32
  }
  func.func @transform_3(%arg0: i32) -> (i32, i32) {
    %c0_i32 = arith.constant 0 : i32
    %c0_i32_0 = arith.constant 0 : i32
    %c0_i32_1 = arith.constant 0 : i32
    return %c0_i32, %c0_i32_0 : i32, i32
  }
  func.func @transform_4(%arg0: i32) -> (i32, i32) {
    %c0_i32 = arith.constant 0 : i32
    %c0_i32_0 = arith.constant 0 : i32
    %c0_i32_1 = arith.constant 0 : i32
    return %c0_i32, %c0_i32_0 : i32, i32
  }
  func.func @transform_5(%arg0: i32) -> (i32, i32) {
    %c0_i32 = arith.constant 0 : i32
    %c0_i32_0 = arith.constant 0 : i32
    return %arg0, %c0_i32 : i32, i32
  }
}

module attributes {stable_mosaic.version = 11 : i64} {
  func.func @_attn_kernel(%arg0: i32, %arg1: i32, %arg2: memref<1x256x16xbf16, #tpu.memory_space<vmem>>, %arg3: memref<1x18x16xbf16, #tpu.memory_space<vmem>>, %arg4: memref<1x18x16xbf16, #tpu.memory_space<vmem>>, %arg5: memref<1x256x16xbf16, #tpu.memory_space<vmem>>) attributes {dimension_semantics = [#tpu.dimension_semantics<parallel>, #tpu.dimension_semantics<parallel>], iteration_bounds = array<i64: 4, 1>, scalar_prefetch = 0 : i64, scratch_operands = 0 : i64, tpu.core_type = #tpu.core_type<tc>, window_params = [{transform_indices = @transform_0, window_bounds = array<i64: 1, 256, 16>}, {transform_indices = @transform_1, window_bounds = array<i64: 1, 18, 16>}, {transform_indices = @transform_2, window_bounds = array<i64: 1, 18, 16>}, {transform_indices = @transform_3, window_bounds = array<i64: 1, 256, 16>}]} {
    %c0 = arith.constant 0 : index
    %c0_0 = arith.constant 0 : index
    %c0_1 = arith.constant 0 : index
    %0 = vector.load %arg2[%c0, %c0_0, %c0_1] : memref<1x256x16xbf16, #tpu.memory_space<vmem>>, vector<1x256x16xbf16>
    %1 = vector.shape_cast %0 : vector<1x256x16xbf16> to vector<256x16xbf16>
    %c0_2 = arith.constant 0 : index
    %c0_3 = arith.constant 0 : index
    %c0_4 = arith.constant 0 : index
    %2 = vector.load %arg3[%c0_2, %c0_3, %c0_4] : memref<1x18x16xbf16, #tpu.memory_space<vmem>>, vector<1x18x16xbf16>
    %3 = vector.shape_cast %2 : vector<1x18x16xbf16> to vector<18x16xbf16>
    %c0_5 = arith.constant 0 : index
    %c0_6 = arith.constant 0 : index
    %c0_7 = arith.constant 0 : index
    %4 = vector.load %arg4[%c0_5, %c0_6, %c0_7] : memref<1x18x16xbf16, #tpu.memory_space<vmem>>, vector<1x18x16xbf16>
    %5 = vector.shape_cast %4 : vector<1x18x16xbf16> to vector<18x16xbf16>
    %cst = arith.constant dense<0.000000e+00> : vector<256x18xf32>
    %6 = tpu.matmul %1, %3, %cst {dimension_numbers = #tpu.dot_dimension_numbers<[1], [1], [0], [0], [0, 0, 1, 0], [], []>} : vector<256x16xbf16>, vector<18x16xbf16>, vector<256x18xf32> -> vector<256x18xf32>
    %cst_8 = arith.constant dense<0xFF800000> : vector<256xf32>
    %7 = vector.multi_reduction <maximumf>, %6, %cst_8 [1] : vector<256x18xf32> to vector<256xf32>
    %8 = vector.shape_cast %7 : vector<256xf32> to vector<256x1xf32>
    %9 = vector.broadcast %8 : vector<256x1xf32> to vector<256x18xf32>
    %10 = arith.subf %6, %9 : vector<256x18xf32>
    %11 = math.exp %10 : vector<256x18xf32>
    %cst_9 = arith.constant dense<0.000000e+00> : vector<256xf32>
    %12 = vector.multi_reduction <add>, %11, %cst_9 [1] : vector<256x18xf32> to vector<256xf32>
    %13 = vector.shape_cast %12 : vector<256xf32> to vector<256x1xf32>
    %14 = tpu.reciprocal %13 {approx = true} : vector<256x1xf32> -> vector<256x1xf32>
    %15 = vector.broadcast %14 : vector<256x1xf32> to vector<256x18xf32>
    %16 = arith.mulf %11, %15 : vector<256x18xf32>
    %17 = arith.truncf %16 : vector<256x18xf32> to vector<256x18xbf16>
    %cst_10 = arith.constant dense<0.000000e+00> : vector<256x16xf32>
    %18 = tpu.matmul %17, %5, %cst_10 {dimension_numbers = #tpu.dot_dimension_numbers<[1], [0], [0], [1], [0, 0, 1, 1], [], []>} : vector<256x18xbf16>, vector<18x16xbf16>, vector<256x16xf32> -> vector<256x16xf32>
    %19 = arith.truncf %18 : vector<256x16xf32> to vector<256x16xbf16>
    %c0_11 = arith.constant 0 : index
    %c0_12 = arith.constant 0 : index
    %c0_13 = arith.constant 0 : index
    %20 = vector.load %arg5[%c0_11, %c0_12, %c0_13] : memref<1x256x16xbf16, #tpu.memory_space<vmem>>, vector<1x256x16xbf16>
    %21 = vector.shape_cast %20 : vector<1x256x16xbf16> to vector<256x16xbf16>
    %22 = vector.shape_cast %19 : vector<256x16xbf16> to vector<1x256x16xbf16>
    tpu.vector_store %arg5[%c0_11, %c0_12, %c0_13], %22 {strides = array<i32>} : memref<1x256x16xbf16, #tpu.memory_space<vmem>>, vector<1x256x16xbf16>,
    return
  }
  func.func @transform_0(%arg0: i32, %arg1: i32) -> (i32, i32, i32) {
    %c0_i32 = arith.constant 0 : i32
    %c0_i32_0 = arith.constant 0 : i32
    return %arg0, %arg1, %c0_i32 : i32, i32, i32
  }
  func.func @transform_1(%arg0: i32, %arg1: i32) -> (i32, i32, i32) {
    %c0_i32 = arith.constant 0 : i32
    %c0_i32_0 = arith.constant 0 : i32
    %c0_i32_1 = arith.constant 0 : i32
    return %arg0, %c0_i32, %c0_i32_0 : i32, i32, i32
  }
  func.func @transform_2(%arg0: i32, %arg1: i32) -> (i32, i32, i32) {
    %c0_i32 = arith.constant 0 : i32
    %c0_i32_0 = arith.constant 0 : i32
    %c0_i32_1 = arith.constant 0 : i32
    return %arg0, %c0_i32, %c0_i32_0 : i32, i32, i32
  }
  func.func @transform_3(%arg0: i32, %arg1: i32) -> (i32, i32, i32) {
    %c0_i32 = arith.constant 0 : i32
    %c0_i32_0 = arith.constant 0 : i32
    return %arg0, %arg1, %c0_i32 : i32, i32, i32
  }
}

module attributes {stable_mosaic.version = 11 : i64} {
  func.func @_proj_kernel(%arg0: i32, %arg1: memref<32x512xbf16, #tpu.memory_space<vmem>>, %arg2: memref<512x128xbf16, #tpu.memory_space<vmem>>, %arg3: memref<1x128xf32, #tpu.memory_space<vmem>>, %arg4: memref<32x128xf32, #tpu.memory_space<vmem>>) attributes {dimension_semantics = [#tpu.dimension_semantics<parallel>], iteration_bounds = array<i64: 1>, scalar_prefetch = 0 : i64, scratch_operands = 0 : i64, tpu.core_type = #tpu.core_type<tc>, window_params = [{transform_indices = @transform_0, window_bounds = array<i64: 32, 512>}, {pipeline_mode = #tpu.pipeline_mode<synchronous>, transform_indices = @transform_1, window_bounds = array<i64: 512, 128>}, {pipeline_mode = #tpu.pipeline_mode<synchronous>, transform_indices = @transform_2, window_bounds = array<i64: 1, 128>}, {transform_indices = @transform_3, window_bounds = array<i64: 32, 128>}]} {
    %c0 = arith.constant 0 : index
    %c0_0 = arith.constant 0 : index
    %0 = vector.load %arg1[%c0, %c0_0] : memref<32x512xbf16, #tpu.memory_space<vmem>>, vector<32x512xbf16>
    %c0_1 = arith.constant 0 : index
    %c0_2 = arith.constant 0 : index
    %1 = vector.load %arg2[%c0_1, %c0_2] : memref<512x128xbf16, #tpu.memory_space<vmem>>, vector<512x128xbf16>
    %cst = arith.constant dense<0.000000e+00> : vector<32x128xf32>
    %2 = tpu.matmul %0, %1, %cst {dimension_numbers = #tpu.dot_dimension_numbers<[1], [0], [0], [1], [0, 0, 1, 1], [], []>} : vector<32x512xbf16>, vector<512x128xbf16>, vector<32x128xf32> -> vector<32x128xf32>
    %c0_3 = arith.constant 0 : index
    %c0_4 = arith.constant 0 : index
    %3 = vector.load %arg3[%c0_3, %c0_4] : memref<1x128xf32, #tpu.memory_space<vmem>>, vector<1x128xf32>
    %4 = vector.broadcast %3 : vector<1x128xf32> to vector<32x128xf32>
    %5 = arith.addf %2, %4 : vector<32x128xf32>
    %c0_5 = arith.constant 0 : index
    %c0_6 = arith.constant 0 : index
    %6 = vector.load %arg4[%c0_5, %c0_6] : memref<32x128xf32, #tpu.memory_space<vmem>>, vector<32x128xf32>
    tpu.vector_store %arg4[%c0_5, %c0_6], %5 {strides = array<i32>} : memref<32x128xf32, #tpu.memory_space<vmem>>, vector<32x128xf32>,
    return
  }
  func.func @transform_0(%arg0: i32) -> (i32, i32) {
    %c0_i32 = arith.constant 0 : i32
    %c0_i32_0 = arith.constant 0 : i32
    return %arg0, %c0_i32 : i32, i32
  }
  func.func @transform_1(%arg0: i32) -> (i32, i32) {
    %c0_i32 = arith.constant 0 : i32
    %c0_i32_0 = arith.constant 0 : i32
    %c0_i32_1 = arith.constant 0 : i32
    return %c0_i32, %c0_i32_0 : i32, i32
  }
  func.func @transform_2(%arg0: i32) -> (i32, i32) {
    %c0_i32 = arith.constant 0 : i32
    %c0_i32_0 = arith.constant 0 : i32
    %c0_i32_1 = arith.constant 0 : i32
    return %c0_i32, %c0_i32_0 : i32, i32
  }
  func.func @transform_3(%arg0: i32) -> (i32, i32) {
    %c0_i32 = arith.constant 0 : i32
    %c0_i32_0 = arith.constant 0 : i32
    return %arg0, %c0_i32 : i32, i32
  }
}

</mosaic_0001>

<llo_original>
// kernel: dpsa3d_forward.3
$region0: #{dpsa3d_forward.3}
  #allocation0 [shape = 'u32[]', space=smem, size = 0x4, offset = 0x4, fixed_abs, tag = 'smem constant byte address 0x4 - core index']
  #allocation1 [shape = 'u32[144,128]{1,0:T(1,128)}', space=vmem, size = 0x12000, scoped, tag = 'internal scratch']
  %s0 = inlined_call_operand.vmem [shape: f32[512,8], index: 0, kind: input, shape index: {}]
  %s1 = inlined_call_operand.hbm [shape: f32[1,8], index: 1, kind: input, shape index: {}]
  %s2 = inlined_call_operand.hbm [shape: f32[1,8], index: 2, kind: input, shape index: {}]
  %s3 = inlined_call_operand.vmem [shape: f32[8,128], index: 3, kind: input, shape index: {}]
  %s4 = inlined_call_operand.vmem [shape: f32[128,128], index: 4, kind: input, shape index: {}]
  %s5 = inlined_call_operand.vmem [shape: f32[512,128], index: 5, kind: output, shape index: {}]
  %s6 = sld [smem:[#allocation0]]
  $region38: #{dpsa3d_forward.3} parent=0
    _
  %s8 = ssub.s32 1, %s6
  %s9 = scalar_select 0, %s8, %s6
  $region1: #{dpsa3d_forward.3} parent=0
    #allocation2 [shape = 'u8[512]{0}', space=vmem, size = 0x400, scoped, tag = 'input window, operand 1, single buffered']
    #allocation3 [shape = 's32[1]{0}', space=sflag, size = 0x4, scoped, tag = 'scoped memory for dpsa3d_forward.3']
    #allocation4 [shape = 'u8[512]{0}', space=vmem, size = 0x400, scoped, tag = 'input window, operand 2, single buffered']
    #allocation5 [shape = 's32[1]{0}', space=sflag, size = 0x4, scoped, tag = 'scoped memory for dpsa3d_forward.3']
    %10 = vsyncpa [#allocation3], 0
    %11 = vsyncpa [#allocation5], 0
    // Predicated region
    $region2: #{dpsa3d_forward.3} parent=1 // pred_check
      _
    $region3: #{dpsa3d_forward.3} parent=1 // pred_check_branch
      %13 = sbr.rel (0) target = $region5
    $region4: #{dpsa3d_forward.3} parent=1 // pred_region
      _
    $region5: #{dpsa3d_forward.3} parent=1 // pred_fallthru
      _
    // Predicated region
    $region6: #{dpsa3d_forward.3} parent=1 // pred_check
      _
    $region7: #{dpsa3d_forward.3} parent=1 // pred_check_branch
      %15 = sbr.rel (0) target = $region9
    $region8: #{dpsa3d_forward.3} parent=1 // pred_region
      %s17 = ssub.s32 16, 16
      %18 = vsyncadd [#allocation3], %s17
      %s20 = sshll.u32 [#allocation2], 4
      %s21 = int_to_ptr.vmem [resolvable:$true] %s20
      %23 = dma.hbm_to_vmem [thread:$0]  %s1, 16, %s21, [#allocation3]
    $region9: #{dpsa3d_forward.3} parent=1 // pred_fallthru
      _
    // Predicated region
    $region10: #{dpsa3d_forward.3} parent=1 // pred_check
      _
    $region11: #{dpsa3d_forward.3} parent=1 // pred_check_branch
      %25 = sbr.rel (0) target = $region13
    $region12: #{dpsa3d_forward.3} parent=1 // pred_region
      %s27 = ssub.s32 16, 16
      %28 = vsyncadd [#allocation5], %s27
      %s30 = sshll.u32 [#allocation4], 4
      %s31 = int_to_ptr.vmem [resolvable:$true] %s30
      %33 = dma.hbm_to_vmem [thread:$0]  %s2, 16, %s31, [#allocation5]
    $region13: #{dpsa3d_forward.3} parent=1 // pred_fallthru
      _
    // Predicated region
    $region14: #{dpsa3d_forward.3} parent=1 // pred_check
      _
    $region15: #{dpsa3d_forward.3} parent=1 // pred_check_branch
      %35 = sbr.rel (0) target = $region17
    $region16: #{dpsa3d_forward.3} parent=1 // pred_region
      _
    $region17: #{dpsa3d_forward.3} parent=1 // pred_fallthru
      _
    // Predicated region
    $region18: #{dpsa3d_forward.3} parent=1 // pred_check
      _
    $region19: #{dpsa3d_forward.3} parent=1 // pred_check_branch
      %37 = sbr.rel (0) target = $region21
    $region20: #{dpsa3d_forward.3} parent=1 // pred_region
      _
    $region21: #{dpsa3d_forward.3} parent=1 // pred_fallthru
      _
    // Predicated region
    $region22: #{dpsa3d_forward.3} parent=1 // pred_check
      _
    $region23: #{dpsa3d_forward.3} parent=1 // pred_check_branch
      %39 = sbr.rel (0) target = $region25
    $region24: #{dpsa3d_forward.3} parent=1 // pred_region
      %40 = dma.done [#allocation3], 16
    $region25: #{dpsa3d_forward.3} parent=1 // pred_fallthru
      _
    // Predicated region
    $region26: #{dpsa3d_forward.3} parent=1 // pred_check
      _
    $region27: #{dpsa3d_forward.3} parent=1 // pred_check_branch
      %42 = sbr.rel (0) target = $region29
    $region28: #{dpsa3d_forward.3} parent=1 // pred_region
      %43 = dma.done [#allocation5], 16
    $region29: #{dpsa3d_forward.3} parent=1 // pred_fallthru
      _
    %v44 = vld [vmem:[%s0] sm:$0xff]
    %v45 = vld [vmem:[%s0 + $0x8] sm:$0xff]
    %v46 = vld [vmem:[%s0 + $0x10] sm:$0xff]
    %v47 = vld [vmem:[%s0 + $0x18] sm:$0xff]
    %v48 = vld [vmem:[%s0 + $0x20] sm:$0xff]
    %v49 = vld [vmem:[%s0 + $0x28] sm:$0xff]
    %v50 = vld [vmem:[%s0 + $0x30] sm:$0xff]
    %v51 = vld [vmem:[%s0 + $0x38] sm:$0xff]
    %v52 = vld [vmem:[%s0 + $0x40] sm:$0xff]
    %v53 = vld [vmem:[%s0 + $0x48] sm:$0xff]
    %v54 = vld [vmem:[%s0 + $0x50] sm:$0xff]
    %v55 = vld [vmem:[%s0 + $0x58] sm:$0xff]
    %v56 = vld [vmem:[%s0 + $0x60] sm:$0xff]
    %v57 = vld [vmem:[%s0 + $0x68] sm:$0xff]
    %v58 = vld [vmem:[%s0 + $0x70] sm:$0xff]
    %v59 = vld [vmem:[%s0 + $0x78] sm:$0xff]
    %v60 = vld [vmem:[%s0 + $0x80] sm:$0xff]
    %v61 = vld [vmem:[%s0 + $0x88] sm:$0xff]
    %v62 = vld [vmem:[%s0 + $0x90] sm:$0xff]
    %v63 = vld [vmem:[%s0 + $0x98] sm:$0xff]
    %v64 = vld [vmem:[%s0 + $0xa0] sm:$0xff]
    %v65 = vld [vmem:[%s0 + $0xa8] sm:$0xff]
    %v66 = vld [vmem:[%s0 + $0xb0] sm:$0xff]
    %v67 = vld [vmem:[%s0 + $0xb8] sm:$0xff]
    %v68 = vld [vmem:[%s0 + $0xc0] sm:$0xff]
    %v69 = vld [vmem:[%s0 + $0xc8] sm:$0xff]
    %v70 = vld [vmem:[%s0 + $0xd0] sm:$0xff]
    %v71 = vld [vmem:[%s0 + $0xd8] sm:$0xff]
    %v72 = vld [vmem:[%s0 + $0xe0] sm:$0xff]
    %v73 = vld [vmem:[%s0 + $0xe8] sm:$0xff]
    %v74 = vld [vmem:[%s0 + $0xf0] sm:$0xff]
    %v75 = vld [vmem:[%s0 + $0xf8] sm:$0xff]
    %v76 = vld [vmem:[%s0 + $0x100] sm:$0xff]
    %v77 = vld [vmem:[%s0 + $0x108] sm:$0xff]
    %v78 = vld [vmem:[%s0 + $0x110] sm:$0xff]
    %v79 = vld [vmem:[%s0 + $0x118] sm:$0xff]
    %v80 = vld [vmem:[%s0 + $0x120] sm:$0xff]
    %v81 = vld [vmem:[%s0 + $0x128] sm:$0xff]
    %v82 = vld [vmem:[%s0 + $0x130] sm:$0xff]
    %v83 = vld [vmem:[%s0 + $0x138] sm:$0xff]
    %v84 = vld [vmem:[%s0 + $0x140] sm:$0xff]
    %v85 = vld [vmem:[%s0 + $0x148] sm:$0xff]
    %v86 = vld [vmem:[%s0 + $0x150] sm:$0xff]
    %v87 = vld [vmem:[%s0 + $0x158] sm:$0xff]
    %v88 = vld [vmem:[%s0 + $0x160] sm:$0xff]
    %v89 = vld [vmem:[%s0 + $0x168] sm:$0xff]
    %v90 = vld [vmem:[%s0 + $0x170] sm:$0xff]
    %v91 = vld [vmem:[%s0 + $0x178] sm:$0xff]
    %v92 = vld [vmem:[%s0 + $0x180] sm:$0xff]
    %v93 = vld [vmem:[%s0 + $0x188] sm:$0xff]
    %v94 = vld [vmem:[%s0 + $0x190] sm:$0xff]
    %v95 = vld [vmem:[%s0 + $0x198] sm:$0xff]
    %v96 = vld [vmem:[%s0 + $0x1a0] sm:$0xff]
    %v97 = vld [vmem:[%s0 + $0x1a8] sm:$0xff]
    %v98 = vld [vmem:[%s0 + $0x1b0] sm:$0xff]
    %v99 = vld [vmem:[%s0 + $0x1b8] sm:$0xff]
    %v100 = vld [vmem:[%s0 + $0x1c0] sm:$0xff]
    %v101 = vld [vmem:[%s0 + $0x1c8] sm:$0xff]
    %v102 = vld [vmem:[%s0 + $0x1d0] sm:$0xff]
    %v103 = vld [vmem:[%s0 + $0x1d8] sm:$0xff]
    %v104 = vld [vmem:[%s0 + $0x1e0] sm:$0xff]
    %v105 = vld [vmem:[%s0 + $0x1e8] sm:$0xff]
    %v106 = vld [vmem:[%s0 + $0x1f0] sm:$0xff]
    %v107 = vld [vmem:[%s0 + $0x1f8] sm:$0xff]
    %vm108 = vcmask 64512
    %v109 = vsel %vm108, %v44, 0.0
    %110 = vadd.xlane.f32.xlu0 %v109
    %v111 = vpop.xlane.xlu0 %110
    %v112 = vsel %vm108, %v45, 0.0
    %113 = vadd.xlane.f32.xlu0 %v112
    %v114 = vpop.xlane.xlu0 %113
    %v115 = vsel %vm108, %v46, 0.0
    %116 = vadd.xlane.f32.xlu0 %v115
    %v117 = vpop.xlane.xlu0 %116
    %v118 = vsel %vm108, %v47, 0.0
    %119 = vadd.xlane.f32.xlu0 %v118
    %v120 = vpop.xlane.xlu0 %119
    %v121 = vsel %vm108, %v48, 0.0
    %122 = vadd.xlane.f32.xlu0 %v121
    %v123 = vpop.xlane.xlu0 %122
    %v124 = vsel %vm108, %v49, 0.0
    %125 = vadd.xlane.f32.xlu0 %v124
    %v126 = vpop.xlane.xlu0 %125
    %v127 = vsel %vm108, %v50, 0.0
    %128 = vadd.xlane.f32.xlu0 %v127
    %v129 = vpop.xlane.xlu0 %128
    %v130 = vsel %vm108, %v51, 0.0
    %131 = vadd.xlane.f32.xlu0 %v130
    %v132 = vpop.xlane.xlu0 %131
    %v133 = vsel %vm108, %v52, 0.0
    %134 = vadd.xlane.f32.xlu0 %v133
    %v135 = vpop.xlane.xlu0 %134
    %v136 = vsel %vm108, %v53, 0.0
    %137 = vadd.xlane.f32.xlu0 %v136
    %v138 = vpop.xlane.xlu0 %137
    %v139 = vsel %vm108, %v54, 0.0
    %140 = vadd.xlane.f32.xlu0 %v139
    %v141 = vpop.xlane.xlu0 %140
    %v142 = vsel %vm108, %v55, 0.0
    %143 = vadd.xlane.f32.xlu0 %v142
    %v144 = vpop.xlane.xlu0 %143
    %v145 = vsel %vm108, %v56, 0.0
    %146 = vadd.xlane.f32.xlu0 %v145
    %v147 = vpop.xlane.xlu0 %146
    %v148 = vsel %vm108, %v57, 0.0
    %149 = vadd.xlane.f32.xlu0 %v148
    %v150 = vpop.xlane.xlu0 %149
    %v151 = vsel %vm108, %v58, 0.0
    %152 = vadd.xlane.f32.xlu0 %v151
    %v153 = vpop.xlane.xlu0 %152
    %v154 = vsel %vm108, %v59, 0.0
    %155 = vadd.xlane.f32.xlu0 %v154
    %v156 = vpop.xlane.xlu0 %155
    %v157 = vsel %vm108, %v60, 0.0
    %158 = vadd.xlane.f32.xlu0 %v157
    %v159 = vpop.xlane.xlu0 %158
    %v160 = vsel %vm108, %v61, 0.0
    %161 = vadd.xlane.f32.xlu0 %v160
    %v162 = vpop.xlane.xlu0 %161
    %v163 = vsel %vm108, %v62, 0.0
    %164 = vadd.xlane.f32.xlu0 %v163
    %v165 = vpop.xlane.xlu0 %164
    %v166 = vsel %vm108, %v63, 0.0
    %167 = vadd.xlane.f32.xlu0 %v166
    %v168 = vpop.xlane.xlu0 %167
    %v169 = vsel %vm108, %v64, 0.0
    %170 = vadd.xlane.f32.xlu0 %v169
    %v171 = vpop.xlane.xlu0 %170
    %v172 = vsel %vm108, %v65, 0.0
    %173 = vadd.xlane.f32.xlu0 %v172
    %v174 = vpop.xlane.xlu0 %173
    %v175 = vsel %vm108, %v66, 0.0
    %176 = vadd.xlane.f32.xlu0 %v175
    %v177 = vpop.xlane.xlu0 %176
    %v178 = vsel %vm108, %v67, 0.0
    %179 = vadd.xlane.f32.xlu0 %v178
    %v180 = vpop.xlane.xlu0 %179
    %v181 = vsel %vm108, %v68, 0.0
    %182 = vadd.xlane.f32.xlu0 %v181
    %v183 = vpop.xlane.xlu0 %182
    %v184 = vsel %vm108, %v69, 0.0
    %185 = vadd.xlane.f32.xlu0 %v184
    %v186 = vpop.xlane.xlu0 %185
    %v187 = vsel %vm108, %v70, 0.0
    %188 = vadd.xlane.f32.xlu0 %v187
    %v189 = vpop.xlane.xlu0 %188
    %v190 = vsel %vm108, %v71, 0.0
    %191 = vadd.xlane.f32.xlu0 %v190
    %v192 = vpop.xlane.xlu0 %191
    %v193 = vsel %vm108, %v72, 0.0
    %194 = vadd.xlane.f32.xlu0 %v193
    %v195 = vpop.xlane.xlu0 %194
    %v196 = vsel %vm108, %v73, 0.0
    %197 = vadd.xlane.f32.xlu0 %v196
    %v198 = vpop.xlane.xlu0 %197
    %v199 = vsel %vm108, %v74, 0.0
    %200 = vadd.xlane.f32.xlu0 %v199
    %v201 = vpop.xlane.xlu0 %200
    %v202 = vsel %vm108, %v75, 0.0
    %203 = vadd.xlane.f32.xlu0 %v202
    %v204 = vpop.xlane.xlu0 %203
    %v205 = vsel %vm108, %v76, 0.0
    %206 = vadd.xlane.f32.xlu0 %v205
    %v207 = vpop.xlane.xlu0 %206
    %v208 = vsel %vm108, %v77, 0.0
    %209 = vadd.xlane.f32.xlu0 %v208
    %v210 = vpop.xlane.xlu0 %209
    %v211 = vsel %vm108, %v78, 0.0
    %212 = vadd.xlane.f32.xlu0 %v211
    %v213 = vpop.xlane.xlu0 %212
    %v214 = vsel %vm108, %v79, 0.0
    %215 = vadd.xlane.f32.xlu0 %v214
    %v216 = vpop.xlane.xlu0 %215
    %v217 = vsel %vm108, %v80, 0.0
    %218 = vadd.xlane.f32.xlu0 %v217
    %v219 = vpop.xlane.xlu0 %218
    %v220 = vsel %vm108, %v81, 0.0
    %221 = vadd.xlane.f32.xlu0 %v220
    %v222 = vpop.xlane.xlu0 %221
    %v223 = vsel %vm108, %v82, 0.0
    %224 = vadd.xlane.f32.xlu0 %v223
    %v225 = vpop.xlane.xlu0 %224
    %v226 = vsel %vm108, %v83, 0.0
    %227 = vadd.xlane.f32.xlu0 %v226
    %v228 = vpop.xlane.xlu0 %227
    %v229 = vsel %vm108, %v84, 0.0
    %230 = vadd.xlane.f32.xlu0 %v229
    %v231 = vpop.xlane.xlu0 %230
    %v232 = vsel %vm108, %v85, 0.0
    %233 = vadd.xlane.f32.xlu0 %v232
    %v234 = vpop.xlane.xlu0 %233
    %v235 = vsel %vm108, %v86, 0.0
    %236 = vadd.xlane.f32.xlu0 %v235
    %v237 = vpop.xlane.xlu0 %236
    %v238 = vsel %vm108, %v87, 0.0
    %239 = vadd.xlane.f32.xlu0 %v238
    %v240 = vpop.xlane.xlu0 %239
    %v241 = vsel %vm108, %v88, 0.0
    %242 = vadd.xlane.f32.xlu0 %v241
    %v243 = vpop.xlane.xlu0 %242
    %v244 = vsel %vm108, %v89, 0.0
    %245 = vadd.xlane.f32.xlu0 %v244
    %v246 = vpop.xlane.xlu0 %245
    %v247 = vsel %vm108, %v90, 0.0
    %248 = vadd.xlane.f32.xlu0 %v247
    %v249 = vpop.xlane.xlu0 %248
    %v250 = vsel %vm108, %v91, 0.0
    %251 = vadd.xlane.f32.xlu0 %v250
    %v252 = vpop.xlane.xlu0 %251
    %v253 = vsel %vm108, %v92, 0.0
    %254 = vadd.xlane.f32.xlu0 %v253
    %v255 = vpop.xlane.xlu0 %254
    %v256 = vsel %vm108, %v93, 0.0
    %257 = vadd.xlane.f32.xlu0 %v256
    %v258 = vpop.xlane.xlu0 %257
    %v259 = vsel %vm108, %v94, 0.0
    %260 = vadd.xlane.f32.xlu0 %v259
    %v261 = vpop.xlane.xlu0 %260
    %v262 = vsel %vm108, %v95, 0.0
    %263 = vadd.xlane.f32.xlu0 %v262
    %v264 = vpop.xlane.xlu0 %263
    %v265 = vsel %vm108, %v96, 0.0
    %266 = vadd.xlane.f32.xlu0 %v265
    %v267 = vpop.xlane.xlu0 %266
    %v268 = vsel %vm108, %v97, 0.0
    %269 = vadd.xlane.f32.xlu0 %v268
    %v270 = vpop.xlane.xlu0 %269
    %v271 = vsel %vm108, %v98, 0.0
    %272 = vadd.xlane.f32.xlu0 %v271
    %v273 = vpop.xlane.xlu0 %272
    %v274 = vsel %vm108, %v99, 0.0
    %275 = vadd.xlane.f32.xlu0 %v274
    %v276 = vpop.xlane.xlu0 %275
    %v277 = vsel %vm108, %v100, 0.0
    %278 = vadd.xlane.f32.xlu0 %v277
    %v279 = vpop.xlane.xlu0 %278
    %v280 = vsel %vm108, %v101, 0.0
    %281 = vadd.xlane.f32.xlu0 %v280
    %v282 = vpop.xlane.xlu0 %281
    %v283 = vsel %vm108, %v102, 0.0
    %284 = vadd.xlane.f32.xlu0 %v283
    %v285 = vpop.xlane.xlu0 %284
    %v286 = vsel %vm108, %v103, 0.0
    %287 = vadd.xlane.f32.xlu0 %v286
    %v288 = vpop.xlane.xlu0 %287
    %v289 = vsel %vm108, %v104, 0.0
    %290 = vadd.xlane.f32.xlu0 %v289
    %v291 = vpop.xlane.xlu0 %290
    %v292 = vsel %vm108, %v105, 0.0
    %293 = vadd.xlane.f32.xlu0 %v292
    %v294 = vpop.xlane.xlu0 %293
    %v295 = vsel %vm108, %v106, 0.0
    %296 = vadd.xlane.f32.xlu0 %v295
    %v297 = vpop.xlane.xlu0 %296
    %v298 = vsel %vm108, %v107, 0.0
    %299 = vadd.xlane.f32.xlu0 %v298
    %v300 = vpop.xlane.xlu0 %299
    %v301 = vrcp.pop 8.0
    %v302 = vmul.f32 %v111, %v301
    %v303 = vmul.f32 %v114, %v301
    %v304 = vmul.f32 %v117, %v301
    %v305 = vmul.f32 %v120, %v301
    %v306 = vmul.f32 %v123, %v301
    %v307 = vmul.f32 %v126, %v301
    %v308 = vmul.f32 %v129, %v301
    %v309 = vmul.f32 %v132, %v301
    %v310 = vmul.f32 %v135, %v301
    %v311 = vmul.f32 %v138, %v301
    %v312 = vmul.f32 %v141, %v301
    %v313 = vmul.f32 %v144, %v301
    %v314 = vmul.f32 %v147, %v301
    %v315 = vmul.f32 %v150, %v301
    %v316 = vmul.f32 %v153, %v301
    %v317 = vmul.f32 %v156, %v301
    %v318 = vmul.f32 %v159, %v301
    %v319 = vmul.f32 %v162, %v301
    %v320 = vmul.f32 %v165, %v301
    %v321 = vmul.f32 %v168, %v301
    %v322 = vmul.f32 %v171, %v301
    %v323 = vmul.f32 %v174, %v301
    %v324 = vmul.f32 %v177, %v301
    %v325 = vmul.f32 %v180, %v301
    %v326 = vmul.f32 %v183, %v301
    %v327 = vmul.f32 %v186, %v301
    %v328 = vmul.f32 %v189, %v301
    %v329 = vmul.f32 %v192, %v301
    %v330 = vmul.f32 %v195, %v301
    %v331 = vmul.f32 %v198, %v301
    %v332 = vmul.f32 %v201, %v301
    %v333 = vmul.f32 %v204, %v301
    %v334 = vmul.f32 %v207, %v301
    %v335 = vmul.f32 %v210, %v301
    %v336 = vmul.f32 %v213, %v301
    %v337 = vmul.f32 %v216, %v301
    %v338 = vmul.f32 %v219, %v301
    %v339 = vmul.f32 %v222, %v301
    %v340 = vmul.f32 %v225, %v301
    %v341 = vmul.f32 %v228, %v301
    %v342 = vmul.f32 %v231, %v301
    %v343 = vmul.f32 %v234, %v301
    %v344 = vmul.f32 %v237, %v301
    %v345 = vmul.f32 %v240, %v301
    %v346 = vmul.f32 %v243, %v301
    %v347 = vmul.f32 %v246, %v301
    %v348 = vmul.f32 %v249, %v301
    %v349 = vmul.f32 %v252, %v301
    %v350 = vmul.f32 %v255, %v301
    %v351 = vmul.f32 %v258, %v301
    %v352 = vmul.f32 %v261, %v301
    %v353 = vmul.f32 %v264, %v301
    %v354 = vmul.f32 %v267, %v301
    %v355 = vmul.f32 %v270, %v301
    %v356 = vmul.f32 %v273, %v301
    %v357 = vmul.f32 %v276, %v301
    %v358 = vmul.f32 %v279, %v301
    %v359 = vmul.f32 %v282, %v301
    %v360 = vmul.f32 %v285, %v301
    %v361 = vmul.f32 %v288, %v301
    %v362 = vmul.f32 %v291, %v301
    %v363 = vmul.f32 %v294, %v301
    %v364 = vmul.f32 %v297, %v301
    %v365 = vmul.f32 %v300, %v301
    %v366 = vsub.f32 %v44, %v302
    %v367 = vsub.f32 %v45, %v303
    %v368 = vsub.f32 %v46, %v304
    %v369 = vsub.f32 %v47, %v305
    %v370 = vsub.f32 %v48, %v306
    %v371 = vsub.f32 %v49, %v307
    %v372 = vsub.f32 %v50, %v308
    %v373 = vsub.f32 %v51, %v309
    %v374 = vsub.f32 %v52, %v310
    %v375 = vsub.f32 %v53, %v311
    %v376 = vsub.f32 %v54, %v312
    %v377 = vsub.f32 %v55, %v313
    %v378 = vsub.f32 %v56, %v314
    %v379 = vsub.f32 %v57, %v315
    %v380 = vsub.f32 %v58, %v316
    %v381 = vsub.f32 %v59, %v317
    %v382 = vsub.f32 %v60, %v318
    %v383 = vsub.f32 %v61, %v319
    %v384 = vsub.f32 %v62, %v320
    %v385 = vsub.f32 %v63, %v321
    %v386 = vsub.f32 %v64, %v322
    %v387 = vsub.f32 %v65, %v323
    %v388 = vsub.f32 %v66, %v324
    %v389 = vsub.f32 %v67, %v325
    %v390 = vsub.f32 %v68, %v326
    %v391 = vsub.f32 %v69, %v327
    %v392 = vsub.f32 %v70, %v328
    %v393 = vsub.f32 %v71, %v329
    %v394 = vsub.f32 %v72, %v330
    %v395 = vsub.f32 %v73, %v331
    %v396 = vsub.f32 %v74, %v332
    %v397 = vsub.f32 %v75, %v333
    %v398 = vsub.f32 %v76, %v334
    %v399 = vsub.f32 %v77, %v335
    %v400 = vsub.f32 %v78, %v336
    %v401 = vsub.f32 %v79, %v337
    %v402 = vsub.f32 %v80, %v338
    %v403 = vsub.f32 %v81, %v339
    %v404 = vsub.f32 %v82, %v340
    %v405 = vsub.f32 %v83, %v341
    %v406 = vsub.f32 %v84, %v342
    %v407 = vsub.f32 %v85, %v343
    %v408 = vsub.f32 %v86, %v344
    %v409 = vsub.f32 %v87, %v345
    %v410 = vsub.f32 %v88, %v346
    %v411 = vsub.f32 %v89, %v347
    %v412 = vsub.f32 %v90, %v348
    %v413 = vsub.f32 %v91, %v349
    %v414 = vsub.f32 %v92, %v350
    %v415 = vsub.f32 %v93, %v351
    %v416 = vsub.f32 %v94, %v352
    %v417 = vsub.f32 %v95, %v353
    %v418 = vsub.f32 %v96, %v354
    %v419 = vsub.f32 %v97, %v355
    %v420 = vsub.f32 %v98, %v356
    %v421 = vsub.f32 %v99, %v357
    %v422 = vsub.f32 %v100, %v358
    %v423 = vsub.f32 %v101, %v359
    %v424 = vsub.f32 %v102, %v360
    %v425 = vsub.f32 %v103, %v361
    %v426 = vsub.f32 %v104, %v362
    %v427 = vsub.f32 %v105, %v363
    %v428 = vsub.f32 %v106, %v364
    %v429 = vsub.f32 %v107, %v365
    %v430 = vmul.f32 %v366, %v366
    %v431 = vmul.f32 %v367, %v367
    %v432 = vmul.f32 %v368, %v368
    %v433 = vmul.f32 %v369, %v369
    %v434 = vmul.f32 %v370, %v370
    %v435 = vmul.f32 %v371, %v371
    %v436 = vmul.f32 %v372, %v372
    %v437 = vmul.f32 %v373, %v373
    %v438 = vmul.f32 %v374, %v374
    %v439 = vmul.f32 %v375, %v375
    %v440 = vmul.f32 %v376, %v376
    %v441 = vmul.f32 %v377, %v377
    %v442 = vmul.f32 %v378, %v378
    %v443 = vmul.f32 %v379, %v379
    %v444 = vmul.f32 %v380, %v380
    %v445 = vmul.f32 %v381, %v381
    %v446 = vmul.f32 %v382, %v382
    %v447 = vmul.f32 %v383, %v383
    %v448 = vmul.f32 %v384, %v384
    %v449 = vmul.f32 %v385, %v385
    %v450 = vmul.f32 %v386, %v386
    %v451 = vmul.f32 %v387, %v387
    %v452 = vmul.f32 %v388, %v388
    %v453 = vmul.f32 %v389, %v389
    %v454 = vmul.f32 %v390, %v390
    %v455 = vmul.f32 %v391, %v391
    %v456 = vmul.f32 %v392, %v392
    %v457 = vmul.f32 %v393, %v393
    %v458 = vmul.f32 %v394, %v394
    %v459 = vmul.f32 %v395, %v395
    %v460 = vmul.f32 %v396, %v396
    %v461 = vmul.f32 %v397, %v397
    %v462 = vmul.f32 %v398, %v398
    %v463 = vmul.f32 %v399, %v399
    %v464 = vmul.f32 %v400, %v400
    %v465 = vmul.f32 %v401, %v401
    %v466 = vmul.f32 %v402, %v402
    %v467 = vmul.f32 %v403, %v403
    %v468 = vmul.f32 %v404, %v404
    %v469 = vmul.f32 %v405, %v405
    %v470 = vmul.f32 %v406, %v406
    %v471 = vmul.f32 %v407, %v407
    %v472 = vmul.f32 %v408, %v408
    %v473 = vmul.f32 %v409, %v409
    %v474 = vmul.f32 %v410, %v410
    %v475 = vmul.f32 %v411, %v411
    %v476 = vmul.f32 %v412, %v412
    %v477 = vmul.f32 %v413, %v413
    %v478 = vmul.f32 %v414, %v414
    %v479 = vmul.f32 %v415, %v415
    %v480 = vmul.f32 %v416, %v416
    %v481 = vmul.f32 %v417, %v417
    %v482 = vmul.f32 %v418, %v418
    %v483 = vmul.f32 %v419, %v419
    %v484 = vmul.f32 %v420, %v420
    %v485 = vmul.f32 %v421, %v421
    %v486 = vmul.f32 %v422, %v422
    %v487 = vmul.f32 %v423, %v423
    %v488 = vmul.f32 %v424, %v424
    %v489 = vmul.f32 %v425, %v425
    %v490 = vmul.f32 %v426, %v426
    %v491 = vmul.f32 %v427, %v427
    %v492 = vmul.f32 %v428, %v428
    %v493 = vmul.f32 %v429, %v429
    %v494 = vsel %vm108, %v430, 0.0
    %495 = vadd.xlane.f32.xlu0 %v494
    %v496 = vpop.xlane.xlu0 %495
    %v497 = vsel %vm108, %v431, 0.0
    %498 = vadd.xlane.f32.xlu0 %v497
    %v499 = vpop.xlane.xlu0 %498
    %v500 = vsel %vm108, %v432, 0.0
    %501 = vadd.xlane.f32.xlu0 %v500
    %v502 = vpop.xlane.xlu0 %501
    %v503 = vsel %vm108, %v433, 0.0
    %504 = vadd.xlane.f32.xlu0 %v503
    %v505 = vpop.xlane.xlu0 %504
    %v506 = vsel %vm108, %v434, 0.0
    %507 = vadd.xlane.f32.xlu0 %v506
    %v508 = vpop.xlane.xlu0 %507
    %v509 = vsel %vm108, %v435, 0.0
    %510 = vadd.xlane.f32.xlu0 %v509
    %v511 = vpop.xlane.xlu0 %510
    %v512 = vsel %vm108, %v436, 0.0
    %513 = vadd.xlane.f32.xlu0 %v512
    %v514 = vpop.xlane.xlu0 %513
    %v515 = vsel %vm108, %v437, 0.0
    %516 = vadd.xlane.f32.xlu0 %v515
    %v517 = vpop.xlane.xlu0 %516
    %v518 = vsel %vm108, %v438, 0.0
    %519 = vadd.xlane.f32.xlu0 %v518
    %v520 = vpop.xlane.xlu0 %519
    %v521 = vsel %vm108, %v439, 0.0
    %522 = vadd.xlane.f32.xlu0 %v521
    %v523 = vpop.xlane.xlu0 %522
    %v524 = vsel %vm108, %v440, 0.0
    %525 = vadd.xlane.f32.xlu0 %v524
    %v526 = vpop.xlane.xlu0 %525
    %v527 = vsel %vm108, %v441, 0.0
    %528 = vadd.xlane.f32.xlu0 %v527
    %v529 = vpop.xlane.xlu0 %528
    %v530 = vsel %vm108, %v442, 0.0
    %531 = vadd.xlane.f32.xlu0 %v530
    %v532 = vpop.xlane.xlu0 %531
    %v533 = vsel %vm108, %v443, 0.0
    %534 = vadd.xlane.f32.xlu0 %v533
    %v535 = vpop.xlane.xlu0 %534
    %v536 = vsel %vm108, %v444, 0.0
    %537 = vadd.xlane.f32.xlu0 %v536
    %v538 = vpop.xlane.xlu0 %537
    %v539 = vsel %vm108, %v445, 0.0
    %540 = vadd.xlane.f32.xlu0 %v539
    %v541 = vpop.xlane.xlu0 %540
    %v542 = vsel %vm108, %v446, 0.0
    %543 = vadd.xlane.f32.xlu0 %v542
    %v544 = vpop.xlane.xlu0 %543
    %v545 = vsel %vm108, %v447, 0.0
    %546 = vadd.xlane.f32.xlu0 %v545
    %v547 = vpop.xlane.xlu0 %546
    %v548 = vsel %vm108, %v448, 0.0
    %549 = vadd.xlane.f32.xlu0 %v548
    %v550 = vpop.xlane.xlu0 %549
    %v551 = vsel %vm108, %v449, 0.0
    %552 = vadd.xlane.f32.xlu0 %v551
    %v553 = vpop.xlane.xlu0 %552
    %v554 = vsel %vm108, %v450, 0.0
    %555 = vadd.xlane.f32.xlu0 %v554
    %v556 = vpop.xlane.xlu0 %555
    %v557 = vsel %vm108, %v451, 0.0
    %558 = vadd.xlane.f32.xlu0 %v557
    %v559 = vpop.xlane.xlu0 %558
    %v560 = vsel %vm108, %v452, 0.0
    %561 = vadd.xlane.f32.xlu0 %v560
    %v562 = vpop.xlane.xlu0 %561
    %v563 = vsel %vm108, %v453, 0.0
    %564 = vadd.xlane.f32.xlu0 %v563
    %v565 = vpop.xlane.xlu0 %564
    %v566 = vsel %vm108, %v454, 0.0
    %567 = vadd.xlane.f32.xlu0 %v566
    %v568 = vpop.xlane.xlu0 %567
    %v569 = vsel %vm108, %v455, 0.0
    %570 = vadd.xlane.f32.xlu0 %v569
    %v571 = vpop.xlane.xlu0 %570
    %v572 = vsel %vm108, %v456, 0.0
    %573 = vadd.xlane.f32.xlu0 %v572
    %v574 = vpop.xlane.xlu0 %573
    %v575 = vsel %vm108, %v457, 0.0
    %576 = vadd.xlane.f32.xlu0 %v575
    %v577 = vpop.xlane.xlu0 %576
    %v578 = vsel %vm108, %v458, 0.0
    %579 = vadd.xlane.f32.xlu0 %v578
    %v580 = vpop.xlane.xlu0 %579
    %v581 = vsel %vm108, %v459, 0.0
    %582 = vadd.xlane.f32.xlu0 %v581
    %v583 = vpop.xlane.xlu0 %582
    %v584 = vsel %vm108, %v460, 0.0
    %585 = vadd.xlane.f32.xlu0 %v584
    %v586 = vpop.xlane.xlu0 %585
    %v587 = vsel %vm108, %v461, 0.0
    %588 = vadd.xlane.f32.xlu0 %v587
    %v589 = vpop.xlane.xlu0 %588
    %v590 = vsel %vm108, %v462, 0.0
    %591 = vadd.xlane.f32.xlu0 %v590
    %v592 = vpop.xlane.xlu0 %591
    %v593 = vsel %vm108, %v463, 0.0
    %594 = vadd.xlane.f32.xlu0 %v593
    %v595 = vpop.xlane.xlu0 %594
    %v596 = vsel %vm108, %v464, 0.0
    %597 = vadd.xlane.f32.xlu0 %v596
    %v598 = vpop.xlane.xlu0 %597
    %v599 = vsel %vm108, %v465, 0.0
    %600 = vadd.xlane.f32.xlu0 %v599
    %v601 = vpop.xlane.xlu0 %600
    %v602 = vsel %vm108, %v466, 0.0
    %603 = vadd.xlane.f32.xlu0 %v602
    %v604 = vpop.xlane.xlu0 %603
    %v605 = vsel %vm108, %v467, 0.0
    %606 = vadd.xlane.f32.xlu0 %v605
    %v607 = vpop.xlane.xlu0 %606
    %v608 = vsel %vm108, %v468, 0.0
    %609 = vadd.xlane.f32.xlu0 %v608
    %v610 = vpop.xlane.xlu0 %609
    %v611 = vsel %vm108, %v469, 0.0
    %612 = vadd.xlane.f32.xlu0 %v611
    %v613 = vpop.xlane.xlu0 %612
    %v614 = vsel %vm108, %v470, 0.0
    %615 = vadd.xlane.f32.xlu0 %v614
    %v616 = vpop.xlane.xlu0 %615
    %v617 = vsel %vm108, %v471, 0.0
    %618 = vadd.xlane.f32.xlu0 %v617
    %v619 = vpop.xlane.xlu0 %618
    %v620 = vsel %vm108, %v472, 0.0
    %621 = vadd.xlane.f32.xlu0 %v620
    %v622 = vpop.xlane.xlu0 %621
    %v623 = vsel %vm108, %v473, 0.0
    %624 = vadd.xlane.f32.xlu0 %v623
    %v625 = vpop.xlane.xlu0 %624
    %v626 = vsel %vm108, %v474, 0.0
    %627 = vadd.xlane.f32.xlu0 %v626
    %v628 = vpop.xlane.xlu0 %627
    %v629 = vsel %vm108, %v475, 0.0
    %630 = vadd.xlane.f32.xlu0 %v629
    %v631 = vpop.xlane.xlu0 %630
    %v632 = vsel %vm108, %v476, 0.0
    %633 = vadd.xlane.f32.xlu0 %v632
    %v634 = vpop.xlane.xlu0 %633
    %v635 = vsel %vm108, %v477, 0.0
    %636 = vadd.xlane.f32.xlu0 %v635
    %v637 = vpop.xlane.xlu0 %636
    %v638 = vsel %vm108, %v478, 0.0
    %639 = vadd.xlane.f32.xlu0 %v638
    %v640 = vpop.xlane.xlu0 %639
    %v641 = vsel %vm108, %v479, 0.0
    %642 = vadd.xlane.f32.xlu0 %v641
    %v643 = vpop.xlane.xlu0 %642
    %v644 = vsel %vm108, %v480, 0.0
    %645 = vadd.xlane.f32.xlu0 %v644
    %v646 = vpop.xlane.xlu0 %645
    %v647 = vsel %vm108, %v481, 0.0
    %648 = vadd.xlane.f32.xlu0 %v647
    %v649 = vpop.xlane.xlu0 %648
    %v650 = vsel %vm108, %v482, 0.0
    %651 = vadd.xlane.f32.xlu0 %v650
    %v652 = vpop.xlane.xlu0 %651
    %v653 = vsel %vm108, %v483, 0.0
    %654 = vadd.xlane.f32.xlu0 %v653
    %v655 = vpop.xlane.xlu0 %654
    %v656 = vsel %vm108, %v484, 0.0
    %657 = vadd.xlane.f32.xlu0 %v656
    %v658 = vpop.xlane.xlu0 %657
    %v659 = vsel %vm108, %v485, 0.0
    %660 = vadd.xlane.f32.xlu0 %v659
    %v661 = vpop.xlane.xlu0 %660
    %v662 = vsel %vm108, %v486, 0.0
    %663 = vadd.xlane.f32.xlu0 %v662
    %v664 = vpop.xlane.xlu0 %663
    %v665 = vsel %vm108, %v487, 0.0
    %666 = vadd.xlane.f32.xlu0 %v665
    %v667 = vpop.xlane.xlu0 %666
    %v668 = vsel %vm108, %v488, 0.0
    %669 = vadd.xlane.f32.xlu0 %v668
    %v670 = vpop.xlane.xlu0 %669
    %v671 = vsel %vm108, %v489, 0.0
    %672 = vadd.xlane.f32.xlu0 %v671
    %v673 = vpop.xlane.xlu0 %672
    %v674 = vsel %vm108, %v490, 0.0
    %675 = vadd.xlane.f32.xlu0 %v674
    %v676 = vpop.xlane.xlu0 %675
    %v677 = vsel %vm108, %v491, 0.0
    %678 = vadd.xlane.f32.xlu0 %v677
    %v679 = vpop.xlane.xlu0 %678
    %v680 = vsel %vm108, %v492, 0.0
    %681 = vadd.xlane.f32.xlu0 %v680
    %v682 = vpop.xlane.xlu0 %681
    %v683 = vsel %vm108, %v493, 0.0
    %684 = vadd.xlane.f32.xlu0 %v683
    %v685 = vpop.xlane.xlu0 %684
    %v686 = vmul.f32 %v496, %v301
    %v687 = vmul.f32 %v499, %v301
    %v688 = vmul.f32 %v502, %v301
    %v689 = vmul.f32 %v505, %v301
    %v690 = vmul.f32 %v508, %v301
    %v691 = vmul.f32 %v511, %v301
    %v692 = vmul.f32 %v514, %v301
    %v693 = vmul.f32 %v517, %v301
    %v694 = vmul.f32 %v520, %v301
    %v695 = vmul.f32 %v523, %v301
    %v696 = vmul.f32 %v526, %v301
    %v697 = vmul.f32 %v529, %v301
    %v698 = vmul.f32 %v532, %v301
    %v699 = vmul.f32 %v535, %v301
    %v700 = vmul.f32 %v538, %v301
    %v701 = vmul.f32 %v541, %v301
    %v702 = vmul.f32 %v544, %v301
    %v703 = vmul.f32 %v547, %v301
    %v704 = vmul.f32 %v550, %v301
    %v705 = vmul.f32 %v553, %v301
    %v706 = vmul.f32 %v556, %v301
    %v707 = vmul.f32 %v559, %v301
    %v708 = vmul.f32 %v562, %v301
    %v709 = vmul.f32 %v565, %v301
    %v710 = vmul.f32 %v568, %v301
    %v711 = vmul.f32 %v571, %v301
    %v712 = vmul.f32 %v574, %v301
    %v713 = vmul.f32 %v577, %v301
    %v714 = vmul.f32 %v580, %v301
    %v715 = vmul.f32 %v583, %v301
    %v716 = vmul.f32 %v586, %v301
    %v717 = vmul.f32 %v589, %v301
    %v718 = vmul.f32 %v592, %v301
    %v719 = vmul.f32 %v595, %v301
    %v720 = vmul.f32 %v598, %v301
    %v721 = vmul.f32 %v601, %v301
    %v722 = vmul.f32 %v604, %v301
    %v723 = vmul.f32 %v607, %v301
    %v724 = vmul.f32 %v610, %v301
    %v725 = vmul.f32 %v613, %v301
    %v726 = vmul.f32 %v616, %v301
    %v727 = vmul.f32 %v619, %v301
    %v728 = vmul.f32 %v622, %v301
    %v729 = vmul.f32 %v625, %v301
    %v730 = vmul.f32 %v628, %v301
    %v731 = vmul.f32 %v631, %v301
    %v732 = vmul.f32 %v634, %v301
    %v733 = vmul.f32 %v637, %v301
    %v734 = vmul.f32 %v640, %v301
    %v735 = vmul.f32 %v643, %v301
    %v736 = vmul.f32 %v646, %v301
    %v737 = vmul.f32 %v649, %v301
    %v738 = vmul.f32 %v652, %v301
    %v739 = vmul.f32 %v655, %v301
    %v740 = vmul.f32 %v658, %v301
    %v741 = vmul.f32 %v661, %v301
    %v742 = vmul.f32 %v664, %v301
    %v743 = vmul.f32 %v667, %v301
    %v744 = vmul.f32 %v670, %v301
    %v745 = vmul.f32 %v673, %v301
    %v746 = vmul.f32 %v676, %v301
    %v747 = vmul.f32 %v679, %v301
    %v748 = vmul.f32 %v682, %v301
    %v749 = vmul.f32 %v685, %v301
    %v750 = vadd.f32 %v686, 1e-05
    %v751 = vadd.f32 %v687, 1e-05
    %v752 = vadd.f32 %v688, 1e-05
    %v753 = vadd.f32 %v689, 1e-05
    %v754 = vadd.f32 %v690, 1e-05
    %v755 = vadd.f32 %v691, 1e-05
    %v756 = vadd.f32 %v692, 1e-05
    %v757 = vadd.f32 %v693, 1e-05
    %v758 = vadd.f32 %v694, 1e-05
    %v759 = vadd.f32 %v695, 1e-05
    %v760 = vadd.f32 %v696, 1e-05
    %v761 = vadd.f32 %v697, 1e-05
    %v762 = vadd.f32 %v698, 1e-05
    %v763 = vadd.f32 %v699, 1e-05
    %v764 = vadd.f32 %v700, 1e-05
    %v765 = vadd.f32 %v701, 1e-05
    %v766 = vadd.f32 %v702, 1e-05
    %v767 = vadd.f32 %v703, 1e-05
    %v768 = vadd.f32 %v704, 1e-05
    %v769 = vadd.f32 %v705, 1e-05
    %v770 = vadd.f32 %v706, 1e-05
    %v771 = vadd.f32 %v707, 1e-05
    %v772 = vadd.f32 %v708, 1e-05
    %v773 = vadd.f32 %v709, 1e-05
    %v774 = vadd.f32 %v710, 1e-05
    %v775 = vadd.f32 %v711, 1e-05
    %v776 = vadd.f32 %v712, 1e-05
    %v777 = vadd.f32 %v713, 1e-05
    %v778 = vadd.f32 %v714, 1e-05
    %v779 = vadd.f32 %v715, 1e-05
    %v780 = vadd.f32 %v716, 1e-05
    %v781 = vadd.f32 %v717, 1e-05
    %v782 = vadd.f32 %v718, 1e-05
    %v783 = vadd.f32 %v719, 1e-05
    %v784 = vadd.f32 %v720, 1e-05
    %v785 = vadd.f32 %v721, 1e-05
    %v786 = vadd.f32 %v722, 1e-05
    %v787 = vadd.f32 %v723, 1e-05
    %v788 = vadd.f32 %v724, 1e-05
    %v789 = vadd.f32 %v725, 1e-05
    %v790 = vadd.f32 %v726, 1e-05
    %v791 = vadd.f32 %v727, 1e-05
    %v792 = vadd.f32 %v728, 1e-05
    %v793 = vadd.f32 %v729, 1e-05
    %v794 = vadd.f32 %v730, 1e-05
    %v795 = vadd.f32 %v731, 1e-05
    %v796 = vadd.f32 %v732, 1e-05
    %v797 = vadd.f32 %v733, 1e-05
    %v798 = vadd.f32 %v734, 1e-05
    %v799 = vadd.f32 %v735, 1e-05
    %v800 = vadd.f32 %v736, 1e-05
    %v801 = vadd.f32 %v737, 1e-05
    %v802 = vadd.f32 %v738, 1e-05
    %v803 = vadd.f32 %v739, 1e-05
    %v804 = vadd.f32 %v740, 1e-05
    %v805 = vadd.f32 %v741, 1e-05
    %v806 = vadd.f32 %v742, 1e-05
    %v807 = vadd.f32 %v743, 1e-05
    %v808 = vadd.f32 %v744, 1e-05
    %v809 = vadd.f32 %v745, 1e-05
    %v810 = vadd.f32 %v746, 1e-05
    %v811 = vadd.f32 %v747, 1e-05
    %v812 = vadd.f32 %v748, 1e-05
    %v813 = vadd.f32 %v749, 1e-05
    %v814 = vrsqrt.pop %v750
    %v815 = vmul.f32 %v750, %v814
    %vm816 = vcmp.eq.f32.partialorder %v750, inf
    %v817 = vsel %vm816, %v750, %v815
    %vm818 = vcmp.eq.f32.partialorder %v750, 0.0
    %v819 = vand.u32 %v750, 2147483648
    %v820 = vsel %vm818, %v819, %v817
    %v821 = vrsqrt.pop %v751
    %v822 = vmul.f32 %v751, %v821
    %vm823 = vcmp.eq.f32.partialorder %v751, inf
    %v824 = vsel %vm823, %v751, %v822
    %vm825 = vcmp.eq.f32.partialorder %v751, 0.0
    %v826 = vand.u32 %v751, 2147483648
    %v827 = vsel %vm825, %v826, %v824
    %v828 = vrsqrt.pop %v752
    %v829 = vmul.f32 %v752, %v828
    %vm830 = vcmp.eq.f32.partialorder %v752, inf
    %v831 = vsel %vm830, %v752, %v829
    %vm832 = vcmp.eq.f32.partialorder %v752, 0.0
    %v833 = vand.u32 %v752, 2147483648
    %v834 = vsel %vm832, %v833, %v831
    %v835 = vrsqrt.pop %v753
    %v836 = vmul.f32 %v753, %v835
    %vm837 = vcmp.eq.f32.partialorder %v753, inf
    %v838 = vsel %vm837, %v753, %v836
    %vm839 = vcmp.eq.f32.partialorder %v753, 0.0
    %v840 = vand.u32 %v753, 2147483648
    %v841 = vsel %vm839, %v840, %v838
    %v842 = vrsqrt.pop %v754
    %v843 = vmul.f32 %v754, %v842
    %vm844 = vcmp.eq.f32.partialorder %v754, inf
    %v845 = vsel %vm844, %v754, %v843
    %vm846 = vcmp.eq.f32.partialorder %v754, 0.0
    %v847 = vand.u32 %v754, 2147483648
    %v848 = vsel %vm846, %v847, %v845
    %v849 = vrsqrt.pop %v755
    %v850 = vmul.f32 %v755, %v849
    %vm851 = vcmp.eq.f32.partialorder %v755, inf
    %v852 = vsel %vm851, %v755, %v850
    %vm853 = vcmp.eq.f32.partialorder %v755, 0.0
    %v854 = vand.u32 %v755, 2147483648
    %v855 = vsel %vm853, %v854, %v852
    %v856 = vrsqrt.pop %v756
    %v857 = vmul.f32 %v756, %v856
    %vm858 = vcmp.eq.f32.partialorder %v756, inf
    %v859 = vsel %vm858, %v756, %v857
    %vm860 = vcmp.eq.f32.partialorder %v756, 0.0
    %v861 = vand.u32 %v756, 2147483648
    %v862 = vsel %vm860, %v861, %v859
    %v863 = vrsqrt.pop %v757
    %v864 = vmul.f32 %v757, %v863
    %vm865 = vcmp.eq.f32.partialorder %v757, inf
    %v866 = vsel %vm865, %v757, %v864
    %vm867 = vcmp.eq.f32.partialorder %v757, 0.0
    %v868 = vand.u32 %v757, 2147483648
    %v869 = vsel %vm867, %v868, %v866
    %v870 = vrsqrt.pop %v758
    %v871 = vmul.f32 %v758, %v870
    %vm872 = vcmp.eq.f32.partialorder %v758, inf
    %v873 = vsel %vm872, %v758, %v871
    %vm874 = vcmp.eq.f32.partialorder %v758, 0.0
    %v875 = vand.u32 %v758, 2147483648
    %v876 = vsel %vm874, %v875, %v873
    %v877 = vrsqrt.pop %v759
    %v878 = vmul.f32 %v759, %v877
    %vm879 = vcmp.eq.f32.partialorder %v759, inf
    %v880 = vsel %vm879, %v759, %v878
    %vm881 = vcmp.eq.f32.partialorder %v759, 0.0
    %v882 = vand.u32 %v759, 2147483648
    %v883 = vsel %vm881, %v882, %v880
    %v884 = vrsqrt.pop %v760
    %v885 = vmul.f32 %v760, %v884
    %vm886 = vcmp.eq.f32.partialorder %v760, inf
    %v887 = vsel %vm886, %v760, %v885
    %vm888 = vcmp.eq.f32.partialorder %v760, 0.0
    %v889 = vand.u32 %v760, 2147483648
    %v890 = vsel %vm888, %v889, %v887
    %v891 = vrsqrt.pop %v761
    %v892 = vmul.f32 %v761, %v891
    %vm893 = vcmp.eq.f32.partialorder %v761, inf
    %v894 = vsel %vm893, %v761, %v892
    %vm895 = vcmp.eq.f32.partialorder %v761, 0.0
    %v896 = vand.u32 %v761, 2147483648
    %v897 = vsel %vm895, %v896, %v894
    %v898 = vrsqrt.pop %v762
    %v899 = vmul.f32 %v762, %v898
    %vm900 = vcmp.eq.f32.partialorder %v762, inf
    %v901 = vsel %vm900, %v762, %v899
    %vm902 = vcmp.eq.f32.partialorder %v762, 0.0
    %v903 = vand.u32 %v762, 2147483648
    %v904 = vsel %vm902, %v903, %v901
    %v905 = vrsqrt.pop %v763
    %v906 = vmul.f32 %v763, %v905
    %vm907 = vcmp.eq.f32.partialorder %v763, inf
    %v908 = vsel %vm907, %v763, %v906
    %vm909 = vcmp.eq.f32.partialorder %v763, 0.0
    %v910 = vand.u32 %v763, 2147483648
    %v911 = vsel %vm909, %v910, %v908
    %v912 = vrsqrt.pop %v764
    %v913 = vmul.f32 %v764, %v912
    %vm914 = vcmp.eq.f32.partialorder %v764, inf
    %v915 = vsel %vm914, %v764, %v913
    %vm916 = vcmp.eq.f32.partialorder %v764, 0.0
    %v917 = vand.u32 %v764, 2147483648
    %v918 = vsel %vm916, %v917, %v915
    %v919 = vrsqrt.pop %v765
    %v920 = vmul.f32 %v765, %v919
    %vm921 = vcmp.eq.f32.partialorder %v765, inf
    %v922 = vsel %vm921, %v765, %v920
    %vm923 = vcmp.eq.f32.partialorder %v765, 0.0
    %v924 = vand.u32 %v765, 2147483648
    %v925 = vsel %vm923, %v924, %v922
    %v926 = vrsqrt.pop %v766
    %v927 = vmul.f32 %v766, %v926
    %vm928 = vcmp.eq.f32.partialorder %v766, inf
    %v929 = vsel %vm928, %v766, %v927
    %vm930 = vcmp.eq.f32.partialorder %v766, 0.0
    %v931 = vand.u32 %v766, 2147483648
    %v932 = vsel %vm930, %v931, %v929
    %v933 = vrsqrt.pop %v767
    %v934 = vmul.f32 %v767, %v933
    %vm935 = vcmp.eq.f32.partialorder %v767, inf
    %v936 = vsel %vm935, %v767, %v934
    %vm937 = vcmp.eq.f32.partialorder %v767, 0.0
    %v938 = vand.u32 %v767, 2147483648
    %v939 = vsel %vm937, %v938, %v936
    %v940 = vrsqrt.pop %v768
    %v941 = vmul.f32 %v768, %v940
    %vm942 = vcmp.eq.f32.partialorder %v768, inf
    %v943 = vsel %vm942, %v768, %v941
    %vm944 = vcmp.eq.f32.partialorder %v768, 0.0
    %v945 = vand.u32 %v768, 2147483648
    %v946 = vsel %vm944, %v945, %v943
    %v947 = vrsqrt.pop %v769
    %v948 = vmul.f32 %v769, %v947
    %vm949 = vcmp.eq.f32.partialorder %v769, inf
    %v950 = vsel %vm949, %v769, %v948
    %vm951 = vcmp.eq.f32.partialorder %v769, 0.0
    %v952 = vand.u32 %v769, 2147483648
    %v953 = vsel %vm951, %v952, %v950
    %v954 = vrsqrt.pop %v770
    %v955 = vmul.f32 %v770, %v954
    %vm956 = vcmp.eq.f32.partialorder %v770, inf
    %v957 = vsel %vm956, %v770, %v955
    %vm958 = vcmp.eq.f32.partialorder %v770, 0.0
    %v959 = vand.u32 %v770, 2147483648
    %v960 = vsel %vm958, %v959, %v957
    %v961 = vrsqrt.pop %v771
    %v962 = vmul.f32 %v771, %v961
    %vm963 = vcmp.eq.f32.partialorder %v771, inf
    %v964 = vsel %vm963, %v771, %v962
    %vm965 = vcmp.eq.f32.partialorder %v771, 0.0
    %v966 = vand.u32 %v771, 2147483648
    %v967 = vsel %vm965, %v966, %v964
    %v968 = vrsqrt.pop %v772
    %v969 = vmul.f32 %v772, %v968
    %vm970 = vcmp.eq.f32.partialorder %v772, inf
    %v971 = vsel %vm970, %v772, %v969
    %vm972 = vcmp.eq.f32.partialorder %v772, 0.0
    %v973 = vand.u32 %v772, 2147483648
    %v974 = vsel %vm972, %v973, %v971
    %v975 = vrsqrt.pop %v773
    %v976 = vmul.f32 %v773, %v975
    %vm977 = vcmp.eq.f32.partialorder %v773, inf
    %v978 = vsel %vm977, %v773, %v976
    %vm979 = vcmp.eq.f32.partialorder %v773, 0.0
    %v980 = vand.u32 %v773, 2147483648
    %v981 = vsel %vm979, %v980, %v978
    %v982 = vrsqrt.pop %v774
    %v983 = vmul.f32 %v774, %v982
    %vm984 = vcmp.eq.f32.partialorder %v774, inf
    %v985 = vsel %vm984, %v774, %v983
    %vm986 = vcmp.eq.f32.partialorder %v774, 0.0
    %v987 = vand.u32 %v774, 2147483648
    %v988 = vsel %vm986, %v987, %v985
    %v989 = vrsqrt.pop %v775
    %v990 = vmul.f32 %v775, %v989
    %vm991 = vcmp.eq.f32.partialorder %v775, inf
    %v992 = vsel %vm991, %v775, %v990
    %vm993 = vcmp.eq.f32.partialorder %v775, 0.0
    %v994 = vand.u32 %v775, 2147483648
    %v995 = vsel %vm993, %v994, %v992
    %v996 = vrsqrt.pop %v776
    %v997 = vmul.f32 %v776, %v996
    %vm998 = vcmp.eq.f32.partialorder %v776, inf
    %v999 = vsel %vm998, %v776, %v997
    %vm1000 = vcmp.eq.f32.partialorder %v776, 0.0
    %v1001 = vand.u32 %v776, 2147483648
    %v1002 = vsel %vm1000, %v1001, %v999
    %v1003 = vrsqrt.pop %v777
    %v1004 = vmul.f32 %v777, %v1003
    %vm1005 = vcmp.eq.f32.partialorder %v777, inf
    %v1006 = vsel %vm1005, %v777, %v1004
    %vm1007 = vcmp.eq.f32.partialorder %v777, 0.0
    %v1008 = vand.u32 %v777, 2147483648
    %v1009 = vsel %vm1007, %v1008, %v1006
    %v1010 = vrsqrt.pop %v778
    %v1011 = vmul.f32 %v778, %v1010
    %vm1012 = vcmp.eq.f32.partialorder %v778, inf
    %v1013 = vsel %vm1012, %v778, %v1011
    %vm1014 = vcmp.eq.f32.partialorder %v778, 0.0
    %v1015 = vand.u32 %v778, 2147483648
    %v1016 = vsel %vm1014, %v1015, %v1013
    %v1017 = vrsqrt.pop %v779
    %v1018 = vmul.f32 %v779, %v1017
    %vm1019 = vcmp.eq.f32.partialorder %v779, inf
    %v1020 = vsel %vm1019, %v779, %v1018
    %vm1021 = vcmp.eq.f32.partialorder %v779, 0.0
    %v1022 = vand.u32 %v779, 2147483648
    %v1023 = vsel %vm1021, %v1022, %v1020
    %v1024 = vrsqrt.pop %v780
    %v1025 = vmul.f32 %v780, %v1024
    %vm1026 = vcmp.eq.f32.partialorder %v780, inf
    %v1027 = vsel %vm1026, %v780, %v1025
    %vm1028 = vcmp.eq.f32.partialorder %v780, 0.0
    %v1029 = vand.u32 %v780, 2147483648
    %v1030 = vsel %vm1028, %v1029, %v1027
    %v1031 = vrsqrt.pop %v781
    %v1032 = vmul.f32 %v781, %v1031
    %vm1033 = vcmp.eq.f32.partialorder %v781, inf
    %v1034 = vsel %vm1033, %v781, %v1032
    %vm1035 = vcmp.eq.f32.partialorder %v781, 0.0
    %v1036 = vand.u32 %v781, 2147483648
    %v1037 = vsel %vm1035, %v1036, %v1034
    %v1038 = vrsqrt.pop %v782
    %v1039 = vmul.f32 %v782, %v1038
    %vm1040 = vcmp.eq.f32.partialorder %v782, inf
    %v1041 = vsel %vm1040, %v782, %v1039
    %vm1042 = vcmp.eq.f32.partialorder %v782, 0.0
    %v1043 = vand.u32 %v782, 2147483648
    %v1044 = vsel %vm1042, %v1043, %v1041
    %v1045 = vrsqrt.pop %v783
    %v1046 = vmul.f32 %v783, %v1045
    %vm1047 = vcmp.eq.f32.partialorder %v783, inf
    %v1048 = vsel %vm1047, %v783, %v1046
    %vm1049 = vcmp.eq.f32.partialorder %v783, 0.0
    %v1050 = vand.u32 %v783, 2147483648
    %v1051 = vsel %vm1049, %v1050, %v1048
    %v1052 = vrsqrt.pop %v784
    %v1053 = vmul.f32 %v784, %v1052
    %vm1054 = vcmp.eq.f32.partialorder %v784, inf
    %v1055 = vsel %vm1054, %v784, %v1053
    %vm1056 = vcmp.eq.f32.partialorder %v784, 0.0
    %v1057 = vand.u32 %v784, 2147483648
    %v1058 = vsel %vm1056, %v1057, %v1055
    %v1059 = vrsqrt.pop %v785
    %v1060 = vmul.f32 %v785, %v1059
    %vm1061 = vcmp.eq.f32.partialorder %v785, inf
    %v1062 = vsel %vm1061, %v785, %v1060
    %vm1063 = vcmp.eq.f32.partialorder %v785, 0.0
    %v1064 = vand.u32 %v785, 2147483648
    %v1065 = vsel %vm1063, %v1064, %v1062
    %v1066 = vrsqrt.pop %v786
    %v1067 = vmul.f32 %v786, %v1066
    %vm1068 = vcmp.eq.f32.partialorder %v786, inf
    %v1069 = vsel %vm1068, %v786, %v1067
    %vm1070 = vcmp.eq.f32.partialorder %v786, 0.0
    %v1071 = vand.u32 %v786, 2147483648
    %v1072 = vsel %vm1070, %v1071, %v1069
    %v1073 = vrsqrt.pop %v787
    %v1074 = vmul.f32 %v787, %v1073
    %vm1075 = vcmp.eq.f32.partialorder %v787, inf
    %v1076 = vsel %vm1075, %v787, %v1074
    %vm1077 = vcmp.eq.f32.partialorder %v787, 0.0
    %v1078 = vand.u32 %v787, 2147483648
    %v1079 = vsel %vm1077, %v1078, %v1076
    %v1080 = vrsqrt.pop %v788
    %v1081 = vmul.f32 %v788, %v1080
    %vm1082 = vcmp.eq.f32.partialorder %v788, inf
    %v1083 = vsel %vm1082, %v788, %v1081
    %vm1084 = vcmp.eq.f32.partialorder %v788, 0.0
    %v1085 = vand.u32 %v788, 2147483648
    %v1086 = vsel %vm1084, %v1085, %v1083
    %v1087 = vrsqrt.pop %v789
    %v1088 = vmul.f32 %v789, %v1087
    %vm1089 = vcmp.eq.f32.partialorder %v789, inf
    %v1090 = vsel %vm1089, %v789, %v1088
    %vm1091 = vcmp.eq.f32.partialorder %v789, 0.0
    %v1092 = vand.u32 %v789, 2147483648
    %v1093 = vsel %vm1091, %v1092, %v1090
    %v1094 = vrsqrt.pop %v790
    %v1095 = vmul.f32 %v790, %v1094
    %vm1096 = vcmp.eq.f32.partialorder %v790, inf
    %v1097 = vsel %vm1096, %v790, %v1095
    %vm1098 = vcmp.eq.f32.partialorder %v790, 0.0
    %v1099 = vand.u32 %v790, 2147483648
    %v1100 = vsel %vm1098, %v1099, %v1097
    %v1101 = vrsqrt.pop %v791
    %v1102 = vmul.f32 %v791, %v1101
    %vm1103 = vcmp.eq.f32.partialorder %v791, inf
    %v1104 = vsel %vm1103, %v791, %v1102
    %vm1105 = vcmp.eq.f32.partialorder %v791, 0.0
    %v1106 = vand.u32 %v791, 2147483648
    %v1107 = vsel %vm1105, %v1106, %v1104
    %v1108 = vrsqrt.pop %v792
    %v1109 = vmul.f32 %v792, %v1108
    %vm1110 = vcmp.eq.f32.partialorder %v792, inf
    %v1111 = vsel %vm1110, %v792, %v1109
    %vm1112 = vcmp.eq.f32.partialorder %v792, 0.0
    %v1113 = vand.u32 %v792, 2147483648
    %v1114 = vsel %vm1112, %v1113, %v1111
    %v1115 = vrsqrt.pop %v793
    %v1116 = vmul.f32 %v793, %v1115
    %vm1117 = vcmp.eq.f32.partialorder %v793, inf
    %v1118 = vsel %vm1117, %v793, %v1116
    %vm1119 = vcmp.eq.f32.partialorder %v793, 0.0
    %v1120 = vand.u32 %v793, 2147483648
    %v1121 = vsel %vm1119, %v1120, %v1118
    %v1122 = vrsqrt.pop %v794
    %v1123 = vmul.f32 %v794, %v1122
    %vm1124 = vcmp.eq.f32.partialorder %v794, inf
    %v1125 = vsel %vm1124, %v794, %v1123
    %vm1126 = vcmp.eq.f32.partialorder %v794, 0.0
    %v1127 = vand.u32 %v794, 2147483648
    %v1128 = vsel %vm1126, %v1127, %v1125
    %v1129 = vrsqrt.pop %v795
    %v1130 = vmul.f32 %v795, %v1129
    %vm1131 = vcmp.eq.f32.partialorder %v795, inf
    %v1132 = vsel %vm1131, %v795, %v1130
    %vm1133 = vcmp.eq.f32.partialorder %v795, 0.0
    %v1134 = vand.u32 %v795, 2147483648
    %v1135 = vsel %vm1133, %v1134, %v1132
    %v1136 = vrsqrt.pop %v796
    %v1137 = vmul.f32 %v796, %v1136
    %vm1138 = vcmp.eq.f32.partialorder %v796, inf
    %v1139 = vsel %vm1138, %v796, %v1137
    %vm1140 = vcmp.eq.f32.partialorder %v796, 0.0
    %v1141 = vand.u32 %v796, 2147483648
    %v1142 = vsel %vm1140, %v1141, %v1139
    %v1143 = vrsqrt.pop %v797
    %v1144 = vmul.f32 %v797, %v1143
    %vm1145 = vcmp.eq.f32.partialorder %v797, inf
    %v1146 = vsel %vm1145, %v797, %v1144
    %vm1147 = vcmp.eq.f32.partialorder %v797, 0.0
    %v1148 = vand.u32 %v797, 2147483648
    %v1149 = vsel %vm1147, %v1148, %v1146
    %v1150 = vrsqrt.pop %v798
    %v1151 = vmul.f32 %v798, %v1150
    %vm1152 = vcmp.eq.f32.partialorder %v798, inf
    %v1153 = vsel %vm1152, %v798, %v1151
    %vm1154 = vcmp.eq.f32.partialorder %v798, 0.0
    %v1155 = vand.u32 %v798, 2147483648
    %v1156 = vsel %vm1154, %v1155, %v1153
    %v1157 = vrsqrt.pop %v799
    %v1158 = vmul.f32 %v799, %v1157
    %vm1159 = vcmp.eq.f32.partialorder %v799, inf
    %v1160 = vsel %vm1159, %v799, %v1158
    %vm1161 = vcmp.eq.f32.partialorder %v799, 0.0
    %v1162 = vand.u32 %v799, 2147483648
    %v1163 = vsel %vm1161, %v1162, %v1160
    %v1164 = vrsqrt.pop %v800
    %v1165 = vmul.f32 %v800, %v1164
    %vm1166 = vcmp.eq.f32.partialorder %v800, inf
    %v1167 = vsel %vm1166, %v800, %v1165
    %vm1168 = vcmp.eq.f32.partialorder %v800, 0.0
    %v1169 = vand.u32 %v800, 2147483648
    %v1170 = vsel %vm1168, %v1169, %v1167
    %v1171 = vrsqrt.pop %v801
    %v1172 = vmul.f32 %v801, %v1171
    %vm1173 = vcmp.eq.f32.partialorder %v801, inf
    %v1174 = vsel %vm1173, %v801, %v1172
    %vm1175 = vcmp.eq.f32.partialorder %v801, 0.0
    %v1176 = vand.u32 %v801, 2147483648
    %v1177 = vsel %vm1175, %v1176, %v1174
    %v1178 = vrsqrt.pop %v802
    %v1179 = vmul.f32 %v802, %v1178
    %vm1180 = vcmp.eq.f32.partialorder %v802, inf
    %v1181 = vsel %vm1180, %v802, %v1179
    %vm1182 = vcmp.eq.f32.partialorder %v802, 0.0
    %v1183 = vand.u32 %v802, 2147483648
    %v1184 = vsel %vm1182, %v1183, %v1181
    %v1185 = vrsqrt.pop %v803
    %v1186 = vmul.f32 %v803, %v1185
    %vm1187 = vcmp.eq.f32.partialorder %v803, inf
    %v1188 = vsel %vm1187, %v803, %v1186
    %vm1189 = vcmp.eq.f32.partialorder %v803, 0.0
    %v1190 = vand.u32 %v803, 2147483648
    %v1191 = vsel %vm1189, %v1190, %v1188
    %v1192 = vrsqrt.pop %v804
    %v1193 = vmul.f32 %v804, %v1192
    %vm1194 = vcmp.eq.f32.partialorder %v804, inf
    %v1195 = vsel %vm1194, %v804, %v1193
    %vm1196 = vcmp.eq.f32.partialorder %v804, 0.0
    %v1197 = vand.u32 %v804, 2147483648
    %v1198 = vsel %vm1196, %v1197, %v1195
    %v1199 = vrsqrt.pop %v805
    %v1200 = vmul.f32 %v805, %v1199
    %vm1201 = vcmp.eq.f32.partialorder %v805, inf
    %v1202 = vsel %vm1201, %v805, %v1200
    %vm1203 = vcmp.eq.f32.partialorder %v805, 0.0
    %v1204 = vand.u32 %v805, 2147483648
    %v1205 = vsel %vm1203, %v1204, %v1202
    %v1206 = vrsqrt.pop %v806
    %v1207 = vmul.f32 %v806, %v1206
    %vm1208 = vcmp.eq.f32.partialorder %v806, inf
    %v1209 = vsel %vm1208, %v806, %v1207
    %vm1210 = vcmp.eq.f32.partialorder %v806, 0.0
    %v1211 = vand.u32 %v806, 2147483648
    %v1212 = vsel %vm1210, %v1211, %v1209
    %v1213 = vrsqrt.pop %v807
    %v1214 = vmul.f32 %v807, %v1213
    %vm1215 = vcmp.eq.f32.partialorder %v807, inf
    %v1216 = vsel %vm1215, %v807, %v1214
    %vm1217 = vcmp.eq.f32.partialorder %v807, 0.0
    %v1218 = vand.u32 %v807, 2147483648
    %v1219 = vsel %vm1217, %v1218, %v1216
    %v1220 = vrsqrt.pop %v808
    %v1221 = vmul.f32 %v808, %v1220
    %vm1222 = vcmp.eq.f32.partialorder %v808, inf
    %v1223 = vsel %vm1222, %v808, %v1221
    %vm1224 = vcmp.eq.f32.partialorder %v808, 0.0
    %v1225 = vand.u32 %v808, 2147483648
    %v1226 = vsel %vm1224, %v1225, %v1223
    %v1227 = vrsqrt.pop %v809
    %v1228 = vmul.f32 %v809, %v1227
    %vm1229 = vcmp.eq.f32.partialorder %v809, inf
    %v1230 = vsel %vm1229, %v809, %v1228
    %vm1231 = vcmp.eq.f32.partialorder %v809, 0.0
    %v1232 = vand.u32 %v809, 2147483648
    %v1233 = vsel %vm1231, %v1232, %v1230
    %v1234 = vrsqrt.pop %v810
    %v1235 = vmul.f32 %v810, %v1234
    %vm1236 = vcmp.eq.f32.partialorder %v810, inf
    %v1237 = vsel %vm1236, %v810, %v1235
    %vm1238 = vcmp.eq.f32.partialorder %v810, 0.0
    %v1239 = vand.u32 %v810, 2147483648
    %v1240 = vsel %vm1238, %v1239, %v1237
    %v1241 = vrsqrt.pop %v811
    %v1242 = vmul.f32 %v811, %v1241
    %vm1243 = vcmp.eq.f32.partialorder %v811, inf
    %v1244 = vsel %vm1243, %v811, %v1242
    %vm1245 = vcmp.eq.f32.partialorder %v811, 0.0
    %v1246 = vand.u32 %v811, 2147483648
    %v1247 = vsel %vm1245, %v1246, %v1244
    %v1248 = vrsqrt.pop %v812
    %v1249 = vmul.f32 %v812, %v1248
    %vm1250 = vcmp.eq.f32.partialorder %v812, inf
    %v1251 = vsel %vm1250, %v812, %v1249
    %vm1252 = vcmp.eq.f32.partialorder %v812, 0.0
    %v1253 = vand.u32 %v812, 2147483648
    %v1254 = vsel %vm1252, %v1253, %v1251
    %v1255 = vrsqrt.pop %v813
    %v1256 = vmul.f32 %v813, %v1255
    %vm1257 = vcmp.eq.f32.partialorder %v813, inf
    %v1258 = vsel %vm1257, %v813, %v1256
    %vm1259 = vcmp.eq.f32.partialorder %v813, 0.0
    %v1260 = vand.u32 %v813, 2147483648
    %v1261 = vsel %vm1259, %v1260, %v1258
    %v1262 = vrcp.pop %v820
    %v1263 = vmul.f32 %v366, %v1262
    %v1264 = vrcp.pop %v827
    %v1265 = vmul.f32 %v367, %v1264
    %v1266 = vrcp.pop %v834
    %v1267 = vmul.f32 %v368, %v1266
    %v1268 = vrcp.pop %v841
    %v1269 = vmul.f32 %v369, %v1268
    %v1270 = vrcp.pop %v848
    %v1271 = vmul.f32 %v370, %v1270
    %v1272 = vrcp.pop %v855
    %v1273 = vmul.f32 %v371, %v1272
    %v1274 = vrcp.pop %v862
    %v1275 = vmul.f32 %v372, %v1274
    %v1276 = vrcp.pop %v869
    %v1277 = vmul.f32 %v373, %v1276
    %v1278 = vrcp.pop %v876
    %v1279 = vmul.f32 %v374, %v1278
    %v1280 = vrcp.pop %v883
    %v1281 = vmul.f32 %v375, %v1280
    %v1282 = vrcp.pop %v890
    %v1283 = vmul.f32 %v376, %v1282
    %v1284 = vrcp.pop %v897
    %v1285 = vmul.f32 %v377, %v1284
    %v1286 = vrcp.pop %v904
    %v1287 = vmul.f32 %v378, %v1286
    %v1288 = vrcp.pop %v911
    %v1289 = vmul.f32 %v379, %v1288
    %v1290 = vrcp.pop %v918
    %v1291 = vmul.f32 %v380, %v1290
    %v1292 = vrcp.pop %v925
    %v1293 = vmul.f32 %v381, %v1292
    %v1294 = vrcp.pop %v932
    %v1295 = vmul.f32 %v382, %v1294
    %v1296 = vrcp.pop %v939
    %v1297 = vmul.f32 %v383, %v1296
    %v1298 = vrcp.pop %v946
    %v1299 = vmul.f32 %v384, %v1298
    %v1300 = vrcp.pop %v953
    %v1301 = vmul.f32 %v385, %v1300
    %v1302 = vrcp.pop %v960
    %v1303 = vmul.f32 %v386, %v1302
    %v1304 = vrcp.pop %v967
    %v1305 = vmul.f32 %v387, %v1304
    %v1306 = vrcp.pop %v974
    %v1307 = vmul.f32 %v388, %v1306
    %v1308 = vrcp.pop %v981
    %v1309 = vmul.f32 %v389, %v1308
    %v1310 = vrcp.pop %v988
    %v1311 = vmul.f32 %v390, %v1310
    %v1312 = vrcp.pop %v995
    %v1313 = vmul.f32 %v391, %v1312
    %v1314 = vrcp.pop %v1002
    %v1315 = vmul.f32 %v392, %v1314
    %v1316 = vrcp.pop %v1009
    %v1317 = vmul.f32 %v393, %v1316
    %v1318 = vrcp.pop %v1016
    %v1319 = vmul.f32 %v394, %v1318
    %v1320 = vrcp.pop %v1023
    %v1321 = vmul.f32 %v395, %v1320
    %v1322 = vrcp.pop %v1030
    %v1323 = vmul.f32 %v396, %v1322
    %v1324 = vrcp.pop %v1037
    %v1325 = vmul.f32 %v397, %v1324
    %v1326 = vrcp.pop %v1044
    %v1327 = vmul.f32 %v398, %v1326
    %v1328 = vrcp.pop %v1051
    %v1329 = vmul.f32 %v399, %v1328
    %v1330 = vrcp.pop %v1058
    %v1331 = vmul.f32 %v400, %v1330
    %v1332 = vrcp.pop %v1065
    %v1333 = vmul.f32 %v401, %v1332
    %v1334 = vrcp.pop %v1072
    %v1335 = vmul.f32 %v402, %v1334
    %v1336 = vrcp.pop %v1079
    %v1337 = vmul.f32 %v403, %v1336
    %v1338 = vrcp.pop %v1086
    %v1339 = vmul.f32 %v404, %v1338
    %v1340 = vrcp.pop %v1093
    %v1341 = vmul.f32 %v405, %v1340
    %v1342 = vrcp.pop %v1100
    %v1343 = vmul.f32 %v406, %v1342
    %v1344 = vrcp.pop %v1107
    %v1345 = vmul.f32 %v407, %v1344
    %v1346 = vrcp.pop %v1114
    %v1347 = vmul.f32 %v408, %v1346
    %v1348 = vrcp.pop %v1121
    %v1349 = vmul.f32 %v409, %v1348
    %v1350 = vrcp.pop %v1128
    %v1351 = vmul.f32 %v410, %v1350
    %v1352 = vrcp.pop %v1135
    %v1353 = vmul.f32 %v411, %v1352
    %v1354 = vrcp.pop %v1142
    %v1355 = vmul.f32 %v412, %v1354
    %v1356 = vrcp.pop %v1149
    %v1357 = vmul.f32 %v413, %v1356
    %v1358 = vrcp.pop %v1156
    %v1359 = vmul.f32 %v414, %v1358
    %v1360 = vrcp.pop %v1163
    %v1361 = vmul.f32 %v415, %v1360
    %v1362 = vrcp.pop %v1170
    %v1363 = vmul.f32 %v416, %v1362
    %v1364 = vrcp.pop %v1177
    %v1365 = vmul.f32 %v417, %v1364
    %v1366 = vrcp.pop %v1184
    %v1367 = vmul.f32 %v418, %v1366
    %v1368 = vrcp.pop %v1191
    %v1369 = vmul.f32 %v419, %v1368
    %v1370 = vrcp.pop %v1198
    %v1371 = vmul.f32 %v420, %v1370
    %v1372 = vrcp.pop %v1205
    %v1373 = vmul.f32 %v421, %v1372
    %v1374 = vrcp.pop %v1212
    %v1375 = vmul.f32 %v422, %v1374
    %v1376 = vrcp.pop %v1219
    %v1377 = vmul.f32 %v423, %v1376
    %v1378 = vrcp.pop %v1226
    %v1379 = vmul.f32 %v424, %v1378
    %v1380 = vrcp.pop %v1233
    %v1381 = vmul.f32 %v425, %v1380
    %v1382 = vrcp.pop %v1240
    %v1383 = vmul.f32 %v426, %v1382
    %v1384 = vrcp.pop %v1247
    %v1385 = vmul.f32 %v427, %v1384
    %v1386 = vrcp.pop %v1254
    %v1387 = vmul.f32 %v428, %v1386
    %v1388 = vrcp.pop %v1261
    %v1389 = vmul.f32 %v429, %v1388
    %v1390 = vld [vmem:[#allocation2] sm:$0x1]
    %v1392 = vlaneseq
    %v1393 = vshrl.u32 %v1392, 7
    %v1394 = vsub.s32 0, %v1393
    %v1395 = vrot.slane %v1390, %v1394
    %v1397 = vmul.f32 %v1263, %v1395
    %v1398 = vmul.f32 %v1265, %v1395
    %v1399 = vmul.f32 %v1267, %v1395
    %v1400 = vmul.f32 %v1269, %v1395
    %v1401 = vmul.f32 %v1271, %v1395
    %v1402 = vmul.f32 %v1273, %v1395
    %v1403 = vmul.f32 %v1275, %v1395
    %v1404 = vmul.f32 %v1277, %v1395
    %v1405 = vmul.f32 %v1279, %v1395
    %v1406 = vmul.f32 %v1281, %v1395
    %v1407 = vmul.f32 %v1283, %v1395
    %v1408 = vmul.f32 %v1285, %v1395
    %v1409 = vmul.f32 %v1287, %v1395
    %v1410 = vmul.f32 %v1289, %v1395
    %v1411 = vmul.f32 %v1291, %v1395
    %v1412 = vmul.f32 %v1293, %v1395
    %v1413 = vmul.f32 %v1295, %v1395
    %v1414 = vmul.f32 %v1297, %v1395
    %v1415 = vmul.f32 %v1299, %v1395
    %v1416 = vmul.f32 %v1301, %v1395
    %v1417 = vmul.f32 %v1303, %v1395
    %v1418 = vmul.f32 %v1305, %v1395
    %v1419 = vmul.f32 %v1307, %v1395
    %v1420 = vmul.f32 %v1309, %v1395
    %v1421 = vmul.f32 %v1311, %v1395
    %v1422 = vmul.f32 %v1313, %v1395
    %v1423 = vmul.f32 %v1315, %v1395
    %v1424 = vmul.f32 %v1317, %v1395
    %v1425 = vmul.f32 %v1319, %v1395
    %v1426 = vmul.f32 %v1321, %v1395
    %v1427 = vmul.f32 %v1323, %v1395
    %v1428 = vmul.f32 %v1325, %v1395
    %v1429 = vmul.f32 %v1327, %v1395
    %v1430 = vmul.f32 %v1329, %v1395
    %v1431 = vmul.f32 %v1331, %v1395
    %v1432 = vmul.f32 %v1333, %v1395
    %v1433 = vmul.f32 %v1335, %v1395
    %v1434 = vmul.f32 %v1337, %v1395
    %v1435 = vmul.f32 %v1339, %v1395
    %v1436 = vmul.f32 %v1341, %v1395
    %v1437 = vmul.f32 %v1343, %v1395
    %v1438 = vmul.f32 %v1345, %v1395
    %v1439 = vmul.f32 %v1347, %v1395
    %v1440 = vmul.f32 %v1349, %v1395
    %v1441 = vmul.f32 %v1351, %v1395
    %v1442 = vmul.f32 %v1353, %v1395
    %v1443 = vmul.f32 %v1355, %v1395
    %v1444 = vmul.f32 %v1357, %v1395
    %v1445 = vmul.f32 %v1359, %v1395
    %v1446 = vmul.f32 %v1361, %v1395
    %v1447 = vmul.f32 %v1363, %v1395
    %v1448 = vmul.f32 %v1365, %v1395
    %v1449 = vmul.f32 %v1367, %v1395
    %v1450 = vmul.f32 %v1369, %v1395
    %v1451 = vmul.f32 %v1371, %v1395
    %v1452 = vmul.f32 %v1373, %v1395
    %v1453 = vmul.f32 %v1375, %v1395
    %v1454 = vmul.f32 %v1377, %v1395
    %v1455 = vmul.f32 %v1379, %v1395
    %v1456 = vmul.f32 %v1381, %v1395
    %v1457 = vmul.f32 %v1383, %v1395
    %v1458 = vmul.f32 %v1385, %v1395
    %v1459 = vmul.f32 %v1387, %v1395
    %v1460 = vmul.f32 %v1389, %v1395
    %v1461 = vld [vmem:[#allocation4] sm:$0x1]
    %v1463 = vlaneseq
    %v1464 = vshrl.u32 %v1463, 7
    %v1465 = vsub.s32 0, %v1464
    %v1466 = vrot.slane %v1461, %v1465
    %v1468 = vadd.f32 %v1397, %v1466
    %v1469 = vadd.f32 %v1398, %v1466
    %v1470 = vadd.f32 %v1399, %v1466
    %v1471 = vadd.f32 %v1400, %v1466
    %v1472 = vadd.f32 %v1401, %v1466
    %v1473 = vadd.f32 %v1402, %v1466
    %v1474 = vadd.f32 %v1403, %v1466
    %v1475 = vadd.f32 %v1404, %v1466
    %v1476 = vadd.f32 %v1405, %v1466
    %v1477 = vadd.f32 %v1406, %v1466
    %v1478 = vadd.f32 %v1407, %v1466
    %v1479 = vadd.f32 %v1408, %v1466
    %v1480 = vadd.f32 %v1409, %v1466
    %v1481 = vadd.f32 %v1410, %v1466
    %v1482 = vadd.f32 %v1411, %v1466
    %v1483 = vadd.f32 %v1412, %v1466
    %v1484 = vadd.f32 %v1413, %v1466
    %v1485 = vadd.f32 %v1414, %v1466
    %v1486 = vadd.f32 %v1415, %v1466
    %v1487 = vadd.f32 %v1416, %v1466
    %v1488 = vadd.f32 %v1417, %v1466
    %v1489 = vadd.f32 %v1418, %v1466
    %v1490 = vadd.f32 %v1419, %v1466
    %v1491 = vadd.f32 %v1420, %v1466
    %v1492 = vadd.f32 %v1421, %v1466
    %v1493 = vadd.f32 %v1422, %v1466
    %v1494 = vadd.f32 %v1423, %v1466
    %v1495 = vadd.f32 %v1424, %v1466
    %v1496 = vadd.f32 %v1425, %v1466
    %v1497 = vadd.f32 %v1426, %v1466
    %v1498 = vadd.f32 %v1427, %v1466
    %v1499 = vadd.f32 %v1428, %v1466
    %v1500 = vadd.f32 %v1429, %v1466
    %v1501 = vadd.f32 %v1430, %v1466
    %v1502 = vadd.f32 %v1431, %v1466
    %v1503 = vadd.f32 %v1432, %v1466
    %v1504 = vadd.f32 %v1433, %v1466
    %v1505 = vadd.f32 %v1434, %v1466
    %v1506 = vadd.f32 %v1435, %v1466
    %v1507 = vadd.f32 %v1436, %v1466
    %v1508 = vadd.f32 %v1437, %v1466
    %v1509 = vadd.f32 %v1438, %v1466
    %v1510 = vadd.f32 %v1439, %v1466
    %v1511 = vadd.f32 %v1440, %v1466
    %v1512 = vadd.f32 %v1441, %v1466
    %v1513 = vadd.f32 %v1442, %v1466
    %v1514 = vadd.f32 %v1443, %v1466
    %v1515 = vadd.f32 %v1444, %v1466
    %v1516 = vadd.f32 %v1445, %v1466
    %v1517 = vadd.f32 %v1446, %v1466
    %v1518 = vadd.f32 %v1447, %v1466
    %v1519 = vadd.f32 %v1448, %v1466
    %v1520 = vadd.f32 %v1449, %v1466
    %v1521 = vadd.f32 %v1450, %v1466
    %v1522 = vadd.f32 %v1451, %v1466
    %v1523 = vadd.f32 %v1452, %v1466
    %v1524 = vadd.f32 %v1453, %v1466
    %v1525 = vadd.f32 %v1454, %v1466
    %v1526 = vadd.f32 %v1455, %v1466
    %v1527 = vadd.f32 %v1456, %v1466
    %v1528 = vadd.f32 %v1457, %v1466
    %v1529 = vadd.f32 %v1458, %v1466
    %v1530 = vadd.f32 %v1459, %v1466
    %v1531 = vadd.f32 %v1460, %v1466
    %v1532 = vld [vmem:[%s3] sm:$0xff]
    %v1534 = vsel %vm108, %v1468, 0
    %v1537 = vsel %vm108, %v1469, 0
    %v1540 = vsel %vm108, %v1470, 0
    %v1543 = vsel %vm108, %v1471, 0
    %v1546 = vsel %vm108, %v1472, 0
    %v1549 = vsel %vm108, %v1473, 0
    %v1552 = vsel %vm108, %v1474, 0
    %v1555 = vsel %vm108, %v1475, 0
    %v1558 = vsel %vm108, %v1476, 0
    %v1561 = vsel %vm108, %v1477, 0
    %v1564 = vsel %vm108, %v1478, 0
    %v1567 = vsel %vm108, %v1479, 0
    %v1570 = vsel %vm108, %v1480, 0
    %v1573 = vsel %vm108, %v1481, 0
    %v1576 = vsel %vm108, %v1482, 0
    %v1579 = vsel %vm108, %v1483, 0
    %v1582 = vsel %vm108, %v1484, 0
    %v1585 = vsel %vm108, %v1485, 0
    %v1588 = vsel %vm108, %v1486, 0
    %v1591 = vsel %vm108, %v1487, 0
    %v1594 = vsel %vm108, %v1488, 0
    %v1597 = vsel %vm108, %v1489, 0
    %v1600 = vsel %vm108, %v1490, 0
    %v1603 = vsel %vm108, %v1491, 0
    %v1606 = vsel %vm108, %v1492, 0
    %v1609 = vsel %vm108, %v1493, 0
    %v1612 = vsel %vm108, %v1494, 0
    %v1615 = vsel %vm108, %v1495, 0
    %v1618 = vsel %vm108, %v1496, 0
    %v1621 = vsel %vm108, %v1497, 0
    %v1624 = vsel %vm108, %v1498, 0
    %v1627 = vsel %vm108, %v1499, 0
    %v1630 = vsel %vm108, %v1500, 0
    %v1633 = vsel %vm108, %v1501, 0
    %v1636 = vsel %vm108, %v1502, 0
    %v1639 = vsel %vm108, %v1503, 0
    %v1642 = vsel %vm108, %v1504, 0
    %v1645 = vsel %vm108, %v1505, 0
    %v1648 = vsel %vm108, %v1506, 0
    %v1651 = vsel %vm108, %v1507, 0
    %v1654 = vsel %vm108, %v1508, 0
    %v1657 = vsel %vm108, %v1509, 0
    %v1660 = vsel %vm108, %v1510, 0
    %v1663 = vsel %vm108, %v1511, 0
    %v1666 = vsel %vm108, %v1512, 0
    %v1669 = vsel %vm108, %v1513, 0
    %v1672 = vsel %vm108, %v1514, 0
    %v1675 = vsel %vm108, %v1515, 0
    %v1678 = vsel %vm108, %v1516, 0
    %v1681 = vsel %vm108, %v1517, 0
    %v1684 = vsel %vm108, %v1518, 0
    %v1687 = vsel %vm108, %v1519, 0
    %v1690 = vsel %vm108, %v1520, 0
    %v1693 = vsel %vm108, %v1521, 0
    %v1696 = vsel %vm108, %v1522, 0
    %v1699 = vsel %vm108, %v1523, 0
    %v1702 = vsel %vm108, %v1524, 0
    %v1705 = vsel %vm108, %v1525, 0
    %v1708 = vsel %vm108, %v1526, 0
    %v1711 = vsel %vm108, %v1527, 0
    %v1714 = vsel %vm108, %v1528, 0
    %v1717 = vsel %vm108, %v1529, 0
    %v1720 = vsel %vm108, %v1530, 0
    %v1723 = vsel %vm108, %v1531, 0
    %1725 = vmatprep.subr.mxu0 0.0
    %1726 = vmatpush1.msra.mxu0 %v1532
    %1727 = vmatprep.subr.mxu0 0.0
    %1728 = vmatpush1.msra.mxu0 0.0
    %1729 = vmatprep.subr.mxu0 0.0
    %1730 = vmatpush1.msra.mxu0 0.0
    %1731 = vmatprep.subr.mxu0 0.0
    %1732 = vmatpush1.msra.mxu0 0.0
    %1733 = vmatprep.subr.mxu0 0.0
    %1734 = vmatpush1.msra.mxu0 0.0
    %1735 = vmatprep.subr.mxu0 0.0
    %1736 = vmatpush1.msra.mxu0 0.0
    %1737 = vmatprep.subr.mxu0 0.0
    %1738 = vmatpush1.msra.mxu0 0.0
    %1739 = vmatprep.subr.mxu0 0.0
    %1740 = vmatpush1.msra.mxu0 0.0
    %1741 = vmatprep.subr.mxu0 0.0
    %1742 = vmatpush1.msra.mxu0 0.0
    %1743 = vmatprep.subr.mxu0 0.0
    %1744 = vmatpush1.msra.mxu0 0.0
    %1745 = vmatprep.subr.mxu0 0.0
    %1746 = vmatpush1.msra.mxu0 0.0
    %1747 = vmatprep.subr.mxu0 0.0
    %1748 = vmatpush1.msra.mxu0 0.0
    %1749 = vmatprep.subr.mxu0 0.0
    %1750 = vmatpush1.msra.mxu0 0.0
    %1751 = vmatprep.subr.mxu0 0.0
    %1752 = vmatpush1.msra.mxu0 0.0
    %1753 = vmatprep.subr.mxu0 0.0
    %1754 = vmatpush1.msra.mxu0 0.0
    %1755 = vmatprep.subr.mxu0 0.0
    %1756 = vmatpush1.msra.mxu0 0.0
    %1757 = vmatprep.subr.mxu0 0.0
    %1758 = vmatpush1.msra.mxu0 0.0
    %1759 = vmatprep.subr.mxu0 0.0
    %1760 = vmatpush1.msra.mxu0 0.0
    %1761 = vmatprep.subr.mxu0 0.0
    %1762 = vmatpush1.msra.mxu0 0.0
    %1763 = vmatprep.subr.mxu0 0.0
    %1764 = vmatpush1.msra.mxu0 0.0
    %1765 = vmatprep.subr.mxu0 0.0
    %1766 = vmatpush1.msra.mxu0 0.0
    %1767 = vmatprep.subr.mxu0 0.0
    %1768 = vmatpush1.msra.mxu0 0.0
    %1769 = vmatprep.subr.mxu0 0.0
    %1770 = vmatpush1.msra.mxu0 0.0
    %1771 = vmatprep.subr.mxu0 0.0
    %1772 = vmatpush1.msra.mxu0 0.0
    %1773 = vmatprep.subr.mxu0 0.0
    %1774 = vmatpush1.msra.mxu0 0.0
    %1775 = vmatprep.subr.mxu0 0.0
    %1776 = vmatpush1.msra.mxu0 0.0
    %1777 = vmatprep.subr.mxu0 0.0
    %1778 = vmatpush1.msra.mxu0 0.0
    %1779 = vmatprep.subr.mxu0 0.0
    %1780 = vmatpush1.msra.mxu0 0.0
    %1781 = vmatprep.subr.mxu0 0.0
    %1782 = vmatpush1.msra.mxu0 0.0
    %1783 = vmatprep.subr.mxu0 0.0
    %1784 = vmatpush1.msra.mxu0 0.0
    %1785 = vmatprep.subr.mxu0 0.0
    %1786 = vmatpush1.msra.mxu0 0.0
    %1787 = vmatprep.subr.mxu0 0.0
    %1788 = vmatpush1.msra.mxu0 0.0
    %1789 = vmatprep.mubr.f32.mxu0 0.0
    %1790 = vmatmul.mubr.f32.gmra.mrb[0].mxu0 %v1534
    %v1791 = vpop.f32.mrb[0].mxu0
    %v1792 = vadd.f32 0.0, %v1791
    %v1793 = vpop.f32.mrb[0].mxu0
    %1794 = vmatprep.mubr.f32.mxu0 0.0
    %1795 = vmatmul.mubr.f32.gmra.mrb[0].mxu0 %v1537
    %v1796 = vpop.f32.mrb[0].mxu0
    %v1797 = vadd.f32 0.0, %v1796
    %v1798 = vpop.f32.mrb[0].mxu0
    %1799 = vmatprep.mubr.f32.mxu0 0.0
    %1800 = vmatmul.mubr.f32.gmra.mrb[0].mxu0 %v1540
    %v1801 = vpop.f32.mrb[0].mxu0
    %v1802 = vadd.f32 0.0, %v1801
    %v1803 = vpop.f32.mrb[0].mxu0
    %1804 = vmatprep.mubr.f32.mxu0 0.0
    %1805 = vmatmul.mubr.f32.gmra.mrb[0].mxu0 %v1543
    %v1806 = vpop.f32.mrb[0].mxu0
    %v1807 = vadd.f32 0.0, %v1806
    %v1808 = vpop.f32.mrb[0].mxu0
    %1809 = vmatprep.mubr.f32.mxu0 0.0
    %1810 = vmatmul.mubr.f32.gmra.mrb[0].mxu0 %v1546
    %v1811 = vpop.f32.mrb[0].mxu0
    %v1812 = vadd.f32 0.0, %v1811
    %v1813 = vpop.f32.mrb[0].mxu0
    %1814 = vmatprep.mubr.f32.mxu0 0.0
    %1815 = vmatmul.mubr.f32.gmra.mrb[0].mxu0 %v1549
    %v1816 = vpop.f32.mrb[0].mxu0
    %v1817 = vadd.f32 0.0, %v1816
    %v1818 = vpop.f32.mrb[0].mxu0
    %1819 = vmatprep.mubr.f32.mxu0 0.0
    %1820 = vmatmul.mubr.f32.gmra.mrb[0].mxu0 %v1552
    %v1821 = vpop.f32.mrb[0].mxu0
    %v1822 = vadd.f32 0.0, %v1821
    %v1823 = vpop.f32.mrb[0].mxu0
    %1824 = vmatprep.mubr.f32.mxu0 0.0
    %1825 = vmatmul.mubr.f32.gmra.mrb[0].mxu0 %v1555
    %v1826 = vpop.f32.mrb[0].mxu0
    %v1827 = vadd.f32 0.0, %v1826
    %v1828 = vpop.f32.mrb[0].mxu0
    %1829 = vmatprep.mubr.f32.mxu0 0.0
    %1830 = vmatmul.mubr.f32.gmra.mrb[0].mxu0 %v1558
    %v1831 = vpop.f32.mrb[0].mxu0
    %v1832 = vadd.f32 0.0, %v1831
    %v1833 = vpop.f32.mrb[0].mxu0
    %1834 = vmatprep.mubr.f32.mxu0 0.0
    %1835 = vmatmul.mubr.f32.gmra.mrb[0].mxu0 %v1561
    %v1836 = vpop.f32.mrb[0].mxu0
    %v1837 = vadd.f32 0.0, %v1836
    %v1838 = vpop.f32.mrb[0].mxu0
    %1839 = vmatprep.mubr.f32.mxu0 0.0
    %1840 = vmatmul.mubr.f32.gmra.mrb[0].mxu0 %v1564
    %v1841 = vpop.f32.mrb[0].mxu0
    %v1842 = vadd.f32 0.0, %v1841
    %v1843 = vpop.f32.mrb[0].mxu0
    %1844 = vmatprep.mubr.f32.mxu0 0.0
    %1845 = vmatmul.mubr.f32.gmra.mrb[0].mxu0 %v1567
    %v1846 = vpop.f32.mrb[0].mxu0
    %v1847 = vadd.f32 0.0, %v1846
    %v1848 = vpop.f32.mrb[0].mxu0
    %1849 = vmatprep.mubr.f32.mxu0 0.0
    %1850 = vmatmul.mubr.f32.gmra.mrb[0].mxu0 %v1570
    %v1851 = vpop.f32.mrb[0].mxu0
    %v1852 = vadd.f32 0.0, %v1851
    %v1853 = vpop.f32.mrb[0].mxu0
    %1854 = vmatprep.mubr.f32.mxu0 0.0
    %1855 = vmatmul.mubr.f32.gmra.mrb[0].mxu0 %v1573
    %v1856 = vpop.f32.mrb[0].mxu0
    %v1857 = vadd.f32 0.0, %v1856
    %v1858 = vpop.f32.mrb[0].mxu0
    %1859 = vmatprep.mubr.f32.mxu0 0.0
    %1860 = vmatmul.mubr.f32.gmra.mrb[0].mxu0 %v1576
    %v1861 = vpop.f32.mrb[0].mxu0
    %v1862 = vadd.f32 0.0, %v1861
    %v1863 = vpop.f32.mrb[0].mxu0
    %1864 = vmatprep.mubr.f32.mxu0 0.0
    %1865 = vmatmul.mubr.f32.gmra.mrb[0].mxu0 %v1579
    %v1866 = vpop.f32.mrb[0].mxu0
    %v1867 = vadd.f32 0.0, %v1866
    %v1868 = vpop.f32.mrb[0].mxu0
    %1869 = vmatprep.mubr.f32.mxu0 0.0
    %1870 = vmatmul.mubr.f32.gmra.mrb[0].mxu0 %v1582
    %v1871 = vpop.f32.mrb[0].mxu0
    %v1872 = vadd.f32 0.0, %v1871
    %v1873 = vpop.f32.mrb[0].mxu0
    %1874 = vmatprep.mubr.f32.mxu0 0.0
    %1875 = vmatmul.mubr.f32.gmra.mrb[0].mxu0 %v1585
    %v1876 = vpop.f32.mrb[0].mxu0
    %v1877 = vadd.f32 0.0, %v1876
    %v1878 = vpop.f32.mrb[0].mxu0
    %1879 = vmatprep.mubr.f32.mxu0 0.0
    %1880 = vmatmul.mubr.f32.gmra.mrb[0].mxu0 %v1588
    %v1881 = vpop.f32.mrb[0].mxu0
    %v1882 = vadd.f32 0.0, %v1881
    %v1883 = vpop.f32.mrb[0].mxu0
    %1884 = vmatprep.mubr.f32.mxu0 0.0
    %1885 = vmatmul.mubr.f32.gmra.mrb[0].mxu0 %v1591
    %v1886 = vpop.f32.mrb[0].mxu0
    %v1887 = vadd.f32 0.0, %v1886
    %v1888 = vpop.f32.mrb[0].mxu0
    %1889 = vmatprep.mubr.f32.mxu0 0.0
    %1890 = vmatmul.mubr.f32.gmra.mrb[0].mxu0 %v1594
    %v1891 = vpop.f32.mrb[0].mxu0
    %v1892 = vadd.f32 0.0, %v1891
    %v1893 = vpop.f32.mrb[0].mxu0
    %1894 = vmatprep.mubr.f32.mxu0 0.0
    %1895 = vmatmul.mubr.f32.gmra.mrb[0].mxu0 %v1597
    %v1896 = vpop.f32.mrb[0].mxu0
    %v1897 = vadd.f32 0.0, %v1896
    %v1898 = vpop.f32.mrb[0].mxu0
    %1899 = vmatprep.mubr.f32.mxu0 0.0
    %1900 = vmatmul.mubr.f32.gmra.mrb[0].mxu0 %v1600
    %v1901 = vpop.f32.mrb[0].mxu0
    %v1902 = vadd.f32 0.0, %v1901
    %v1903 = vpop.f32.mrb[0].mxu0
    %1904 = vmatprep.mubr.f32.mxu0 0.0
    %1905 = vmatmul.mubr.f32.gmra.mrb[0].mxu0 %v1603
    %v1906 = vpop.f32.mrb[0].mxu0
    %v1907 = vadd.f32 0.0, %v1906
    %v1908 = vpop.f32.mrb[0].mxu0
    %1909 = vmatprep.mubr.f32.mxu0 0.0
    %1910 = vmatmul.mubr.f32.gmra.mrb[0].mxu0 %v1606
    %v1911 = vpop.f32.mrb[0].mxu0
    %v1912 = vadd.f32 0.0, %v1911
    %v1913 = vpop.f32.mrb[0].mxu0
    %1914 = vmatprep.mubr.f32.mxu0 0.0
    %1915 = vmatmul.mubr.f32.gmra.mrb[0].mxu0 %v1609
    %v1916 = vpop.f32.mrb[0].mxu0
    %v1917 = vadd.f32 0.0, %v1916
    %v1918 = vpop.f32.mrb[0].mxu0
    %1919 = vmatprep.mubr.f32.mxu0 0.0
    %1920 = vmatmul.mubr.f32.gmra.mrb[0].mxu0 %v1612
    %v1921 = vpop.f32.mrb[0].mxu0
    %v1922 = vadd.f32 0.0, %v1921
    %v1923 = vpop.f32.mrb[0].mxu0
    %1924 = vmatprep.mubr.f32.mxu0 0.0
    %1925 = vmatmul.mubr.f32.gmra.mrb[0].mxu0 %v1615
    %v1926 = vpop.f32.mrb[0].mxu0
    %v1927 = vadd.f32 0.0, %v1926
    %v1928 = vpop.f32.mrb[0].mxu0
    %1929 = vmatprep.mubr.f32.mxu0 0.0
    %1930 = vmatmul.mubr.f32.gmra.mrb[0].mxu0 %v1618
    %v1931 = vpop.f32.mrb[0].mxu0
    %v1932 = vadd.f32 0.0, %v1931
    %v1933 = vpop.f32.mrb[0].mxu0
    %1934 = vmatprep.mubr.f32.mxu0 0.0
    %1935 = vmatmul.mubr.f32.gmra.mrb[0].mxu0 %v1621
    %v1936 = vpop.f32.mrb[0].mxu0
    %v1937 = vadd.f32 0.0, %v1936
    %v1938 = vpop.f32.mrb[0].mxu0
    %1939 = vmatprep.mubr.f32.mxu0 0.0
    %1940 = vmatmul.mubr.f32.gmra.mrb[0].mxu0 %v1624
    %v1941 = vpop.f32.mrb[0].mxu0
    %v1942 = vadd.f32 0.0, %v1941
    %v1943 = vpop.f32.mrb[0].mxu0
    %1944 = vmatprep.mubr.f32.mxu0 0.0
    %1945 = vmatmul.mubr.f32.gmra.mrb[0].mxu0 %v1627
    %v1946 = vpop.f32.mrb[0].mxu0
    %v1947 = vadd.f32 0.0, %v1946
    %v1948 = vpop.f32.mrb[0].mxu0
    %1949 = vmatprep.mubr.f32.mxu0 0.0
    %1950 = vmatmul.mubr.f32.gmra.mrb[0].mxu0 %v1630
    %v1951 = vpop.f32.mrb[0].mxu0
    %v1952 = vadd.f32 0.0, %v1951
    %v1953 = vpop.f32.mrb[0].mxu0
    %1954 = vmatprep.mubr.f32.mxu0 0.0
    %1955 = vmatmul.mubr.f32.gmra.mrb[0].mxu0 %v1633
    %v1956 = vpop.f32.mrb[0].mxu0
    %v1957 = vadd.f32 0.0, %v1956
    %v1958 = vpop.f32.mrb[0].mxu0
    %1959 = vmatprep.mubr.f32.mxu0 0.0
    %1960 = vmatmul.mubr.f32.gmra.mrb[0].mxu0 %v1636
    %v1961 = vpop.f32.mrb[0].mxu0
    %v1962 = vadd.f32 0.0, %v1961
    %v1963 = vpop.f32.mrb[0].mxu0
    %1964 = vmatprep.mubr.f32.mxu0 0.0
    %1965 = vmatmul.mubr.f32.gmra.mrb[0].mxu0 %v1639
    %v1966 = vpop.f32.mrb[0].mxu0
    %v1967 = vadd.f32 0.0, %v1966
    %v1968 = vpop.f32.mrb[0].mxu0
    %1969 = vmatprep.mubr.f32.mxu0 0.0
    %1970 = vmatmul.mubr.f32.gmra.mrb[0].mxu0 %v1642
    %v1971 = vpop.f32.mrb[0].mxu0
    %v1972 = vadd.f32 0.0, %v1971
    %v1973 = vpop.f32.mrb[0].mxu0
    %1974 = vmatprep.mubr.f32.mxu0 0.0
    %1975 = vmatmul.mubr.f32.gmra.mrb[0].mxu0 %v1645
    %v1976 = vpop.f32.mrb[0].mxu0
    %v1977 = vadd.f32 0.0, %v1976
    %v1978 = vpop.f32.mrb[0].mxu0
    %1979 = vmatprep.mubr.f32.mxu0 0.0
    %1980 = vmatmul.mubr.f32.gmra.mrb[0].mxu0 %v1648
    %v1981 = vpop.f32.mrb[0].mxu0
    %v1982 = vadd.f32 0.0, %v1981
    %v1983 = vpop.f32.mrb[0].mxu0
    %1984 = vmatprep.mubr.f32.mxu0 0.0
    %1985 = vmatmul.mubr.f32.gmra.mrb[0].mxu0 %v1651
    %v1986 = vpop.f32.mrb[0].mxu0
    %v1987 = vadd.f32 0.0, %v1986
    %v1988 = vpop.f32.mrb[0].mxu0
    %1989 = vmatprep.mubr.f32.mxu0 0.0
    %1990 = vmatmul.mubr.f32.gmra.mrb[0].mxu0 %v1654
    %v1991 = vpop.f32.mrb[0].mxu0
    %v1992 = vadd.f32 0.0, %v1991
    %v1993 = vpop.f32.mrb[0].mxu0
    %1994 = vmatprep.mubr.f32.mxu0 0.0
    %1995 = vmatmul.mubr.f32.gmra.mrb[0].mxu0 %v1657
    %v1996 = vpop.f32.mrb[0].mxu0
    %v1997 = vadd.f32 0.0, %v1996
    %v1998 = vpop.f32.mrb[0].mxu0
    %1999 = vmatprep.mubr.f32.mxu0 0.0
    %2000 = vmatmul.mubr.f32.gmra.mrb[0].mxu0 %v1660
    %v2001 = vpop.f32.mrb[0].mxu0
    %v2002 = vadd.f32 0.0, %v2001
    %v2003 = vpop.f32.mrb[0].mxu0
    %2004 = vmatprep.mubr.f32.mxu0 0.0
    %2005 = vmatmul.mubr.f32.gmra.mrb[0].mxu0 %v1663
    %v2006 = vpop.f32.mrb[0].mxu0
    %v2007 = vadd.f32 0.0, %v2006
    %v2008 = vpop.f32.mrb[0].mxu0
    %2009 = vmatprep.mubr.f32.mxu0 0.0
    %2010 = vmatmul.mubr.f32.gmra.mrb[0].mxu0 %v1666
    %v2011 = vpop.f32.mrb[0].mxu0
    %v2012 = vadd.f32 0.0, %v2011
    %v2013 = vpop.f32.mrb[0].mxu0
    %2014 = vmatprep.mubr.f32.mxu0 0.0
    %2015 = vmatmul.mubr.f32.gmra.mrb[0].mxu0 %v1669
    %v2016 = vpop.f32.mrb[0].mxu0
    %v2017 = vadd.f32 0.0, %v2016
    %v2018 = vpop.f32.mrb[0].mxu0
    %2019 = vmatprep.mubr.f32.mxu0 0.0
    %2020 = vmatmul.mubr.f32.gmra.mrb[0].mxu0 %v1672
    %v2021 = vpop.f32.mrb[0].mxu0
    %v2022 = vadd.f32 0.0, %v2021
    %v2023 = vpop.f32.mrb[0].mxu0
    %2024 = vmatprep.mubr.f32.mxu0 0.0
    %2025 = vmatmul.mubr.f32.gmra.mrb[0].mxu0 %v1675
    %v2026 = vpop.f32.mrb[0].mxu0
    %v2027 = vadd.f32 0.0, %v2026
    %v2028 = vpop.f32.mrb[0].mxu0
    %2029 = vmatprep.mubr.f32.mxu0 0.0
    %2030 = vmatmul.mubr.f32.gmra.mrb[0].mxu0 %v1678
    %v2031 = vpop.f32.mrb[0].mxu0
    %v2032 = vadd.f32 0.0, %v2031
    %v2033 = vpop.f32.mrb[0].mxu0
    %2034 = vmatprep.mubr.f32.mxu0 0.0
    %2035 = vmatmul.mubr.f32.gmra.mrb[0].mxu0 %v1681
    %v2036 = vpop.f32.mrb[0].mxu0
    %v2037 = vadd.f32 0.0, %v2036
    %v2038 = vpop.f32.mrb[0].mxu0
    %2039 = vmatprep.mubr.f32.mxu0 0.0
    %2040 = vmatmul.mubr.f32.gmra.mrb[0].mxu0 %v1684
    %v2041 = vpop.f32.mrb[0].mxu0
    %v2042 = vadd.f32 0.0, %v2041
    %v2043 = vpop.f32.mrb[0].mxu0
    %2044 = vmatprep.mubr.f32.mxu0 0.0
    %2045 = vmatmul.mubr.f32.gmra.mrb[0].mxu0 %v1687
    %v2046 = vpop.f32.mrb[0].mxu0
    %v2047 = vadd.f32 0.0, %v2046
    %v2048 = vpop.f32.mrb[0].mxu0
    %2049 = vmatprep.mubr.f32.mxu0 0.0
    %2050 = vmatmul.mubr.f32.gmra.mrb[0].mxu0 %v1690
    %v2051 = vpop.f32.mrb[0].mxu0
    %v2052 = vadd.f32 0.0, %v2051
    %v2053 = vpop.f32.mrb[0].mxu0
    %2054 = vmatprep.mubr.f32.mxu0 0.0
    %2055 = vmatmul.mubr.f32.gmra.mrb[0].mxu0 %v1693
    %v2056 = vpop.f32.mrb[0].mxu0
    %v2057 = vadd.f32 0.0, %v2056
    %v2058 = vpop.f32.mrb[0].mxu0
    %2059 = vmatprep.mubr.f32.mxu0 0.0
    %2060 = vmatmul.mubr.f32.gmra.mrb[0].mxu0 %v1696
    %v2061 = vpop.f32.mrb[0].mxu0
    %v2062 = vadd.f32 0.0, %v2061
    %v2063 = vpop.f32.mrb[0].mxu0
    %2064 = vmatprep.mubr.f32.mxu0 0.0
    %2065 = vmatmul.mubr.f32.gmra.mrb[0].mxu0 %v1699
    %v2066 = vpop.f32.mrb[0].mxu0
    %v2067 = vadd.f32 0.0, %v2066
    %v2068 = vpop.f32.mrb[0].mxu0
    %2069 = vmatprep.mubr.f32.mxu0 0.0
    %2070 = vmatmul.mubr.f32.gmra.mrb[0].mxu0 %v1702
    %v2071 = vpop.f32.mrb[0].mxu0
    %v2072 = vadd.f32 0.0, %v2071
    %v2073 = vpop.f32.mrb[0].mxu0
    %2074 = vmatprep.mubr.f32.mxu0 0.0
    %2075 = vmatmul.mubr.f32.gmra.mrb[0].mxu0 %v1705
    %v2076 = vpop.f32.mrb[0].mxu0
    %v2077 = vadd.f32 0.0, %v2076
    %v2078 = vpop.f32.mrb[0].mxu0
    %2079 = vmatprep.mubr.f32.mxu0 0.0
    %2080 = vmatmul.mubr.f32.gmra.mrb[0].mxu0 %v1708
    %v2081 = vpop.f32.mrb[0].mxu0
    %v2082 = vadd.f32 0.0, %v2081
    %v2083 = vpop.f32.mrb[0].mxu0
    %2084 = vmatprep.mubr.f32.mxu0 0.0
    %2085 = vmatmul.mubr.f32.gmra.mrb[0].mxu0 %v1711
    %v2086 = vpop.f32.mrb[0].mxu0
    %v2087 = vadd.f32 0.0, %v2086
    %v2088 = vpop.f32.mrb[0].mxu0
    %2089 = vmatprep.mubr.f32.mxu0 0.0
    %2090 = vmatmul.mubr.f32.gmra.mrb[0].mxu0 %v1714
    %v2091 = vpop.f32.mrb[0].mxu0
    %v2092 = vadd.f32 0.0, %v2091
    %v2093 = vpop.f32.mrb[0].mxu0
    %2094 = vmatprep.mubr.f32.mxu0 0.0
    %2095 = vmatmul.mubr.f32.gmra.mrb[0].mxu0 %v1717
    %v2096 = vpop.f32.mrb[0].mxu0
    %v2097 = vadd.f32 0.0, %v2096
    %v2098 = vpop.f32.mrb[0].mxu0
    %2099 = vmatprep.mubr.f32.mxu0 0.0
    %2100 = vmatmul.mubr.f32.gmra.mrb[0].mxu0 %v1720
    %v2101 = vpop.f32.mrb[0].mxu0
    %v2102 = vadd.f32 0.0, %v2101
    %v2103 = vpop.f32.mrb[0].mxu0
    %2104 = vmatprep.mubr.f32.mxu0 0.0
    %2105 = vmatmul.mubr.f32.gmra.mrb[0].mxu0 %v1723
    %v2106 = vpop.f32.mrb[0].mxu0
    %v2107 = vadd.f32 0.0, %v2106
    %v2108 = vpop.f32.mrb[0].mxu0
    %2109 = vdwg.mxu0
    %v2110 = vmul.f32 %v1792, %v1792
    %v2111 = vmul.f32 %v1797, %v1797
    %v2112 = vmul.f32 %v1802, %v1802
    %v2113 = vmul.f32 %v1807, %v1807
    %v2114 = vmul.f32 %v1812, %v1812
    %v2115 = vmul.f32 %v1817, %v1817
    %v2116 = vmul.f32 %v1822, %v1822
    %v2117 = vmul.f32 %v1827, %v1827
    %v2118 = vmul.f32 %v1832, %v1832
    %v2119 = vmul.f32 %v1837, %v1837
    %v2120 = vmul.f32 %v1842, %v1842
    %v2121 = vmul.f32 %v1847, %v1847
    %v2122 = vmul.f32 %v1852, %v1852
    %v2123 = vmul.f32 %v1857, %v1857
    %v2124 = vmul.f32 %v1862, %v1862
    %v2125 = vmul.f32 %v1867, %v1867
    %v2126 = vmul.f32 %v1872, %v1872
    %v2127 = vmul.f32 %v1877, %v1877
    %v2128 = vmul.f32 %v1882, %v1882
    %v2129 = vmul.f32 %v1887, %v1887
    %v2130 = vmul.f32 %v1892, %v1892
    %v2131 = vmul.f32 %v1897, %v1897
    %v2132 = vmul.f32 %v1902, %v1902
    %v2133 = vmul.f32 %v1907, %v1907
    %v2134 = vmul.f32 %v1912, %v1912
    %v2135 = vmul.f32 %v1917, %v1917
    %v2136 = vmul.f32 %v1922, %v1922
    %v2137 = vmul.f32 %v1927, %v1927
    %v2138 = vmul.f32 %v1932, %v1932
    %v2139 = vmul.f32 %v1937, %v1937
    %v2140 = vmul.f32 %v1942, %v1942
    %v2141 = vmul.f32 %v1947, %v1947
    %v2142 = vmul.f32 %v1952, %v1952
    %v2143 = vmul.f32 %v1957, %v1957
    %v2144 = vmul.f32 %v1962, %v1962
    %v2145 = vmul.f32 %v1967, %v1967
    %v2146 = vmul.f32 %v1972, %v1972
    %v2147 = vmul.f32 %v1977, %v1977
    %v2148 = vmul.f32 %v1982, %v1982
    %v2149 = vmul.f32 %v1987, %v1987
    %v2150 = vmul.f32 %v1992, %v1992
    %v2151 = vmul.f32 %v1997, %v1997
    %v2152 = vmul.f32 %v2002, %v2002
    %v2153 = vmul.f32 %v2007, %v2007
    %v2154 = vmul.f32 %v2012, %v2012
    %v2155 = vmul.f32 %v2017, %v2017
    %v2156 = vmul.f32 %v2022, %v2022
    %v2157 = vmul.f32 %v2027, %v2027
    %v2158 = vmul.f32 %v2032, %v2032
    %v2159 = vmul.f32 %v2037, %v2037
    %v2160 = vmul.f32 %v2042, %v2042
    %v2161 = vmul.f32 %v2047, %v2047
    %v2162 = vmul.f32 %v2052, %v2052
    %v2163 = vmul.f32 %v2057, %v2057
    %v2164 = vmul.f32 %v2062, %v2062
    %v2165 = vmul.f32 %v2067, %v2067
    %v2166 = vmul.f32 %v2072, %v2072
    %v2167 = vmul.f32 %v2077, %v2077
    %v2168 = vmul.f32 %v2082, %v2082
    %v2169 = vmul.f32 %v2087, %v2087
    %v2170 = vmul.f32 %v2092, %v2092
    %v2171 = vmul.f32 %v2097, %v2097
    %v2172 = vmul.f32 %v2102, %v2102
    %v2173 = vmul.f32 %v2107, %v2107
    %v2174 = vld [vmem:[%s4] sm:$0xff]
    %v2175 = vld [vmem:[%s4 + $0x8] sm:$0xff]
    %v2176 = vld [vmem:[%s4 + $0x10] sm:$0xff]
    %v2177 = vld [vmem:[%s4 + $0x18] sm:$0xff]
    %v2178 = vld [vmem:[%s4 + $0x20] sm:$0xff]
    %v2179 = vld [vmem:[%s4 + $0x28] sm:$0xff]
    %v2180 = vld [vmem:[%s4 + $0x30] sm:$0xff]
    %v2181 = vld [vmem:[%s4 + $0x38] sm:$0xff]
    %v2182 = vld [vmem:[%s4 + $0x40] sm:$0xff]
    %v2183 = vld [vmem:[%s4 + $0x48] sm:$0xff]
    %v2184 = vld [vmem:[%s4 + $0x50] sm:$0xff]
    %v2185 = vld [vmem:[%s4 + $0x58] sm:$0xff]
    %v2186 = vld [vmem:[%s4 + $0x60] sm:$0xff]
    %v2187 = vld [vmem:[%s4 + $0x68] sm:$0xff]
    %v2188 = vld [vmem:[%s4 + $0x70] sm:$0xff]
    %v2189 = vld [vmem:[%s4 + $0x78] sm:$0xff]
    %2190 = vmatprep.subr.mxu0 0.0
    %2191 = vmatpush1.msra.mxu0 %v2174
    %2192 = vmatprep.subr.mxu0 0.0
    %2193 = vmatpush1.msra.mxu0 %v2175
    %2194 = vmatprep.subr.mxu0 0.0
    %2195 = vmatpush1.msra.mxu0 %v2176
    %2196 = vmatprep.subr.mxu0 0.0
    %2197 = vmatpush1.msra.mxu0 %v2177
    %2198 = vmatprep.subr.mxu0 0.0
    %2199 = vmatpush1.msra.mxu0 %v2178
    %2200 = vmatprep.subr.mxu0 0.0
    %2201 = vmatpush1.msra.mxu0 %v2179
    %2202 = vmatprep.subr.mxu0 0.0
    %2203 = vmatpush1.msra.mxu0 %v2180
    %2204 = vmatprep.subr.mxu0 0.0
    %2205 = vmatpush1.msra.mxu0 %v2181
    %2206 = vmatprep.subr.mxu0 0.0
    %2207 = vmatpush1.msra.mxu0 %v2182
    %2208 = vmatprep.subr.mxu0 0.0
    %2209 = vmatpush1.msra.mxu0 %v2183
    %2210 = vmatprep.subr.mxu0 0.0
    %2211 = vmatpush1.msra.mxu0 %v2184
    %2212 = vmatprep.subr.mxu0 0.0
    %2213 = vmatpush1.msra.mxu0 %v2185
    %2214 = vmatprep.subr.mxu0 0.0
    %2215 = vmatpush1.msra.mxu0 %v2186
    %2216 = vmatprep.subr.mxu0 0.0
    %2217 = vmatpush1.msra.mxu0 %v2187
    %2218 = vmatprep.subr.mxu0 0.0
    %2219 = vmatpush1.msra.mxu0 %v2188
    %2220 = vmatprep.subr.mxu0 0.0
    %2221 = vmatpush1.msra.mxu0 %v2189
    %2222 = vmatprep.subr.mxu0 0.0
    %2223 = vmatpush1.msra.mxu0 0.0
    %2224 = vmatprep.subr.mxu0 0.0
    %2225 = vmatpush1.msra.mxu0 0.0
    %2226 = vmatprep.subr.mxu0 0.0
    %2227 = vmatpush1.msra.mxu0 0.0
    %2228 = vmatprep.subr.mxu0 0.0
    %2229 = vmatpush1.msra.mxu0 0.0
    %2230 = vmatprep.subr.mxu0 0.0
    %2231 = vmatpush1.msra.mxu0 0.0
    %2232 = vmatprep.subr.mxu0 0.0
    %2233 = vmatpush1.msra.mxu0 0.0
    %2234 = vmatprep.subr.mxu0 0.0
    %2235 = vmatpush1.msra.mxu0 0.0
    %2236 = vmatprep.subr.mxu0 0.0
    %2237 = vmatpush1.msra.mxu0 0.0
    %2238 = vmatprep.subr.mxu0 0.0
    %2239 = vmatpush1.msra.mxu0 0.0
    %2240 = vmatprep.subr.mxu0 0.0
    %2241 = vmatpush1.msra.mxu0 0.0
    %2242 = vmatprep.subr.mxu0 0.0
    %2243 = vmatpush1.msra.mxu0 0.0
    %2244 = vmatprep.subr.mxu0 0.0
    %2245 = vmatpush1.msra.mxu0 0.0
    %2246 = vmatprep.subr.mxu0 0.0
    %2247 = vmatpush1.msra.mxu0 0.0
    %2248 = vmatprep.subr.mxu0 0.0
    %2249 = vmatpush1.msra.mxu0 0.0
    %2250 = vmatprep.subr.mxu0 0.0
    %2251 = vmatpush1.msra.mxu0 0.0
    %2252 = vmatprep.subr.mxu0 0.0
    %2253 = vmatpush1.msra.mxu0 0.0
    %2254 = vmatprep.mubr.f32.mxu0 0.0
    %2255 = vmatmul.mubr.f32.gmra.mrb[0].mxu0 %v2110
    %v2256 = vpop.f32.mrb[0].mxu0
    %v2257 = vadd.f32 0.0, %v2256
    %v2258 = vpop.f32.mrb[0].mxu0
    %2259 = vmatprep.mubr.f32.mxu0 0.0
    %2260 = vmatmul.mubr.f32.gmra.mrb[0].mxu0 %v2111
    %v2261 = vpop.f32.mrb[0].mxu0
    %v2262 = vadd.f32 0.0, %v2261
    %v2263 = vpop.f32.mrb[0].mxu0
    %2264 = vmatprep.mubr.f32.mxu0 0.0
    %2265 = vmatmul.mubr.f32.gmra.mrb[0].mxu0 %v2112
    %v2266 = vpop.f32.mrb[0].mxu0
    %v2267 = vadd.f32 0.0, %v2266
    %v2268 = vpop.f32.mrb[0].mxu0
    %2269 = vmatprep.mubr.f32.mxu0 0.0
    %2270 = vmatmul.mubr.f32.gmra.mrb[0].mxu0 %v2113
    %v2271 = vpop.f32.mrb[0].mxu0
    %v2272 = vadd.f32 0.0, %v2271
    %v2273 = vpop.f32.mrb[0].mxu0
    %2274 = vmatprep.mubr.f32.mxu0 0.0
    %2275 = vmatmul.mubr.f32.gmra.mrb[0].mxu0 %v2114
    %v2276 = vpop.f32.mrb[0].mxu0
    %v2277 = vadd.f32 0.0, %v2276
    %v2278 = vpop.f32.mrb[0].mxu0
    %2279 = vmatprep.mubr.f32.mxu0 0.0
    %2280 = vmatmul.mubr.f32.gmra.mrb[0].mxu0 %v2115
    %v2281 = vpop.f32.mrb[0].mxu0
    %v2282 = vadd.f32 0.0, %v2281
    %v2283 = vpop.f32.mrb[0].mxu0
    %2284 = vmatprep.mubr.f32.mxu0 0.0
    %2285 = vmatmul.mubr.f32.gmra.mrb[0].mxu0 %v2116
    %v2286 = vpop.f32.mrb[0].mxu0
    %v2287 = vadd.f32 0.0, %v2286
    %v2288 = vpop.f32.mrb[0].mxu0
    %2289 = vmatprep.mubr.f32.mxu0 0.0
    %2290 = vmatmul.mubr.f32.gmra.mrb[0].mxu0 %v2117
    %v2291 = vpop.f32.mrb[0].mxu0
    %v2292 = vadd.f32 0.0, %v2291
    %v2293 = vpop.f32.mrb[0].mxu0
    %2294 = vmatprep.mubr.f32.mxu0 0.0
    %2295 = vmatmul.mubr.f32.gmra.mrb[0].mxu0 %v2118
    %v2296 = vpop.f32.mrb[0].mxu0
    %v2297 = vadd.f32 0.0, %v2296
    %v2298 = vpop.f32.mrb[0].mxu0
    %2299 = vmatprep.mubr.f32.mxu0 0.0
    %2300 = vmatmul.mubr.f32.gmra.mrb[0].mxu0 %v2119
    %v2301 = vpop.f32.mrb[0].mxu0
    %v2302 = vadd.f32 0.0, %v2301
    %v2303 = vpop.f32.mrb[0].mxu0
    %2304 = vmatprep.mubr.f32.mxu0 0.0
    %2305 = vmatmul.mubr.f32.gmra.mrb[0].mxu0 %v2120
    %v2306 = vpop.f32.mrb[0].mxu0
    %v2307 = vadd.f32 0.0, %v2306
    %v2308 = vpop.f32.mrb[0].mxu0
    %2309 = vmatprep.mubr.f32.mxu0 0.0
    %2310 = vmatmul.mubr.f32.gmra.mrb[0].mxu0 %v2121
    %v2311 = vpop.f32.mrb[0].mxu0
    %v2312 = vadd.f32 0.0, %v2311
    %v2313 = vpop.f32.mrb[0].mxu0
    %2314 = vmatprep.mubr.f32.mxu0 0.0
    %2315 = vmatmul.mubr.f32.gmra.mrb[0].mxu0 %v2122
    %v2316 = vpop.f32.mrb[0].mxu0
    %v2317 = vadd.f32 0.0, %v2316
    %v2318 = vpop.f32.mrb[0].mxu0
    %2319 = vmatprep.mubr.f32.mxu0 0.0
    %2320 = vmatmul.mubr.f32.gmra.mrb[0].mxu0 %v2123
    %v2321 = vpop.f32.mrb[0].mxu0
    %v2322 = vadd.f32 0.0, %v2321
    %v2323 = vpop.f32.mrb[0].mxu0
    %2324 = vmatprep.mubr.f32.mxu0 0.0
    %2325 = vmatmul.mubr.f32.gmra.mrb[0].mxu0 %v2124
    %v2326 = vpop.f32.mrb[0].mxu0
    %v2327 = vadd.f32 0.0, %v2326
    %v2328 = vpop.f32.mrb[0].mxu0
    %2329 = vmatprep.mubr.f32.mxu0 0.0
    %2330 = vmatmul.mubr.f32.gmra.mrb[0].mxu0 %v2125
    %v2331 = vpop.f32.mrb[0].mxu0
    %v2332 = vadd.f32 0.0, %v2331
    %v2333 = vpop.f32.mrb[0].mxu0
    %2334 = vmatprep.mubr.f32.mxu0 0.0
    %2335 = vmatmul.mubr.f32.gmra.mrb[0].mxu0 %v2126
    %v2336 = vpop.f32.mrb[0].mxu0
    %v2337 = vadd.f32 0.0, %v2336
    %v2338 = vpop.f32.mrb[0].mxu0
    %2339 = vmatprep.mubr.f32.mxu0 0.0
    %2340 = vmatmul.mubr.f32.gmra.mrb[0].mxu0 %v2127
    %v2341 = vpop.f32.mrb[0].mxu0
    %v2342 = vadd.f32 0.0, %v2341
    %v2343 = vpop.f32.mrb[0].mxu0
    %2344 = vmatprep.mubr.f32.mxu0 0.0
    %2345 = vmatmul.mubr.f32.gmra.mrb[0].mxu0 %v2128
    %v2346 = vpop.f32.mrb[0].mxu0
    %v2347 = vadd.f32 0.0, %v2346
    %v2348 = vpop.f32.mrb[0].mxu0
    %2349 = vmatprep.mubr.f32.mxu0 0.0
    %2350 = vmatmul.mubr.f32.gmra.mrb[0].mxu0 %v2129
    %v2351 = vpop.f32.mrb[0].mxu0
    %v2352 = vadd.f32 0.0, %v2351
    %v2353 = vpop.f32.mrb[0].mxu0
    %2354 = vmatprep.mubr.f32.mxu0 0.0
    %2355 = vmatmul.mubr.f32.gmra.mrb[0].mxu0 %v2130
    %v2356 = vpop.f32.mrb[0].mxu0
    %v2357 = vadd.f32 0.0, %v2356
    %v2358 = vpop.f32.mrb[0].mxu0
    %2359 = vmatprep.mubr.f32.mxu0 0.0
    %2360 = vmatmul.mubr.f32.gmra.mrb[0].mxu0 %v2131
    %v2361 = vpop.f32.mrb[0].mxu0
    %v2362 = vadd.f32 0.0, %v2361
    %v2363 = vpop.f32.mrb[0].mxu0
    %2364 = vmatprep.mubr.f32.mxu0 0.0
    %2365 = vmatmul.mubr.f32.gmra.mrb[0].mxu0 %v2132
    %v2366 = vpop.f32.mrb[0].mxu0
    %v2367 = vadd.f32 0.0, %v2366
    %v2368 = vpop.f32.mrb[0].mxu0
    %2369 = vmatprep.mubr.f32.mxu0 0.0
    %2370 = vmatmul.mubr.f32.gmra.mrb[0].mxu0 %v2133
    %v2371 = vpop.f32.mrb[0].mxu0
    %v2372 = vadd.f32 0.0, %v2371
    %v2373 = vpop.f32.mrb[0].mxu0
    %2374 = vmatprep.mubr.f32.mxu0 0.0
    %2375 = vmatmul.mubr.f32.gmra.mrb[0].mxu0 %v2134
    %v2376 = vpop.f32.mrb[0].mxu0
    %v2377 = vadd.f32 0.0, %v2376
    %v2378 = vpop.f32.mrb[0].mxu0
    %2379 = vmatprep.mubr.f32.mxu0 0.0
    %2380 = vmatmul.mubr.f32.gmra.mrb[0].mxu0 %v2135
    %v2381 = vpop.f32.mrb[0].mxu0
    %v2382 = vadd.f32 0.0, %v2381
    %v2383 = vpop.f32.mrb[0].mxu0
    %2384 = vmatprep.mubr.f32.mxu0 0.0
    %2385 = vmatmul.mubr.f32.gmra.mrb[0].mxu0 %v2136
    %v2386 = vpop.f32.mrb[0].mxu0
    %v2387 = vadd.f32 0.0, %v2386
    %v2388 = vpop.f32.mrb[0].mxu0
    %2389 = vmatprep.mubr.f32.mxu0 0.0
    %2390 = vmatmul.mubr.f32.gmra.mrb[0].mxu0 %v2137
    %v2391 = vpop.f32.mrb[0].mxu0
    %v2392 = vadd.f32 0.0, %v2391
    %v2393 = vpop.f32.mrb[0].mxu0
    %2394 = vmatprep.mubr.f32.mxu0 0.0
    %2395 = vmatmul.mubr.f32.gmra.mrb[0].mxu0 %v2138
    %v2396 = vpop.f32.mrb[0].mxu0
    %v2397 = vadd.f32 0.0, %v2396
    %v2398 = vpop.f32.mrb[0].mxu0
    %2399 = vmatprep.mubr.f32.mxu0 0.0
    %2400 = vmatmul.mubr.f32.gmra.mrb[0].mxu0 %v2139
    %v2401 = vpop.f32.mrb[0].mxu0
    %v2402 = vadd.f32 0.0, %v2401
    %v2403 = vpop.f32.mrb[0].mxu0
    %2404 = vmatprep.mubr.f32.mxu0 0.0
    %2405 = vmatmul.mubr.f32.gmra.mrb[0].mxu0 %v2140
    %v2406 = vpop.f32.mrb[0].mxu0
    %v2407 = vadd.f32 0.0, %v2406
    %v2408 = vpop.f32.mrb[0].mxu0
    %2409 = vmatprep.mubr.f32.mxu0 0.0
    %2410 = vmatmul.mubr.f32.gmra.mrb[0].mxu0 %v2141
    %v2411 = vpop.f32.mrb[0].mxu0
    %v2412 = vadd.f32 0.0, %v2411
    %v2413 = vpop.f32.mrb[0].mxu0
    %2414 = vmatprep.mubr.f32.mxu0 0.0
    %2415 = vmatmul.mubr.f32.gmra.mrb[0].mxu0 %v2142
    %v2416 = vpop.f32.mrb[0].mxu0
    %v2417 = vadd.f32 0.0, %v2416
    %v2418 = vpop.f32.mrb[0].mxu0
    %2419 = vmatprep.mubr.f32.mxu0 0.0
    %2420 = vmatmul.mubr.f32.gmra.mrb[0].mxu0 %v2143
    %v2421 = vpop.f32.mrb[0].mxu0
    %v2422 = vadd.f32 0.0, %v2421
    %v2423 = vpop.f32.mrb[0].mxu0
    %2424 = vmatprep.mubr.f32.mxu0 0.0
    %2425 = vmatmul.mubr.f32.gmra.mrb[0].mxu0 %v2144
    %v2426 = vpop.f32.mrb[0].mxu0
    %v2427 = vadd.f32 0.0, %v2426
    %v2428 = vpop.f32.mrb[0].mxu0
    %2429 = vmatprep.mubr.f32.mxu0 0.0
    %2430 = vmatmul.mubr.f32.gmra.mrb[0].mxu0 %v2145
    %v2431 = vpop.f32.mrb[0].mxu0
    %v2432 = vadd.f32 0.0, %v2431
    %v2433 = vpop.f32.mrb[0].mxu0
    %2434 = vmatprep.mubr.f32.mxu0 0.0
    %2435 = vmatmul.mubr.f32.gmra.mrb[0].mxu0 %v2146
    %v2436 = vpop.f32.mrb[0].mxu0
    %v2437 = vadd.f32 0.0, %v2436
    %v2438 = vpop.f32.mrb[0].mxu0
    %2439 = vmatprep.mubr.f32.mxu0 0.0
    %2440 = vmatmul.mubr.f32.gmra.mrb[0].mxu0 %v2147
    %v2441 = vpop.f32.mrb[0].mxu0
    %v2442 = vadd.f32 0.0, %v2441
    %v2443 = vpop.f32.mrb[0].mxu0
    %2444 = vmatprep.mubr.f32.mxu0 0.0
    %2445 = vmatmul.mubr.f32.gmra.mrb[0].mxu0 %v2148
    %v2446 = vpop.f32.mrb[0].mxu0
    %v2447 = vadd.f32 0.0, %v2446
    %v2448 = vpop.f32.mrb[0].mxu0
    %2449 = vmatprep.mubr.f32.mxu0 0.0
    %2450 = vmatmul.mubr.f32.gmra.mrb[0].mxu0 %v2149
    %v2451 = vpop.f32.mrb[0].mxu0
    %v2452 = vadd.f32 0.0, %v2451
    %v2453 = vpop.f32.mrb[0].mxu0
    %2454 = vmatprep.mubr.f32.mxu0 0.0
    %2455 = vmatmul.mubr.f32.gmra.mrb[0].mxu0 %v2150
    %v2456 = vpop.f32.mrb[0].mxu0
    %v2457 = vadd.f32 0.0, %v2456
    %v2458 = vpop.f32.mrb[0].mxu0
    %2459 = vmatprep.mubr.f32.mxu0 0.0
    %2460 = vmatmul.mubr.f32.gmra.mrb[0].mxu0 %v2151
    %v2461 = vpop.f32.mrb[0].mxu0
    %v2462 = vadd.f32 0.0, %v2461
    %v2463 = vpop.f32.mrb[0].mxu0
    %2464 = vmatprep.mubr.f32.mxu0 0.0
    %2465 = vmatmul.mubr.f32.gmra.mrb[0].mxu0 %v2152
    %v2466 = vpop.f32.mrb[0].mxu0
    %v2467 = vadd.f32 0.0, %v2466
    %v2468 = vpop.f32.mrb[0].mxu0
    %2469 = vmatprep.mubr.f32.mxu0 0.0
    %2470 = vmatmul.mubr.f32.gmra.mrb[0].mxu0 %v2153
    %v2471 = vpop.f32.mrb[0].mxu0
    %v2472 = vadd.f32 0.0, %v2471
    %v2473 = vpop.f32.mrb[0].mxu0
    %2474 = vmatprep.mubr.f32.mxu0 0.0
    %2475 = vmatmul.mubr.f32.gmra.mrb[0].mxu0 %v2154
    %v2476 = vpop.f32.mrb[0].mxu0
    %v2477 = vadd.f32 0.0, %v2476
    %v2478 = vpop.f32.mrb[0].mxu0
    %2479 = vmatprep.mubr.f32.mxu0 0.0
    %2480 = vmatmul.mubr.f32.gmra.mrb[0].mxu0 %v2155
    %v2481 = vpop.f32.mrb[0].mxu0
    %v2482 = vadd.f32 0.0, %v2481
    %v2483 = vpop.f32.mrb[0].mxu0
    %2484 = vmatprep.mubr.f32.mxu0 0.0
    %2485 = vmatmul.mubr.f32.gmra.mrb[0].mxu0 %v2156
    %v2486 = vpop.f32.mrb[0].mxu0
    %v2487 = vadd.f32 0.0, %v2486
    %v2488 = vpop.f32.mrb[0].mxu0
    %2489 = vmatprep.mubr.f32.mxu0 0.0
    %2490 = vmatmul.mubr.f32.gmra.mrb[0].mxu0 %v2157
    %v2491 = vpop.f32.mrb[0].mxu0
    %v2492 = vadd.f32 0.0, %v2491
    %v2493 = vpop.f32.mrb[0].mxu0
    %2494 = vmatprep.mubr.f32.mxu0 0.0
    %2495 = vmatmul.mubr.f32.gmra.mrb[0].mxu0 %v2158
    %v2496 = vpop.f32.mrb[0].mxu0
    %v2497 = vadd.f32 0.0, %v2496
    %v2498 = vpop.f32.mrb[0].mxu0
    %2499 = vmatprep.mubr.f32.mxu0 0.0
    %2500 = vmatmul.mubr.f32.gmra.mrb[0].mxu0 %v2159
    %v2501 = vpop.f32.mrb[0].mxu0
    %v2502 = vadd.f32 0.0, %v2501
    %v2503 = vpop.f32.mrb[0].mxu0
    %2504 = vmatprep.mubr.f32.mxu0 0.0
    %2505 = vmatmul.mubr.f32.gmra.mrb[0].mxu0 %v2160
    %v2506 = vpop.f32.mrb[0].mxu0
    %v2507 = vadd.f32 0.0, %v2506
    %v2508 = vpop.f32.mrb[0].mxu0
    %2509 = vmatprep.mubr.f32.mxu0 0.0
    %2510 = vmatmul.mubr.f32.gmra.mrb[0].mxu0 %v2161
    %v2511 = vpop.f32.mrb[0].mxu0
    %v2512 = vadd.f32 0.0, %v2511
    %v2513 = vpop.f32.mrb[0].mxu0
    %2514 = vmatprep.mubr.f32.mxu0 0.0
    %2515 = vmatmul.mubr.f32.gmra.mrb[0].mxu0 %v2162
    %v2516 = vpop.f32.mrb[0].mxu0
    %v2517 = vadd.f32 0.0, %v2516
    %v2518 = vpop.f32.mrb[0].mxu0
    %2519 = vmatprep.mubr.f32.mxu0 0.0
    %2520 = vmatmul.mubr.f32.gmra.mrb[0].mxu0 %v2163
    %v2521 = vpop.f32.mrb[0].mxu0
    %v2522 = vadd.f32 0.0, %v2521
    %v2523 = vpop.f32.mrb[0].mxu0
    %2524 = vmatprep.mubr.f32.mxu0 0.0
    %2525 = vmatmul.mubr.f32.gmra.mrb[0].mxu0 %v2164
    %v2526 = vpop.f32.mrb[0].mxu0
    %v2527 = vadd.f32 0.0, %v2526
    %v2528 = vpop.f32.mrb[0].mxu0
    %2529 = vmatprep.mubr.f32.mxu0 0.0
    %2530 = vmatmul.mubr.f32.gmra.mrb[0].mxu0 %v2165
    %v2531 = vpop.f32.mrb[0].mxu0
    %v2532 = vadd.f32 0.0, %v2531
    %v2533 = vpop.f32.mrb[0].mxu0
    %2534 = vmatprep.mubr.f32.mxu0 0.0
    %2535 = vmatmul.mubr.f32.gmra.mrb[0].mxu0 %v2166
    %v2536 = vpop.f32.mrb[0].mxu0
    %v2537 = vadd.f32 0.0, %v2536
    %v2538 = vpop.f32.mrb[0].mxu0
    %2539 = vmatprep.mubr.f32.mxu0 0.0
    %2540 = vmatmul.mubr.f32.gmra.mrb[0].mxu0 %v2167
    %v2541 = vpop.f32.mrb[0].mxu0
    %v2542 = vadd.f32 0.0, %v2541
    %v2543 = vpop.f32.mrb[0].mxu0
    %2544 = vmatprep.mubr.f32.mxu0 0.0
    %2545 = vmatmul.mubr.f32.gmra.mrb[0].mxu0 %v2168
    %v2546 = vpop.f32.mrb[0].mxu0
    %v2547 = vadd.f32 0.0, %v2546
    %v2548 = vpop.f32.mrb[0].mxu0
    %2549 = vmatprep.mubr.f32.mxu0 0.0
    %2550 = vmatmul.mubr.f32.gmra.mrb[0].mxu0 %v2169
    %v2551 = vpop.f32.mrb[0].mxu0
    %v2552 = vadd.f32 0.0, %v2551
    %v2553 = vpop.f32.mrb[0].mxu0
    %2554 = vmatprep.mubr.f32.mxu0 0.0
    %2555 = vmatmul.mubr.f32.gmra.mrb[0].mxu0 %v2170
    %v2556 = vpop.f32.mrb[0].mxu0
    %v2557 = vadd.f32 0.0, %v2556
    %v2558 = vpop.f32.mrb[0].mxu0
    %2559 = vmatprep.mubr.f32.mxu0 0.0
    %2560 = vmatmul.mubr.f32.gmra.mrb[0].mxu0 %v2171
    %v2561 = vpop.f32.mrb[0].mxu0
    %v2562 = vadd.f32 0.0, %v2561
    %v2563 = vpop.f32.mrb[0].mxu0
    %2564 = vmatprep.mubr.f32.mxu0 0.0
    %2565 = vmatmul.mubr.f32.gmra.mrb[0].mxu0 %v2172
    %v2566 = vpop.f32.mrb[0].mxu0
    %v2567 = vadd.f32 0.0, %v2566
    %v2568 = vpop.f32.mrb[0].mxu0
    %2569 = vmatprep.mubr.f32.mxu0 0.0
    %2570 = vmatmul.mubr.f32.gmra.mrb[0].mxu0 %v2173
    %v2571 = vpop.f32.mrb[0].mxu0
    %v2572 = vadd.f32 0.0, %v2571
    %v2573 = vpop.f32.mrb[0].mxu0
    %2574 = vdwg.mxu0
    %v2575 = vlaneseq
    %v2576 = vand.u32 %v2575, 127
    %vm2577 = vcmp.lt.s32.totalorder %v2576, 64
    %v2578 = vrsqrt.pop %v2257
    %v2579 = vmul.f32 %v2257, %v2578
    %vm2580 = vcmp.eq.f32.partialorder %v2257, inf
    %v2581 = vsel %vm2580, %v2257, %v2579
    %vm2582 = vcmp.eq.f32.partialorder %v2257, 0.0
    %v2583 = vand.u32 %v2257, 2147483648
    %v2584 = vsel %vm2582, %v2583, %v2581
    %v2585 = vrsqrt.pop %v2262
    %v2586 = vmul.f32 %v2262, %v2585
    %vm2587 = vcmp.eq.f32.partialorder %v2262, inf
    %v2588 = vsel %vm2587, %v2262, %v2586
    %vm2589 = vcmp.eq.f32.partialorder %v2262, 0.0
    %v2590 = vand.u32 %v2262, 2147483648
    %v2591 = vsel %vm2589, %v2590, %v2588
    %v2592 = vrsqrt.pop %v2267
    %v2593 = vmul.f32 %v2267, %v2592
    %vm2594 = vcmp.eq.f32.partialorder %v2267, inf
    %v2595 = vsel %vm2594, %v2267, %v2593
    %vm2596 = vcmp.eq.f32.partialorder %v2267, 0.0
    %v2597 = vand.u32 %v2267, 2147483648
    %v2598 = vsel %vm2596, %v2597, %v2595
    %v2599 = vrsqrt.pop %v2272
    %v2600 = vmul.f32 %v2272, %v2599
    %vm2601 = vcmp.eq.f32.partialorder %v2272, inf
    %v2602 = vsel %vm2601, %v2272, %v2600
    %vm2603 = vcmp.eq.f32.partialorder %v2272, 0.0
    %v2604 = vand.u32 %v2272, 2147483648
    %v2605 = vsel %vm2603, %v2604, %v2602
    %v2606 = vrsqrt.pop %v2277
    %v2607 = vmul.f32 %v2277, %v2606
    %vm2608 = vcmp.eq.f32.partialorder %v2277, inf
    %v2609 = vsel %vm2608, %v2277, %v2607
    %vm2610 = vcmp.eq.f32.partialorder %v2277, 0.0
    %v2611 = vand.u32 %v2277, 2147483648
    %v2612 = vsel %vm2610, %v2611, %v2609
    %v2613 = vrsqrt.pop %v2282
    %v2614 = vmul.f32 %v2282, %v2613
    %vm2615 = vcmp.eq.f32.partialorder %v2282, inf
    %v2616 = vsel %vm2615, %v2282, %v2614
    %vm2617 = vcmp.eq.f32.partialorder %v2282, 0.0
    %v2618 = vand.u32 %v2282, 2147483648
    %v2619 = vsel %vm2617, %v2618, %v2616
    %v2620 = vrsqrt.pop %v2287
    %v2621 = vmul.f32 %v2287, %v2620
    %vm2622 = vcmp.eq.f32.partialorder %v2287, inf
    %v2623 = vsel %vm2622, %v2287, %v2621
    %vm2624 = vcmp.eq.f32.partialorder %v2287, 0.0
    %v2625 = vand.u32 %v2287, 2147483648
    %v2626 = vsel %vm2624, %v2625, %v2623
    %v2627 = vrsqrt.pop %v2292
    %v2628 = vmul.f32 %v2292, %v2627
    %vm2629 = vcmp.eq.f32.partialorder %v2292, inf
    %v2630 = vsel %vm2629, %v2292, %v2628
    %vm2631 = vcmp.eq.f32.partialorder %v2292, 0.0
    %v2632 = vand.u32 %v2292, 2147483648
    %v2633 = vsel %vm2631, %v2632, %v2630
    %v2634 = vrsqrt.pop %v2297
    %v2635 = vmul.f32 %v2297, %v2634
    %vm2636 = vcmp.eq.f32.partialorder %v2297, inf
    %v2637 = vsel %vm2636, %v2297, %v2635
    %vm2638 = vcmp.eq.f32.partialorder %v2297, 0.0
    %v2639 = vand.u32 %v2297, 2147483648
    %v2640 = vsel %vm2638, %v2639, %v2637
    %v2641 = vrsqrt.pop %v2302
    %v2642 = vmul.f32 %v2302, %v2641
    %vm2643 = vcmp.eq.f32.partialorder %v2302, inf
    %v2644 = vsel %vm2643, %v2302, %v2642
    %vm2645 = vcmp.eq.f32.partialorder %v2302, 0.0
    %v2646 = vand.u32 %v2302, 2147483648
    %v2647 = vsel %vm2645, %v2646, %v2644
    %v2648 = vrsqrt.pop %v2307
    %v2649 = vmul.f32 %v2307, %v2648
    %vm2650 = vcmp.eq.f32.partialorder %v2307, inf
    %v2651 = vsel %vm2650, %v2307, %v2649
    %vm2652 = vcmp.eq.f32.partialorder %v2307, 0.0
    %v2653 = vand.u32 %v2307, 2147483648
    %v2654 = vsel %vm2652, %v2653, %v2651
    %v2655 = vrsqrt.pop %v2312
    %v2656 = vmul.f32 %v2312, %v2655
    %vm2657 = vcmp.eq.f32.partialorder %v2312, inf
    %v2658 = vsel %vm2657, %v2312, %v2656
    %vm2659 = vcmp.eq.f32.partialorder %v2312, 0.0
    %v2660 = vand.u32 %v2312, 2147483648
    %v2661 = vsel %vm2659, %v2660, %v2658
    %v2662 = vrsqrt.pop %v2317
    %v2663 = vmul.f32 %v2317, %v2662
    %vm2664 = vcmp.eq.f32.partialorder %v2317, inf
    %v2665 = vsel %vm2664, %v2317, %v2663
    %vm2666 = vcmp.eq.f32.partialorder %v2317, 0.0
    %v2667 = vand.u32 %v2317, 2147483648
    %v2668 = vsel %vm2666, %v2667, %v2665
    %v2669 = vrsqrt.pop %v2322
    %v2670 = vmul.f32 %v2322, %v2669
    %vm2671 = vcmp.eq.f32.partialorder %v2322, inf
    %v2672 = vsel %vm2671, %v2322, %v2670
    %vm2673 = vcmp.eq.f32.partialorder %v2322, 0.0
    %v2674 = vand.u32 %v2322, 2147483648
    %v2675 = vsel %vm2673, %v2674, %v2672
    %v2676 = vrsqrt.pop %v2327
    %v2677 = vmul.f32 %v2327, %v2676
    %vm2678 = vcmp.eq.f32.partialorder %v2327, inf
    %v2679 = vsel %vm2678, %v2327, %v2677
    %vm2680 = vcmp.eq.f32.partialorder %v2327, 0.0
    %v2681 = vand.u32 %v2327, 2147483648
    %v2682 = vsel %vm2680, %v2681, %v2679
    %v2683 = vrsqrt.pop %v2332
    %v2684 = vmul.f32 %v2332, %v2683
    %vm2685 = vcmp.eq.f32.partialorder %v2332, inf
    %v2686 = vsel %vm2685, %v2332, %v2684
    %vm2687 = vcmp.eq.f32.partialorder %v2332, 0.0
    %v2688 = vand.u32 %v2332, 2147483648
    %v2689 = vsel %vm2687, %v2688, %v2686
    %v2690 = vrsqrt.pop %v2337
    %v2691 = vmul.f32 %v2337, %v2690
    %vm2692 = vcmp.eq.f32.partialorder %v2337, inf
    %v2693 = vsel %vm2692, %v2337, %v2691
    %vm2694 = vcmp.eq.f32.partialorder %v2337, 0.0
    %v2695 = vand.u32 %v2337, 2147483648
    %v2696 = vsel %vm2694, %v2695, %v2693
    %v2697 = vrsqrt.pop %v2342
    %v2698 = vmul.f32 %v2342, %v2697
    %vm2699 = vcmp.eq.f32.partialorder %v2342, inf
    %v2700 = vsel %vm2699, %v2342, %v2698
    %vm2701 = vcmp.eq.f32.partialorder %v2342, 0.0
    %v2702 = vand.u32 %v2342, 2147483648
    %v2703 = vsel %vm2701, %v2702, %v2700
    %v2704 = vrsqrt.pop %v2347
    %v2705 = vmul.f32 %v2347, %v2704
    %vm2706 = vcmp.eq.f32.partialorder %v2347, inf
    %v2707 = vsel %vm2706, %v2347, %v2705
    %vm2708 = vcmp.eq.f32.partialorder %v2347, 0.0
    %v2709 = vand.u32 %v2347, 2147483648
    %v2710 = vsel %vm2708, %v2709, %v2707
    %v2711 = vrsqrt.pop %v2352
    %v2712 = vmul.f32 %v2352, %v2711
    %vm2713 = vcmp.eq.f32.partialorder %v2352, inf
    %v2714 = vsel %vm2713, %v2352, %v2712
    %vm2715 = vcmp.eq.f32.partialorder %v2352, 0.0
    %v2716 = vand.u32 %v2352, 2147483648
    %v2717 = vsel %vm2715, %v2716, %v2714
    %v2718 = vrsqrt.pop %v2357
    %v2719 = vmul.f32 %v2357, %v2718
    %vm2720 = vcmp.eq.f32.partialorder %v2357, inf
    %v2721 = vsel %vm2720, %v2357, %v2719
    %vm2722 = vcmp.eq.f32.partialorder %v2357, 0.0
    %v2723 = vand.u32 %v2357, 2147483648
    %v2724 = vsel %vm2722, %v2723, %v2721
    %v2725 = vrsqrt.pop %v2362
    %v2726 = vmul.f32 %v2362, %v2725
    %vm2727 = vcmp.eq.f32.partialorder %v2362, inf
    %v2728 = vsel %vm2727, %v2362, %v2726
    %vm2729 = vcmp.eq.f32.partialorder %v2362, 0.0
    %v2730 = vand.u32 %v2362, 2147483648
    %v2731 = vsel %vm2729, %v2730, %v2728
    %v2732 = vrsqrt.pop %v2367
    %v2733 = vmul.f32 %v2367, %v2732
    %vm2734 = vcmp.eq.f32.partialorder %v2367, inf
    %v2735 = vsel %vm2734, %v2367, %v2733
    %vm2736 = vcmp.eq.f32.partialorder %v2367, 0.0
    %v2737 = vand.u32 %v2367, 2147483648
    %v2738 = vsel %vm2736, %v2737, %v2735
    %v2739 = vrsqrt.pop %v2372
    %v2740 = vmul.f32 %v2372, %v2739
    %vm2741 = vcmp.eq.f32.partialorder %v2372, inf
    %v2742 = vsel %vm2741, %v2372, %v2740
    %vm2743 = vcmp.eq.f32.partialorder %v2372, 0.0
    %v2744 = vand.u32 %v2372, 2147483648
    %v2745 = vsel %vm2743, %v2744, %v2742
    %v2746 = vrsqrt.pop %v2377
    %v2747 = vmul.f32 %v2377, %v2746
    %vm2748 = vcmp.eq.f32.partialorder %v2377, inf
    %v2749 = vsel %vm2748, %v2377, %v2747
    %vm2750 = vcmp.eq.f32.partialorder %v2377, 0.0
    %v2751 = vand.u32 %v2377, 2147483648
    %v2752 = vsel %vm2750, %v2751, %v2749
    %v2753 = vrsqrt.pop %v2382
    %v2754 = vmul.f32 %v2382, %v2753
    %vm2755 = vcmp.eq.f32.partialorder %v2382, inf
    %v2756 = vsel %vm2755, %v2382, %v2754
    %vm2757 = vcmp.eq.f32.partialorder %v2382, 0.0
    %v2758 = vand.u32 %v2382, 2147483648
    %v2759 = vsel %vm2757, %v2758, %v2756
    %v2760 = vrsqrt.pop %v2387
    %v2761 = vmul.f32 %v2387, %v2760
    %vm2762 = vcmp.eq.f32.partialorder %v2387, inf
    %v2763 = vsel %vm2762, %v2387, %v2761
    %vm2764 = vcmp.eq.f32.partialorder %v2387, 0.0
    %v2765 = vand.u32 %v2387, 2147483648
    %v2766 = vsel %vm2764, %v2765, %v2763
    %v2767 = vrsqrt.pop %v2392
    %v2768 = vmul.f32 %v2392, %v2767
    %vm2769 = vcmp.eq.f32.partialorder %v2392, inf
    %v2770 = vsel %vm2769, %v2392, %v2768
    %vm2771 = vcmp.eq.f32.partialorder %v2392, 0.0
    %v2772 = vand.u32 %v2392, 2147483648
    %v2773 = vsel %vm2771, %v2772, %v2770
    %v2774 = vrsqrt.pop %v2397
    %v2775 = vmul.f32 %v2397, %v2774
    %vm2776 = vcmp.eq.f32.partialorder %v2397, inf
    %v2777 = vsel %vm2776, %v2397, %v2775
    %vm2778 = vcmp.eq.f32.partialorder %v2397, 0.0
    %v2779 = vand.u32 %v2397, 2147483648
    %v2780 = vsel %vm2778, %v2779, %v2777
    %v2781 = vrsqrt.pop %v2402
    %v2782 = vmul.f32 %v2402, %v2781
    %vm2783 = vcmp.eq.f32.partialorder %v2402, inf
    %v2784 = vsel %vm2783, %v2402, %v2782
    %vm2785 = vcmp.eq.f32.partialorder %v2402, 0.0
    %v2786 = vand.u32 %v2402, 2147483648
    %v2787 = vsel %vm2785, %v2786, %v2784
    %v2788 = vrsqrt.pop %v2407
    %v2789 = vmul.f32 %v2407, %v2788
    %vm2790 = vcmp.eq.f32.partialorder %v2407, inf
    %v2791 = vsel %vm2790, %v2407, %v2789
    %vm2792 = vcmp.eq.f32.partialorder %v2407, 0.0
    %v2793 = vand.u32 %v2407, 2147483648
    %v2794 = vsel %vm2792, %v2793, %v2791
    %v2795 = vrsqrt.pop %v2412
    %v2796 = vmul.f32 %v2412, %v2795
    %vm2797 = vcmp.eq.f32.partialorder %v2412, inf
    %v2798 = vsel %vm2797, %v2412, %v2796
    %vm2799 = vcmp.eq.f32.partialorder %v2412, 0.0
    %v2800 = vand.u32 %v2412, 2147483648
    %v2801 = vsel %vm2799, %v2800, %v2798
    %v2802 = vrsqrt.pop %v2417
    %v2803 = vmul.f32 %v2417, %v2802
    %vm2804 = vcmp.eq.f32.partialorder %v2417, inf
    %v2805 = vsel %vm2804, %v2417, %v2803
    %vm2806 = vcmp.eq.f32.partialorder %v2417, 0.0
    %v2807 = vand.u32 %v2417, 2147483648
    %v2808 = vsel %vm2806, %v2807, %v2805
    %v2809 = vrsqrt.pop %v2422
    %v2810 = vmul.f32 %v2422, %v2809
    %vm2811 = vcmp.eq.f32.partialorder %v2422, inf
    %v2812 = vsel %vm2811, %v2422, %v2810
    %vm2813 = vcmp.eq.f32.partialorder %v2422, 0.0
    %v2814 = vand.u32 %v2422, 2147483648
    %v2815 = vsel %vm2813, %v2814, %v2812
    %v2816 = vrsqrt.pop %v2427
    %v2817 = vmul.f32 %v2427, %v2816
    %vm2818 = vcmp.eq.f32.partialorder %v2427, inf
    %v2819 = vsel %vm2818, %v2427, %v2817
    %vm2820 = vcmp.eq.f32.partialorder %v2427, 0.0
    %v2821 = vand.u32 %v2427, 2147483648
    %v2822 = vsel %vm2820, %v2821, %v2819
    %v2823 = vrsqrt.pop %v2432
    %v2824 = vmul.f32 %v2432, %v2823
    %vm2825 = vcmp.eq.f32.partialorder %v2432, inf
    %v2826 = vsel %vm2825, %v2432, %v2824
    %vm2827 = vcmp.eq.f32.partialorder %v2432, 0.0
    %v2828 = vand.u32 %v2432, 2147483648
    %v2829 = vsel %vm2827, %v2828, %v2826
    %v2830 = vrsqrt.pop %v2437
    %v2831 = vmul.f32 %v2437, %v2830
    %vm2832 = vcmp.eq.f32.partialorder %v2437, inf
    %v2833 = vsel %vm2832, %v2437, %v2831
    %vm2834 = vcmp.eq.f32.partialorder %v2437, 0.0
    %v2835 = vand.u32 %v2437, 2147483648
    %v2836 = vsel %vm2834, %v2835, %v2833
    %v2837 = vrsqrt.pop %v2442
    %v2838 = vmul.f32 %v2442, %v2837
    %vm2839 = vcmp.eq.f32.partialorder %v2442, inf
    %v2840 = vsel %vm2839, %v2442, %v2838
    %vm2841 = vcmp.eq.f32.partialorder %v2442, 0.0
    %v2842 = vand.u32 %v2442, 2147483648
    %v2843 = vsel %vm2841, %v2842, %v2840
    %v2844 = vrsqrt.pop %v2447
    %v2845 = vmul.f32 %v2447, %v2844
    %vm2846 = vcmp.eq.f32.partialorder %v2447, inf
    %v2847 = vsel %vm2846, %v2447, %v2845
    %vm2848 = vcmp.eq.f32.partialorder %v2447, 0.0
    %v2849 = vand.u32 %v2447, 2147483648
    %v2850 = vsel %vm2848, %v2849, %v2847
    %v2851 = vrsqrt.pop %v2452
    %v2852 = vmul.f32 %v2452, %v2851
    %vm2853 = vcmp.eq.f32.partialorder %v2452, inf
    %v2854 = vsel %vm2853, %v2452, %v2852
    %vm2855 = vcmp.eq.f32.partialorder %v2452, 0.0
    %v2856 = vand.u32 %v2452, 2147483648
    %v2857 = vsel %vm2855, %v2856, %v2854
    %v2858 = vrsqrt.pop %v2457
    %v2859 = vmul.f32 %v2457, %v2858
    %vm2860 = vcmp.eq.f32.partialorder %v2457, inf
    %v2861 = vsel %vm2860, %v2457, %v2859
    %vm2862 = vcmp.eq.f32.partialorder %v2457, 0.0
    %v2863 = vand.u32 %v2457, 2147483648
    %v2864 = vsel %vm2862, %v2863, %v2861
    %v2865 = vrsqrt.pop %v2462
    %v2866 = vmul.f32 %v2462, %v2865
    %vm2867 = vcmp.eq.f32.partialorder %v2462, inf
    %v2868 = vsel %vm2867, %v2462, %v2866
    %vm2869 = vcmp.eq.f32.partialorder %v2462, 0.0
    %v2870 = vand.u32 %v2462, 2147483648
    %v2871 = vsel %vm2869, %v2870, %v2868
    %v2872 = vrsqrt.pop %v2467
    %v2873 = vmul.f32 %v2467, %v2872
    %vm2874 = vcmp.eq.f32.partialorder %v2467, inf
    %v2875 = vsel %vm2874, %v2467, %v2873
    %vm2876 = vcmp.eq.f32.partialorder %v2467, 0.0
    %v2877 = vand.u32 %v2467, 2147483648
    %v2878 = vsel %vm2876, %v2877, %v2875
    %v2879 = vrsqrt.pop %v2472
    %v2880 = vmul.f32 %v2472, %v2879
    %vm2881 = vcmp.eq.f32.partialorder %v2472, inf
    %v2882 = vsel %vm2881, %v2472, %v2880
    %vm2883 = vcmp.eq.f32.partialorder %v2472, 0.0
    %v2884 = vand.u32 %v2472, 2147483648
    %v2885 = vsel %vm2883, %v2884, %v2882
    %v2886 = vrsqrt.pop %v2477
    %v2887 = vmul.f32 %v2477, %v2886
    %vm2888 = vcmp.eq.f32.partialorder %v2477, inf
    %v2889 = vsel %vm2888, %v2477, %v2887
    %vm2890 = vcmp.eq.f32.partialorder %v2477, 0.0
    %v2891 = vand.u32 %v2477, 2147483648
    %v2892 = vsel %vm2890, %v2891, %v2889
    %v2893 = vrsqrt.pop %v2482
    %v2894 = vmul.f32 %v2482, %v2893
    %vm2895 = vcmp.eq.f32.partialorder %v2482, inf
    %v2896 = vsel %vm2895, %v2482, %v2894
    %vm2897 = vcmp.eq.f32.partialorder %v2482, 0.0
    %v2898 = vand.u32 %v2482, 2147483648
    %v2899 = vsel %vm2897, %v2898, %v2896
    %v2900 = vrsqrt.pop %v2487
    %v2901 = vmul.f32 %v2487, %v2900
    %vm2902 = vcmp.eq.f32.partialorder %v2487, inf
    %v2903 = vsel %vm2902, %v2487, %v2901
    %vm2904 = vcmp.eq.f32.partialorder %v2487, 0.0
    %v2905 = vand.u32 %v2487, 2147483648
    %v2906 = vsel %vm2904, %v2905, %v2903
    %v2907 = vrsqrt.pop %v2492
    %v2908 = vmul.f32 %v2492, %v2907
    %vm2909 = vcmp.eq.f32.partialorder %v2492, inf
    %v2910 = vsel %vm2909, %v2492, %v2908
    %vm2911 = vcmp.eq.f32.partialorder %v2492, 0.0
    %v2912 = vand.u32 %v2492, 2147483648
    %v2913 = vsel %vm2911, %v2912, %v2910
    %v2914 = vrsqrt.pop %v2497
    %v2915 = vmul.f32 %v2497, %v2914
    %vm2916 = vcmp.eq.f32.partialorder %v2497, inf
    %v2917 = vsel %vm2916, %v2497, %v2915
    %vm2918 = vcmp.eq.f32.partialorder %v2497, 0.0
    %v2919 = vand.u32 %v2497, 2147483648
    %v2920 = vsel %vm2918, %v2919, %v2917
    %v2921 = vrsqrt.pop %v2502
    %v2922 = vmul.f32 %v2502, %v2921
    %vm2923 = vcmp.eq.f32.partialorder %v2502, inf
    %v2924 = vsel %vm2923, %v2502, %v2922
    %vm2925 = vcmp.eq.f32.partialorder %v2502, 0.0
    %v2926 = vand.u32 %v2502, 2147483648
    %v2927 = vsel %vm2925, %v2926, %v2924
    %v2928 = vrsqrt.pop %v2507
    %v2929 = vmul.f32 %v2507, %v2928
    %vm2930 = vcmp.eq.f32.partialorder %v2507, inf
    %v2931 = vsel %vm2930, %v2507, %v2929
    %vm2932 = vcmp.eq.f32.partialorder %v2507, 0.0
    %v2933 = vand.u32 %v2507, 2147483648
    %v2934 = vsel %vm2932, %v2933, %v2931
    %v2935 = vrsqrt.pop %v2512
    %v2936 = vmul.f32 %v2512, %v2935
    %vm2937 = vcmp.eq.f32.partialorder %v2512, inf
    %v2938 = vsel %vm2937, %v2512, %v2936
    %vm2939 = vcmp.eq.f32.partialorder %v2512, 0.0
    %v2940 = vand.u32 %v2512, 2147483648
    %v2941 = vsel %vm2939, %v2940, %v2938
    %v2942 = vrsqrt.pop %v2517
    %v2943 = vmul.f32 %v2517, %v2942
    %vm2944 = vcmp.eq.f32.partialorder %v2517, inf
    %v2945 = vsel %vm2944, %v2517, %v2943
    %vm2946 = vcmp.eq.f32.partialorder %v2517, 0.0
    %v2947 = vand.u32 %v2517, 2147483648
    %v2948 = vsel %vm2946, %v2947, %v2945
    %v2949 = vrsqrt.pop %v2522
    %v2950 = vmul.f32 %v2522, %v2949
    %vm2951 = vcmp.eq.f32.partialorder %v2522, inf
    %v2952 = vsel %vm2951, %v2522, %v2950
    %vm2953 = vcmp.eq.f32.partialorder %v2522, 0.0
    %v2954 = vand.u32 %v2522, 2147483648
    %v2955 = vsel %vm2953, %v2954, %v2952
    %v2956 = vrsqrt.pop %v2527
    %v2957 = vmul.f32 %v2527, %v2956
    %vm2958 = vcmp.eq.f32.partialorder %v2527, inf
    %v2959 = vsel %vm2958, %v2527, %v2957
    %vm2960 = vcmp.eq.f32.partialorder %v2527, 0.0
    %v2961 = vand.u32 %v2527, 2147483648
    %v2962 = vsel %vm2960, %v2961, %v2959
    %v2963 = vrsqrt.pop %v2532
    %v2964 = vmul.f32 %v2532, %v2963
    %vm2965 = vcmp.eq.f32.partialorder %v2532, inf
    %v2966 = vsel %vm2965, %v2532, %v2964
    %vm2967 = vcmp.eq.f32.partialorder %v2532, 0.0
    %v2968 = vand.u32 %v2532, 2147483648
    %v2969 = vsel %vm2967, %v2968, %v2966
    %v2970 = vrsqrt.pop %v2537
    %v2971 = vmul.f32 %v2537, %v2970
    %vm2972 = vcmp.eq.f32.partialorder %v2537, inf
    %v2973 = vsel %vm2972, %v2537, %v2971
    %vm2974 = vcmp.eq.f32.partialorder %v2537, 0.0
    %v2975 = vand.u32 %v2537, 2147483648
    %v2976 = vsel %vm2974, %v2975, %v2973
    %v2977 = vrsqrt.pop %v2542
    %v2978 = vmul.f32 %v2542, %v2977
    %vm2979 = vcmp.eq.f32.partialorder %v2542, inf
    %v2980 = vsel %vm2979, %v2542, %v2978
    %vm2981 = vcmp.eq.f32.partialorder %v2542, 0.0
    %v2982 = vand.u32 %v2542, 2147483648
    %v2983 = vsel %vm2981, %v2982, %v2980
    %v2984 = vrsqrt.pop %v2547
    %v2985 = vmul.f32 %v2547, %v2984
    %vm2986 = vcmp.eq.f32.partialorder %v2547, inf
    %v2987 = vsel %vm2986, %v2547, %v2985
    %vm2988 = vcmp.eq.f32.partialorder %v2547, 0.0
    %v2989 = vand.u32 %v2547, 2147483648
    %v2990 = vsel %vm2988, %v2989, %v2987
    %v2991 = vrsqrt.pop %v2552
    %v2992 = vmul.f32 %v2552, %v2991
    %vm2993 = vcmp.eq.f32.partialorder %v2552, inf
    %v2994 = vsel %vm2993, %v2552, %v2992
    %vm2995 = vcmp.eq.f32.partialorder %v2552, 0.0
    %v2996 = vand.u32 %v2552, 2147483648
    %v2997 = vsel %vm2995, %v2996, %v2994
    %v2998 = vrsqrt.pop %v2557
    %v2999 = vmul.f32 %v2557, %v2998
    %vm3000 = vcmp.eq.f32.partialorder %v2557, inf
    %v3001 = vsel %vm3000, %v2557, %v2999
    %vm3002 = vcmp.eq.f32.partialorder %v2557, 0.0
    %v3003 = vand.u32 %v2557, 2147483648
    %v3004 = vsel %vm3002, %v3003, %v3001
    %v3005 = vrsqrt.pop %v2562
    %v3006 = vmul.f32 %v2562, %v3005
    %vm3007 = vcmp.eq.f32.partialorder %v2562, inf
    %v3008 = vsel %vm3007, %v2562, %v3006
    %vm3009 = vcmp.eq.f32.partialorder %v2562, 0.0
    %v3010 = vand.u32 %v2562, 2147483648
    %v3011 = vsel %vm3009, %v3010, %v3008
    %v3012 = vrsqrt.pop %v2567
    %v3013 = vmul.f32 %v2567, %v3012
    %vm3014 = vcmp.eq.f32.partialorder %v2567, inf
    %v3015 = vsel %vm3014, %v2567, %v3013
    %vm3016 = vcmp.eq.f32.partialorder %v2567, 0.0
    %v3017 = vand.u32 %v2567, 2147483648
    %v3018 = vsel %vm3016, %v3017, %v3015
    %v3019 = vrsqrt.pop %v2572
    %v3020 = vmul.f32 %v2572, %v3019
    %vm3021 = vcmp.eq.f32.partialorder %v2572, inf
    %v3022 = vsel %vm3021, %v2572, %v3020
    %vm3023 = vcmp.eq.f32.partialorder %v2572, 0.0
    %v3024 = vand.u32 %v2572, 2147483648
    %v3025 = vsel %vm3023, %v3024, %v3022
    %v3026 = vmax.f32 %v2584, 1e-12
    %v3027 = vmax.f32 %v2591, 1e-12
    %v3028 = vmax.f32 %v2598, 1e-12
    %v3029 = vmax.f32 %v2605, 1e-12
    %v3030 = vmax.f32 %v2612, 1e-12
    %v3031 = vmax.f32 %v2619, 1e-12
    %v3032 = vmax.f32 %v2626, 1e-12
    %v3033 = vmax.f32 %v2633, 1e-12
    %v3034 = vmax.f32 %v2640, 1e-12
    %v3035 = vmax.f32 %v2647, 1e-12
    %v3036 = vmax.f32 %v2654, 1e-12
    %v3037 = vmax.f32 %v2661, 1e-12
    %v3038 = vmax.f32 %v2668, 1e-12
    %v3039 = vmax.f32 %v2675, 1e-12
    %v3040 = vmax.f32 %v2682, 1e-12
    %v3041 = vmax.f32 %v2689, 1e-12
    %v3042 = vmax.f32 %v2696, 1e-12
    %v3043 = vmax.f32 %v2703, 1e-12
    %v3044 = vmax.f32 %v2710, 1e-12
    %v3045 = vmax.f32 %v2717, 1e-12
    %v3046 = vmax.f32 %v2724, 1e-12
    %v3047 = vmax.f32 %v2731, 1e-12
    %v3048 = vmax.f32 %v2738, 1e-12
    %v3049 = vmax.f32 %v2745, 1e-12
    %v3050 = vmax.f32 %v2752, 1e-12
    %v3051 = vmax.f32 %v2759, 1e-12
    %v3052 = vmax.f32 %v2766, 1e-12
    %v3053 = vmax.f32 %v2773, 1e-12
    %v3054 = vmax.f32 %v2780, 1e-12
    %v3055 = vmax.f32 %v2787, 1e-12
    %v3056 = vmax.f32 %v2794, 1e-12
    %v3057 = vmax.f32 %v2801, 1e-12
    %v3058 = vmax.f32 %v2808, 1e-12
    %v3059 = vmax.f32 %v2815, 1e-12
    %v3060 = vmax.f32 %v2822, 1e-12
    %v3061 = vmax.f32 %v2829, 1e-12
    %v3062 = vmax.f32 %v2836, 1e-12
    %v3063 = vmax.f32 %v2843, 1e-12
    %v3064 = vmax.f32 %v2850, 1e-12
    %v3065 = vmax.f32 %v2857, 1e-12
    %v3066 = vmax.f32 %v2864, 1e-12
    %v3067 = vmax.f32 %v2871, 1e-12
    %v3068 = vmax.f32 %v2878, 1e-12
    %v3069 = vmax.f32 %v2885, 1e-12
    %v3070 = vmax.f32 %v2892, 1e-12
    %v3071 = vmax.f32 %v2899, 1e-12
    %v3072 = vmax.f32 %v2906, 1e-12
    %v3073 = vmax.f32 %v2913, 1e-12
    %v3074 = vmax.f32 %v2920, 1e-12
    %v3075 = vmax.f32 %v2927, 1e-12
    %v3076 = vmax.f32 %v2934, 1e-12
    %v3077 = vmax.f32 %v2941, 1e-12
    %v3078 = vmax.f32 %v2948, 1e-12
    %v3079 = vmax.f32 %v2955, 1e-12
    %v3080 = vmax.f32 %v2962, 1e-12
    %v3081 = vmax.f32 %v2969, 1e-12
    %v3082 = vmax.f32 %v2976, 1e-12
    %v3083 = vmax.f32 %v2983, 1e-12
    %v3084 = vmax.f32 %v2990, 1e-12
    %v3085 = vmax.f32 %v2997, 1e-12
    %v3086 = vmax.f32 %v3004, 1e-12
    %v3087 = vmax.f32 %v3011, 1e-12
    %v3088 = vmax.f32 %v3018, 1e-12
    %v3089 = vmax.f32 %v3025, 1e-12
    %v3090 = vsel %vm2577, 1, 0
    %vm3091 = vcmp.eq.s32.totalorder %v3090, 1
    %v3092 = vsel %vm3091, %v3026, 1.0
    %v3093 = vsel %vm3091, %v3027, 1.0
    %v3094 = vsel %vm3091, %v3028, 1.0
    %v3095 = vsel %vm3091, %v3029, 1.0
    %v3096 = vsel %vm3091, %v3030, 1.0
    %v3097 = vsel %vm3091, %v3031, 1.0
    %v3098 = vsel %vm3091, %v3032, 1.0
    %v3099 = vsel %vm3091, %v3033, 1.0
    %v3100 = vsel %vm3091, %v3034, 1.0
    %v3101 = vsel %vm3091, %v3035, 1.0
    %v3102 = vsel %vm3091, %v3036, 1.0
    %v3103 = vsel %vm3091, %v3037, 1.0
    %v3104 = vsel %vm3091, %v3038, 1.0
    %v3105 = vsel %vm3091, %v3039, 1.0
    %v3106 = vsel %vm3091, %v3040, 1.0
    %v3107 = vsel %vm3091, %v3041, 1.0
    %v3108 = vsel %vm3091, %v3042, 1.0
    %v3109 = vsel %vm3091, %v3043, 1.0
    %v3110 = vsel %vm3091, %v3044, 1.0
    %v3111 = vsel %vm3091, %v3045, 1.0
    %v3112 = vsel %vm3091, %v3046, 1.0
    %v3113 = vsel %vm3091, %v3047, 1.0
    %v3114 = vsel %vm3091, %v3048, 1.0
    %v3115 = vsel %vm3091, %v3049, 1.0
    %v3116 = vsel %vm3091, %v3050, 1.0
    %v3117 = vsel %vm3091, %v3051, 1.0
    %v3118 = vsel %vm3091, %v3052, 1.0
    %v3119 = vsel %vm3091, %v3053, 1.0
    %v3120 = vsel %vm3091, %v3054, 1.0
    %v3121 = vsel %vm3091, %v3055, 1.0
    %v3122 = vsel %vm3091, %v3056, 1.0
    %v3123 = vsel %vm3091, %v3057, 1.0
    %v3124 = vsel %vm3091, %v3058, 1.0
    %v3125 = vsel %vm3091, %v3059, 1.0
    %v3126 = vsel %vm3091, %v3060, 1.0
    %v3127 = vsel %vm3091, %v3061, 1.0
    %v3128 = vsel %vm3091, %v3062, 1.0
    %v3129 = vsel %vm3091, %v3063, 1.0
    %v3130 = vsel %vm3091, %v3064, 1.0
    %v3131 = vsel %vm3091, %v3065, 1.0
    %v3132 = vsel %vm3091, %v3066, 1.0
    %v3133 = vsel %vm3091, %v3067, 1.0
    %v3134 = vsel %vm3091, %v3068, 1.0
    %v3135 = vsel %vm3091, %v3069, 1.0
    %v3136 = vsel %vm3091, %v3070, 1.0
    %v3137 = vsel %vm3091, %v3071, 1.0
    %v3138 = vsel %vm3091, %v3072, 1.0
    %v3139 = vsel %vm3091, %v3073, 1.0
    %v3140 = vsel %vm3091, %v3074, 1.0
    %v3141 = vsel %vm3091, %v3075, 1.0
    %v3142 = vsel %vm3091, %v3076, 1.0
    %v3143 = vsel %vm3091, %v3077, 1.0
    %v3144 = vsel %vm3091, %v3078, 1.0
    %v3145 = vsel %vm3091, %v3079, 1.0
    %v3146 = vsel %vm3091, %v3080, 1.0
    %v3147 = vsel %vm3091, %v3081, 1.0
    %v3148 = vsel %vm3091, %v3082, 1.0
    %v3149 = vsel %vm3091, %v3083, 1.0
    %v3150 = vsel %vm3091, %v3084, 1.0
    %v3151 = vsel %vm3091, %v3085, 1.0
    %v3152 = vsel %vm3091, %v3086, 1.0
    %v3153 = vsel %vm3091, %v3087, 1.0
    %v3154 = vsel %vm3091, %v3088, 1.0
    %v3155 = vsel %vm3091, %v3089, 1.0
    %v3156 = vrcp.pop %v3092
    %v3157 = vmul.f32 %v1792, %v3156
    %v3158 = vrcp.pop %v3093
    %v3159 = vmul.f32 %v1797, %v3158
    %v3160 = vrcp.pop %v3094
    %v3161 = vmul.f32 %v1802, %v3160
    %v3162 = vrcp.pop %v3095
    %v3163 = vmul.f32 %v1807, %v3162
    %v3164 = vrcp.pop %v3096
    %v3165 = vmul.f32 %v1812, %v3164
    %v3166 = vrcp.pop %v3097
    %v3167 = vmul.f32 %v1817, %v3166
    %v3168 = vrcp.pop %v3098
    %v3169 = vmul.f32 %v1822, %v3168
    %v3170 = vrcp.pop %v3099
    %v3171 = vmul.f32 %v1827, %v3170
    %v3172 = vrcp.pop %v3100
    %v3173 = vmul.f32 %v1832, %v3172
    %v3174 = vrcp.pop %v3101
    %v3175 = vmul.f32 %v1837, %v3174
    %v3176 = vrcp.pop %v3102
    %v3177 = vmul.f32 %v1842, %v3176
    %v3178 = vrcp.pop %v3103
    %v3179 = vmul.f32 %v1847, %v3178
    %v3180 = vrcp.pop %v3104
    %v3181 = vmul.f32 %v1852, %v3180
    %v3182 = vrcp.pop %v3105
    %v3183 = vmul.f32 %v1857, %v3182
    %v3184 = vrcp.pop %v3106
    %v3185 = vmul.f32 %v1862, %v3184
    %v3186 = vrcp.pop %v3107
    %v3187 = vmul.f32 %v1867, %v3186
    %v3188 = vrcp.pop %v3108
    %v3189 = vmul.f32 %v1872, %v3188
    %v3190 = vrcp.pop %v3109
    %v3191 = vmul.f32 %v1877, %v3190
    %v3192 = vrcp.pop %v3110
    %v3193 = vmul.f32 %v1882, %v3192
    %v3194 = vrcp.pop %v3111
    %v3195 = vmul.f32 %v1887, %v3194
    %v3196 = vrcp.pop %v3112
    %v3197 = vmul.f32 %v1892, %v3196
    %v3198 = vrcp.pop %v3113
    %v3199 = vmul.f32 %v1897, %v3198
    %v3200 = vrcp.pop %v3114
    %v3201 = vmul.f32 %v1902, %v3200
    %v3202 = vrcp.pop %v3115
    %v3203 = vmul.f32 %v1907, %v3202
    %v3204 = vrcp.pop %v3116
    %v3205 = vmul.f32 %v1912, %v3204
    %v3206 = vrcp.pop %v3117
    %v3207 = vmul.f32 %v1917, %v3206
    %v3208 = vrcp.pop %v3118
    %v3209 = vmul.f32 %v1922, %v3208
    %v3210 = vrcp.pop %v3119
    %v3211 = vmul.f32 %v1927, %v3210
    %v3212 = vrcp.pop %v3120
    %v3213 = vmul.f32 %v1932, %v3212
    %v3214 = vrcp.pop %v3121
    %v3215 = vmul.f32 %v1937, %v3214
    %v3216 = vrcp.pop %v3122
    %v3217 = vmul.f32 %v1942, %v3216
    %v3218 = vrcp.pop %v3123
    %v3219 = vmul.f32 %v1947, %v3218
    %v3220 = vrcp.pop %v3124
    %v3221 = vmul.f32 %v1952, %v3220
    %v3222 = vrcp.pop %v3125
    %v3223 = vmul.f32 %v1957, %v3222
    %v3224 = vrcp.pop %v3126
    %v3225 = vmul.f32 %v1962, %v3224
    %v3226 = vrcp.pop %v3127
    %v3227 = vmul.f32 %v1967, %v3226
    %v3228 = vrcp.pop %v3128
    %v3229 = vmul.f32 %v1972, %v3228
    %v3230 = vrcp.pop %v3129
    %v3231 = vmul.f32 %v1977, %v3230
    %v3232 = vrcp.pop %v3130
    %v3233 = vmul.f32 %v1982, %v3232
    %v3234 = vrcp.pop %v3131
    %v3235 = vmul.f32 %v1987, %v3234
    %v3236 = vrcp.pop %v3132
    %v3237 = vmul.f32 %v1992, %v3236
    %v3238 = vrcp.pop %v3133
    %v3239 = vmul.f32 %v1997, %v3238
    %v3240 = vrcp.pop %v3134
    %v3241 = vmul.f32 %v2002, %v3240
    %v3242 = vrcp.pop %v3135
    %v3243 = vmul.f32 %v2007, %v3242
    %v3244 = vrcp.pop %v3136
    %v3245 = vmul.f32 %v2012, %v3244
    %v3246 = vrcp.pop %v3137
    %v3247 = vmul.f32 %v2017, %v3246
    %v3248 = vrcp.pop %v3138
    %v3249 = vmul.f32 %v2022, %v3248
    %v3250 = vrcp.pop %v3139
    %v3251 = vmul.f32 %v2027, %v3250
    %v3252 = vrcp.pop %v3140
    %v3253 = vmul.f32 %v2032, %v3252
    %v3254 = vrcp.pop %v3141
    %v3255 = vmul.f32 %v2037, %v3254
    %v3256 = vrcp.pop %v3142
    %v3257 = vmul.f32 %v2042, %v3256
    %v3258 = vrcp.pop %v3143
    %v3259 = vmul.f32 %v2047, %v3258
    %v3260 = vrcp.pop %v3144
    %v3261 = vmul.f32 %v2052, %v3260
    %v3262 = vrcp.pop %v3145
    %v3263 = vmul.f32 %v2057, %v3262
    %v3264 = vrcp.pop %v3146
    %v3265 = vmul.f32 %v2062, %v3264
    %v3266 = vrcp.pop %v3147
    %v3267 = vmul.f32 %v2067, %v3266
    %v3268 = vrcp.pop %v3148
    %v3269 = vmul.f32 %v2072, %v3268
    %v3270 = vrcp.pop %v3149
    %v3271 = vmul.f32 %v2077, %v3270
    %v3272 = vrcp.pop %v3150
    %v3273 = vmul.f32 %v2082, %v3272
    %v3274 = vrcp.pop %v3151
    %v3275 = vmul.f32 %v2087, %v3274
    %v3276 = vrcp.pop %v3152
    %v3277 = vmul.f32 %v2092, %v3276
    %v3278 = vrcp.pop %v3153
    %v3279 = vmul.f32 %v2097, %v3278
    %v3280 = vrcp.pop %v3154
    %v3281 = vmul.f32 %v2102, %v3280
    %v3282 = vrcp.pop %v3155
    %v3283 = vmul.f32 %v2107, %v3282
    %3284 = vst [vmem:[%s5] sm:$0xff] %v3157
    %3285 = vst [vmem:[%s5 + $0x8] sm:$0xff] %v3159
    %3286 = vst [vmem:[%s5 + $0x10] sm:$0xff] %v3161
    %3287 = vst [vmem:[%s5 + $0x18] sm:$0xff] %v3163
    %3288 = vst [vmem:[%s5 + $0x20] sm:$0xff] %v3165
    %3289 = vst [vmem:[%s5 + $0x28] sm:$0xff] %v3167
    %3290 = vst [vmem:[%s5 + $0x30] sm:$0xff] %v3169
    %3291 = vst [vmem:[%s5 + $0x38] sm:$0xff] %v3171
    %3292 = vst [vmem:[%s5 + $0x40] sm:$0xff] %v3173
    %3293 = vst [vmem:[%s5 + $0x48] sm:$0xff] %v3175
    %3294 = vst [vmem:[%s5 + $0x50] sm:$0xff] %v3177
    %3295 = vst [vmem:[%s5 + $0x58] sm:$0xff] %v3179
    %3296 = vst [vmem:[%s5 + $0x60] sm:$0xff] %v3181
    %3297 = vst [vmem:[%s5 + $0x68] sm:$0xff] %v3183
    %3298 = vst [vmem:[%s5 + $0x70] sm:$0xff] %v3185
    %3299 = vst [vmem:[%s5 + $0x78] sm:$0xff] %v3187
    %3300 = vst [vmem:[%s5 + $0x80] sm:$0xff] %v3189
    %3301 = vst [vmem:[%s5 + $0x88] sm:$0xff] %v3191
    %3302 = vst [vmem:[%s5 + $0x90] sm:$0xff] %v3193
    %3303 = vst [vmem:[%s5 + $0x98] sm:$0xff] %v3195
    %3304 = vst [vmem:[%s5 + $0xa0] sm:$0xff] %v3197
    %3305 = vst [vmem:[%s5 + $0xa8] sm:$0xff] %v3199
    %3306 = vst [vmem:[%s5 + $0xb0] sm:$0xff] %v3201
    %3307 = vst [vmem:[%s5 + $0xb8] sm:$0xff] %v3203
    %3308 = vst [vmem:[%s5 + $0xc0] sm:$0xff] %v3205
    %3309 = vst [vmem:[%s5 + $0xc8] sm:$0xff] %v3207
    %3310 = vst [vmem:[%s5 + $0xd0] sm:$0xff] %v3209
    %3311 = vst [vmem:[%s5 + $0xd8] sm:$0xff] %v3211
    %3312 = vst [vmem:[%s5 + $0xe0] sm:$0xff] %v3213
    %3313 = vst [vmem:[%s5 + $0xe8] sm:$0xff] %v3215
    %3314 = vst [vmem:[%s5 + $0xf0] sm:$0xff] %v3217
    %3315 = vst [vmem:[%s5 + $0xf8] sm:$0xff] %v3219
    %3316 = vst [vmem:[%s5 + $0x100] sm:$0xff] %v3221
    %3317 = vst [vmem:[%s5 + $0x108] sm:$0xff] %v3223
    %3318 = vst [vmem:[%s5 + $0x110] sm:$0xff] %v3225
    %3319 = vst [vmem:[%s5 + $0x118] sm:$0xff] %v3227
    %3320 = vst [vmem:[%s5 + $0x120] sm:$0xff] %v3229
    %3321 = vst [vmem:[%s5 + $0x128] sm:$0xff] %v3231
    %3322 = vst [vmem:[%s5 + $0x130] sm:$0xff] %v3233
    %3323 = vst [vmem:[%s5 + $0x138] sm:$0xff] %v3235
    %3324 = vst [vmem:[%s5 + $0x140] sm:$0xff] %v3237
    %3325 = vst [vmem:[%s5 + $0x148] sm:$0xff] %v3239
    %3326 = vst [vmem:[%s5 + $0x150] sm:$0xff] %v3241
    %3327 = vst [vmem:[%s5 + $0x158] sm:$0xff] %v3243
    %3328 = vst [vmem:[%s5 + $0x160] sm:$0xff] %v3245
    %3329 = vst [vmem:[%s5 + $0x168] sm:$0xff] %v3247
    %3330 = vst [vmem:[%s5 + $0x170] sm:$0xff] %v3249
    %3331 = vst [vmem:[%s5 + $0x178] sm:$0xff] %v3251
    %3332 = vst [vmem:[%s5 + $0x180] sm:$0xff] %v3253
    %3333 = vst [vmem:[%s5 + $0x188] sm:$0xff] %v3255
    %3334 = vst [vmem:[%s5 + $0x190] sm:$0xff] %v3257
    %3335 = vst [vmem:[%s5 + $0x198] sm:$0xff] %v3259
    %3336 = vst [vmem:[%s5 + $0x1a0] sm:$0xff] %v3261
    %3337 = vst [vmem:[%s5 + $0x1a8] sm:$0xff] %v3263
    %3338 = vst [vmem:[%s5 + $0x1b0] sm:$0xff] %v3265
    %3339 = vst [vmem:[%s5 + $0x1b8] sm:$0xff] %v3267
    %3340 = vst [vmem:[%s5 + $0x1c0] sm:$0xff] %v3269
    %3341 = vst [vmem:[%s5 + $0x1c8] sm:$0xff] %v3271
    %3342 = vst [vmem:[%s5 + $0x1d0] sm:$0xff] %v3273
    %3343 = vst [vmem:[%s5 + $0x1d8] sm:$0xff] %v3275
    %3344 = vst [vmem:[%s5 + $0x1e0] sm:$0xff] %v3277
    %3345 = vst [vmem:[%s5 + $0x1e8] sm:$0xff] %v3279
    %3346 = vst [vmem:[%s5 + $0x1f0] sm:$0xff] %v3281
    %3347 = vst [vmem:[%s5 + $0x1f8] sm:$0xff] %v3283
    // Predicated region
    $region30: #{dpsa3d_forward.3} parent=1 // pred_check
      _
    $region31: #{dpsa3d_forward.3} parent=1 // pred_check_branch
      %3349 = sbr.rel (0) target = $region33
    $region32: #{dpsa3d_forward.3} parent=1 // pred_region
      _
    $region33: #{dpsa3d_forward.3} parent=1 // pred_fallthru
      _
    // Predicated region
    $region34: #{dpsa3d_forward.3} parent=1 // pred_check
      _
    $region35: #{dpsa3d_forward.3} parent=1 // pred_check_branch
      %3351 = sbr.rel (0) target = $region37
    $region36: #{dpsa3d_forward.3} parent=1 // pred_region
      _
    $region37: #{dpsa3d_forward.3} parent=1 // pred_fallthru
      _
    %3352 = vsyncpa [#allocation3], 1
    %3353 = vsyncpa [#allocation5], 1

// kernel: dpsa3d_forward.4
$region0: #{dpsa3d_forward.4}
  #allocation0 [shape = 'u32[]', space=smem, size = 0x4, offset = 0x4, fixed_abs, tag = 'smem constant byte address 0x4 - core index']
  #allocation1 [shape = 'u32[144,128]{1,0:T(1,128)}', space=vmem, size = 0x12000, scoped, tag = 'internal scratch']
  %s0 = inlined_call_operand.vmem [shape: bf16[4,256,16], index: 0, kind: input, shape index: {}]
  %s1 = inlined_call_operand.vmem [shape: bf16[4,18,16], index: 1, kind: input, shape index: {}]
  %s2 = inlined_call_operand.vmem [shape: bf16[4,18,16], index: 2, kind: input, shape index: {}]
  %s3 = inlined_call_operand.vmem [shape: bf16[4,256,16], index: 3, kind: output, shape index: {}]
  %s4 = sld [smem:[#allocation0]]
  $region45: #{dpsa3d_forward.4} parent=0
    _
  %s6 = ssub.s32 1, %s4
  %s7 = scalar_select 0, %s6, %s4
  loop: start=0, step=1, limit=6
  $region2: #{dpsa3d_forward.4} parent=0 // loop_pre_header
    _
  $region3: #{dpsa3d_forward.4} parent=0 // loop_header
    %s9 = sphi 0, %s13
    %p10 = scmp.ge.s32.totalorder %s9, 6
    %s16 = sphi 0, %s28
    %s17 = sphi 0, %s24
    %s18 = sphi 0, %s16
    %s19 = sphi 0, %s17
    %s20 = sphi 0, %s18
    %s21 = sphi 0, %s19
    %s33 = sphi 0, %s35
    %s36 = sphi 0, %s33
    %s37 = sphi 0, %s36
    %s53 = sphi 0, %s37
    %s59 = sphi 0, %s61
    %s62 = sphi 0, %s59
    %s63 = sphi 0, %s62
    %s79 = sphi 0, %s63
    %s85 = sphi 0, %s87
    %s88 = sphi 0, %s85
    %s89 = sphi 0, %s88
    %s105 = sphi 0, %s89
    %s113 = sphi 0, %s115
    %s116 = sphi 0, %s113
    %s117 = sphi 0, %s116
    %s133 = sphi 0, %s117
  $region4: #{dpsa3d_forward.4} parent=0 // loop_header_branch
    %12 = sbr.rel (%p10) target = $region8
  $region5: #{dpsa3d_forward.4} parent=0 // loop_body
    %s14 = ssub.s32 %s9, 1
    %s15 = ssub.s32 %s9, 2
    %s22 = sadd.s32 1, %s17
    %p23 = scmp.ge.s32.totalorder %s22, 1
    %s24 = scalar_select %p23, 0, %s22
    %s25 = sadd.s32 1, %s16
    %s26 = scalar_select %p23, %s25, %s16
    %p27 = scmp.ge.s32.totalorder %s26, 4
    %s28 = scalar_select %p27, 0, %s26
    %s29 = ssub.s32 %s16, %s28
    %s30 = ssub.s32 %s17, %s24
    %s31 = sor.u32 %s29, %s30
    %p32 = scmp.eq.s32.totalorder %s31, 0
    %s34 = sadd.s32 %s33, 1
    %s35 = scalar_select %p32, %s33, %s34
    %p38 = pneg %p32
    %p39 = scmp.eq.s32.totalorder %s9, 3
    %p40 = por %p38, %p39
    %p41 = scmp.ne.s32.totalorder %s33, %s36
    %p42 = scmp.eq.s32.totalorder %s9, 0
    %p43 = por %p41, %p42
    %p44 = scmp.ne.s32.totalorder %s33, %s36
    %p45 = scmp.eq.s32.totalorder %s14, 3
    %p46 = por %p44, %p45
    %p47 = scmp.ne.s32.totalorder %s36, %s37
    %p48 = scmp.eq.s32.totalorder %s14, 0
    %p49 = por %p47, %p48
    %p50 = scmp.ne.s32.totalorder %s36, %s37
    %p51 = scmp.eq.s32.totalorder %s15, 3
    %p52 = por %p50, %p51
    %p54 = scmp.ne.s32.totalorder %s37, %s53
    %p55 = scmp.eq.s32.totalorder %s15, 0
    %p56 = por %p54, %p55
    %s57 = ssub.s32 %s16, %s28
    %p58 = scmp.eq.s32.totalorder %s57, 0
    %s60 = sadd.s32 %s59, 1
    %s61 = scalar_select %p58, %s59, %s60
    %p64 = pneg %p58
    %p65 = scmp.eq.s32.totalorder %s9, 3
    %p66 = por %p64, %p65
    %p67 = scmp.ne.s32.totalorder %s59, %s62
    %p68 = scmp.eq.s32.totalorder %s9, 0
    %p69 = por %p67, %p68
    %p70 = scmp.ne.s32.totalorder %s59, %s62
    %p71 = scmp.eq.s32.totalorder %s14, 3
    %p72 = por %p70, %p71
    %p73 = scmp.ne.s32.totalorder %s62, %s63
    %p74 = scmp.eq.s32.totalorder %s14, 0
    %p75 = por %p73, %p74
    %p76 = scmp.ne.s32.totalorder %s62, %s63
    %p77 = scmp.eq.s32.totalorder %s15, 3
    %p78 = por %p76, %p77
    %p80 = scmp.ne.s32.totalorder %s63, %s79
    %p81 = scmp.eq.s32.totalorder %s15, 0
    %p82 = por %p80, %p81
    %s83 = ssub.s32 %s16, %s28
    %p84 = scmp.eq.s32.totalorder %s83, 0
    %s86 = sadd.s32 %s85, 1
    %s87 = scalar_select %p84, %s85, %s86
    %p90 = pneg %p84
    %p91 = scmp.eq.s32.totalorder %s9, 3
    %p92 = por %p90, %p91
    %p93 = scmp.ne.s32.totalorder %s85, %s88
    %p94 = scmp.eq.s32.totalorder %s9, 0
    %p95 = por %p93, %p94
    %p96 = scmp.ne.s32.totalorder %s85, %s88
    %p97 = scmp.eq.s32.totalorder %s14, 3
    %p98 = por %p96, %p97
    %p99 = scmp.ne.s32.totalorder %s88, %s89
    %p100 = scmp.eq.s32.totalorder %s14, 0
    %p101 = por %p99, %p100
    %p102 = scmp.ne.s32.totalorder %s88, %s89
    %p103 = scmp.eq.s32.totalorder %s15, 3
    %p104 = por %p102, %p103
    %p106 = scmp.ne.s32.totalorder %s89, %s105
    %p107 = scmp.eq.s32.totalorder %s15, 0
    %p108 = por %p106, %p107
    %s109 = ssub.s32 %s16, %s28
    %s110 = ssub.s32 %s17, %s24
    %s111 = sor.u32 %s109, %s110
    %p112 = scmp.eq.s32.totalorder %s111, 0
    %s114 = sadd.s32 %s113, 1
    %s115 = scalar_select %p112, %s113, %s114
    %p118 = pneg %p112
    %p119 = scmp.eq.s32.totalorder %s9, 3
    %p120 = por %p118, %p119
    %p121 = scmp.ne.s32.totalorder %s113, %s116
    %p122 = scmp.eq.s32.totalorder %s9, 0
    %p123 = por %p121, %p122
    %p124 = scmp.ne.s32.totalorder %s113, %s116
    %p125 = scmp.eq.s32.totalorder %s14, 3
    %p126 = por %p124, %p125
    %p127 = scmp.ne.s32.totalorder %s116, %s117
    %p128 = scmp.eq.s32.totalorder %s14, 0
    %p129 = por %p127, %p128
    %p130 = scmp.ne.s32.totalorder %s116, %s117
    %p131 = scmp.eq.s32.totalorder %s15, 3
    %p132 = por %p130, %p131
    %p134 = scmp.ne.s32.totalorder %s117, %s133
    %p135 = scmp.eq.s32.totalorder %s15, 0
    %p136 = por %p134, %p135
    %p137 = scmp.le.s32.totalorder 1, %s9
    %p138 = scmp.lt.s32.totalorder %s9, 5
    %p139 = pnand %p137, %p138
    %p140 = pneg %p139
    // Predicated region
    $region9: #{dpsa3d_forward.4} parent=5 // pred_check
      _
    $region10: #{dpsa3d_forward.4} parent=5 // pred_check_branch
      %142 = sbr.rel (%p139) target = $region12
    $region11: #{dpsa3d_forward.4} parent=5 // pred_region
      %s143 = ssub.s32 %s9, 1
    $region12: #{dpsa3d_forward.4} parent=5 // pred_fallthru
      _
    %p144 = scmp.lt.s32.totalorder %s9, 4
    // Predicated region
    $region13: #{dpsa3d_forward.4} parent=5 // pred_check
      %p145 = pneg %p144
    $region14: #{dpsa3d_forward.4} parent=5 // pred_check_branch
      %147 = sbr.rel (%p145) target = $region16
    $region15: #{dpsa3d_forward.4} parent=5 // pred_region
      // Predicated region
      $region17: #{dpsa3d_forward.4} parent=15 // pred_check
        %p148 = pneg %p43
      $region18: #{dpsa3d_forward.4} parent=15 // pred_check_branch
        %150 = sbr.rel (%p148) target = $region20
      $region19: #{dpsa3d_forward.4} parent=15 // pred_region
        %s151 = smul.u32 32, %s17
        %p152 = scmp.lt.s32.totalorder %s16, 3
        %s153 = scalar_select %p152, %s16, 3
        %p154 = scmp.lt.s32.totalorder %s151, 31
        %s155 = scalar_select %p154, %s151, 31
        %s156 = smul.addr %s153, 32
        %s157 = sadd.s32 %s155, %s156
        %s158 = smul.addr %s157, 4
        %s159 = scalar_lea.vmem %s0, %s158
        %s160 = smul.u32 32, %s17
      $region20: #{dpsa3d_forward.4} parent=15 // pred_fallthru
        _
      // Predicated region
      $region21: #{dpsa3d_forward.4} parent=15 // pred_check
        %p161 = pneg %p69
      $region22: #{dpsa3d_forward.4} parent=15 // pred_check_branch
        %163 = sbr.rel (%p161) target = $region24
      $region23: #{dpsa3d_forward.4} parent=15 // pred_region
        %p164 = scmp.lt.s32.totalorder %s16, 3
        %s165 = scalar_select %p164, %s16, 3
        %s166 = smul.addr %s165, 3
        %s167 = smul.addr %s166, 4
        %s168 = scalar_lea.vmem %s1, %s167
      $region24: #{dpsa3d_forward.4} parent=15 // pred_fallthru
        _
      // Predicated region
      $region25: #{dpsa3d_forward.4} parent=15 // pred_check
        %p169 = pneg %p95
      $region26: #{dpsa3d_forward.4} parent=15 // pred_check_branch
        %171 = sbr.rel (%p169) target = $region28
      $region27: #{dpsa3d_forward.4} parent=15 // pred_region
        %p172 = scmp.lt.s32.totalorder %s16, 3
        %s173 = scalar_select %p172, %s16, 3
        %s174 = smul.addr %s173, 3
        %s175 = smul.addr %s174, 4
        %s176 = scalar_lea.vmem %s2, %s175
      $region28: #{dpsa3d_forward.4} parent=15 // pred_fallthru
        _
    $region16: #{dpsa3d_forward.4} parent=5 // pred_fallthru
      _
    %p177 = scmp.le.s32.totalorder 1, %s9
    %p178 = scmp.lt.s32.totalorder %s9, 5
    %p179 = pnand %p177, %p178
    %p180 = pneg %p179
    // Predicated region
    $region29: #{dpsa3d_forward.4} parent=5 // pred_check
      _
    $region30: #{dpsa3d_forward.4} parent=5 // pred_check_branch
      %182 = sbr.rel (%p179) target = $region32
    $region31: #{dpsa3d_forward.4} parent=5 // pred_region
      %s183 = ssub.s32 %s9, 1
      %s184 = smul.u32 32, %s19
      %p185 = scmp.lt.s32.totalorder %s18, 3
      %s186 = scalar_select %p185, %s18, 3
      %p187 = scmp.lt.s32.totalorder %s184, 31
      %s188 = scalar_select %p187, %s184, 31
      %s189 = smul.addr %s186, 32
      %s190 = sadd.s32 %s188, %s189
      %s191 = smul.addr %s190, 4
      %s192 = scalar_lea.vmem %s0, %s191
      %p193 = pneg %p49
      %p194 = pneg %p46
      %p195 = scmp.lt.s32.totalorder %s18, 3
      %s196 = scalar_select %p195, %s18, 3
      %s197 = smul.addr %s196, 3
      %s198 = smul.addr %s197, 4
      %s199 = scalar_lea.vmem %s1, %s198
      %p200 = pneg %p75
      %p201 = pneg %p72
      %p202 = scmp.lt.s32.totalorder %s18, 3
      %s203 = scalar_select %p202, %s18, 3
      %s204 = smul.addr %s203, 3
      %s205 = smul.addr %s204, 4
      %s206 = scalar_lea.vmem %s2, %s205
      %p207 = pneg %p101
      %p208 = pneg %p98
      %p209 = pneg %p129
      %p210 = pneg %p126
      %s211 = smul.u32 32, %s19
      %p212 = scmp.lt.s32.totalorder %s18, 3
      %s213 = scalar_select %p212, %s18, 3
      %p214 = scmp.lt.s32.totalorder %s211, 31
      %s215 = scalar_select %p214, %s211, 31
      %s216 = smul.addr %s213, 32
      %s217 = sadd.s32 %s215, %s216
      %s218 = smul.addr %s217, 4
      %s219 = scalar_lea.vmem %s3, %s218
      %s220 = smul.u32 32, %s19
      %p221 = scmp.lt.s32.totalorder %s18, 3
      %s222 = scalar_select %p221, %s18, 3
      %p223 = scmp.lt.s32.totalorder %s220, 31
      %s224 = scalar_select %p223, %s220, 31
      %s225 = smul.addr %s222, 32
      %s226 = sadd.s32 %s224, %s225
      %s227 = smul.addr %s226, 4
      %s228 = scalar_lea.vmem %s0, %s227
      %s229 = smul.u32 32, %s19
      %p230 = scmp.lt.s32.totalorder %s18, 3
      %s231 = scalar_select %p230, %s18, 3
      %s232 = smul.addr %s231, 3
      %s233 = smul.addr %s232, 4
      %s234 = scalar_lea.vmem %s1, %s233
      %p235 = scmp.lt.s32.totalorder %s18, 3
      %s236 = scalar_select %p235, %s18, 3
      %s237 = smul.addr %s236, 3
      %s238 = smul.addr %s237, 4
      %s239 = scalar_lea.vmem %s2, %s238
      %s240 = smul.u32 32, %s19
      %p241 = scmp.lt.s32.totalorder %s18, 3
      %s242 = scalar_select %p241, %s18, 3
      %p243 = scmp.lt.s32.totalorder %s240, 31
      %s244 = scalar_select %p243, %s240, 31
      %s245 = smul.addr %s242, 32
      %s246 = sadd.s32 %s244, %s245
      %s247 = smul.addr %s246, 4
      %s248 = scalar_lea.vmem %s3, %s247
      %s249 = smul.u32 32, %s19
      %v251 = vld [vmem:[%s228] sm:$0xf]
      %v252 = vld [vmem:[%s228 + $0x4] sm:$0xf]
      %v253 = vld [vmem:[%s228 + $0x8] sm:$0xf]
      %v254 = vld [vmem:[%s228 + $0xc] sm:$0xf]
      %v255 = vld [vmem:[%s228 + $0x10] sm:$0xf]
      %v256 = vld [vmem:[%s228 + $0x14] sm:$0xf]
      %v257 = vld [vmem:[%s228 + $0x18] sm:$0xf]
      %v258 = vld [vmem:[%s228 + $0x1c] sm:$0xf]
      %v259 = vld [vmem:[%s228 + $0x20] sm:$0xf]
      %v260 = vld [vmem:[%s228 + $0x24] sm:$0xf]
      %v261 = vld [vmem:[%s228 + $0x28] sm:$0xf]
      %v262 = vld [vmem:[%s228 + $0x2c] sm:$0xf]
      %v263 = vld [vmem:[%s228 + $0x30] sm:$0xf]
      %v264 = vld [vmem:[%s228 + $0x34] sm:$0xf]
      %v265 = vld [vmem:[%s228 + $0x38] sm:$0xf]
      %v266 = vld [vmem:[%s228 + $0x3c] sm:$0xf]
      %v267 = vld [vmem:[%s228 + $0x40] sm:$0xf]
      %v268 = vld [vmem:[%s228 + $0x44] sm:$0xf]
      %v269 = vld [vmem:[%s228 + $0x48] sm:$0xf]
      %v270 = vld [vmem:[%s228 + $0x4c] sm:$0xf]
      %v271 = vld [vmem:[%s228 + $0x50] sm:$0xf]
      %v272 = vld [vmem:[%s228 + $0x54] sm:$0xf]
      %v273 = vld [vmem:[%s228 + $0x58] sm:$0xf]
      %v274 = vld [vmem:[%s228 + $0x5c] sm:$0xf]
      %v275 = vld [vmem:[%s228 + $0x60] sm:$0xf]
      %v276 = vld [vmem:[%s228 + $0x64] sm:$0xf]
      %v277 = vld [vmem:[%s228 + $0x68] sm:$0xf]
      %v278 = vld [vmem:[%s228 + $0x6c] sm:$0xf]
      %v279 = vld [vmem:[%s228 + $0x70] sm:$0xf]
      %v280 = vld [vmem:[%s228 + $0x74] sm:$0xf]
      %v281 = vld [vmem:[%s228 + $0x78] sm:$0xf]
      %v282 = vld [vmem:[%s228 + $0x7c] sm:$0xf]
      %v283 = vld [vmem:[%s234] sm:$0xf]
      %v284 = vld [vmem:[%s234 + $0x4] sm:$0xf]
      %v285 = vld [vmem:[%s234 + $0x8] sm:$0x1]
      %v286 = vld [vmem:[%s239] sm:$0xf]
      %v287 = vld [vmem:[%s239 + $0x4] sm:$0xf]
      %v288 = vld [vmem:[%s239 + $0x8] sm:$0x1]
      %v321 = vunpack.c.l.b16 %v251
      %v322 = vunpack.c.l.b16 %v252
      %v323 = vunpack.c.l.b16 %v253
      %v324 = vunpack.c.l.b16 %v254
      %v325 = vunpack.c.l.b16 %v255
      %v326 = vunpack.c.l.b16 %v256
      %v327 = vunpack.c.l.b16 %v257
      %v328 = vunpack.c.l.b16 %v258
      %v329 = vunpack.c.l.b16 %v259
      %v330 = vunpack.c.l.b16 %v260
      %v331 = vunpack.c.l.b16 %v261
      %v332 = vunpack.c.l.b16 %v262
      %v333 = vunpack.c.l.b16 %v263
      %v334 = vunpack.c.l.b16 %v264
      %v335 = vunpack.c.l.b16 %v265
      %v336 = vunpack.c.l.b16 %v266
      %v337 = vunpack.c.l.b16 %v267
      %v338 = vunpack.c.l.b16 %v268
      %v339 = vunpack.c.l.b16 %v269
      %v340 = vunpack.c.l.b16 %v270
      %v341 = vunpack.c.l.b16 %v271
      %v342 = vunpack.c.l.b16 %v272
      %v343 = vunpack.c.l.b16 %v273
      %v344 = vunpack.c.l.b16 %v274
      %v345 = vunpack.c.l.b16 %v275
      %v346 = vunpack.c.l.b16 %v276
      %v347 = vunpack.c.l.b16 %v277
      %v348 = vunpack.c.l.b16 %v278
      %v349 = vunpack.c.l.b16 %v279
      %v350 = vunpack.c.l.b16 %v280
      %v351 = vunpack.c.l.b16 %v281
      %v352 = vunpack.c.l.b16 %v282
      %v353 = vpack.c.b16 %v322, %v321
      %v354 = vpack.c.b16 %v324, %v323
      %v355 = vpack.c.b16 %v326, %v325
      %v356 = vpack.c.b16 %v328, %v327
      %v357 = vpack.c.b16 %v330, %v329
      %v358 = vpack.c.b16 %v332, %v331
      %v359 = vpack.c.b16 %v334, %v333
      %v360 = vpack.c.b16 %v336, %v335
      %v361 = vpack.c.b16 %v338, %v337
      %v362 = vpack.c.b16 %v340, %v339
      %v363 = vpack.c.b16 %v342, %v341
      %v364 = vpack.c.b16 %v344, %v343
      %v365 = vpack.c.b16 %v346, %v345
      %v366 = vpack.c.b16 %v348, %v347
      %v367 = vpack.c.b16 %v350, %v349
      %v368 = vpack.c.b16 %v352, %v351
      %v372 = vunpack.c.l.b16 %v283
      %v373 = vunpack.c.l.b16 %v284
      %v374 = vunpack.c.l.b16 %v285
      %v375 = vpack.c.b16 %v373, %v372
      %v376 = vpack.c.b16 %v374, %v374
      %vm377 = vcmask 130048
      %v379 = vsel %vm377, %v353, 0
      %v382 = vsel %vm377, %v354, 0
      %v385 = vsel %vm377, %v355, 0
      %v388 = vsel %vm377, %v356, 0
      %v391 = vsel %vm377, %v357, 0
      %v394 = vsel %vm377, %v358, 0
      %v397 = vsel %vm377, %v359, 0
      %v400 = vsel %vm377, %v360, 0
      %v403 = vsel %vm377, %v361, 0
      %v406 = vsel %vm377, %v362, 0
      %v409 = vsel %vm377, %v363, 0
      %v412 = vsel %vm377, %v364, 0
      %v415 = vsel %vm377, %v365, 0
      %v418 = vsel %vm377, %v366, 0
      %v421 = vsel %vm377, %v367, 0
      %v424 = vsel %vm377, %v368, 0
      %v427 = vsel %vm377, %v375, 0
      %v430 = vsel %vm377, %v376, 0
      %432 = vmatprep.subr.bf16.mxu0 0
      %433 = vmatpush1.bf16.xpose.msra.mxu0 %v427
      %434 = vmatprep.subr.bf16.mxu0 0
      %435 = vmatpush1.bf16.xpose.msra.mxu0 %v430
      %436 = vmatprep.subr.bf16.mxu0 0
      %437 = vmatpush1.bf16.xpose.msra.mxu0 0
      %438 = vmatprep.subr.bf16.mxu0 0
      %439 = vmatpush1.bf16.xpose.msra.mxu0 0
      %440 = vmatprep.subr.bf16.mxu0 0
      %441 = vmatpush1.bf16.xpose.msra.mxu0 0
      %442 = vmatprep.subr.bf16.mxu0 0
      %443 = vmatpush1.bf16.xpose.msra.mxu0 0
      %444 = vmatprep.subr.bf16.mxu0 0
      %445 = vmatpush1.bf16.xpose.msra.mxu0 0
      %446 = vmatprep.subr.bf16.mxu0 0
      %447 = vmatpush1.bf16.xpose.msra.mxu0 0
      %448 = vmatprep.subr.bf16.mxu0 0
      %449 = vmatpush1.bf16.xpose.msra.mxu0 0
      %450 = vmatprep.subr.bf16.mxu0 0
      %451 = vmatpush1.bf16.xpose.msra.mxu0 0
      %452 = vmatprep.subr.bf16.mxu0 0
      %453 = vmatpush1.bf16.xpose.msra.mxu0 0
      %454 = vmatprep.subr.bf16.mxu0 0
      %455 = vmatpush1.bf16.xpose.msra.mxu0 0
      %456 = vmatprep.subr.bf16.mxu0 0
      %457 = vmatpush1.bf16.xpose.msra.mxu0 0
      %458 = vmatprep.subr.bf16.mxu0 0
      %459 = vmatpush1.bf16.xpose.msra.mxu0 0
      %460 = vmatprep.subr.bf16.mxu0 0
      %461 = vmatpush1.bf16.xpose.msra.mxu0 0
      %462 = vmatprep.subr.bf16.mxu0 0
      %463 = vmatpush1.bf16.xpose.msra.mxu0 0
      %464 = vmatprep.mubr.bf16.mxu0 0
      %465 = vmatmul.mubr.bf16.gmra.mrb[0].mxu0 %v379
      %v466 = vpop.f32.mrb[0].mxu0
      %v467 = vadd.f32 0.0, %v466
      %v468 = vpop.f32.mrb[0].mxu0
      %v469 = vpop.f32.mrb[0].mxu0
      %v470 = vadd.f32 0.0, %v469
      %v471 = vpop.f32.mrb[0].mxu0
      %472 = vmatprep.mubr.bf16.mxu0 0
      %473 = vmatmul.mubr.bf16.gmra.mrb[0].mxu0 %v382
      %v474 = vpop.f32.mrb[0].mxu0
      %v475 = vadd.f32 0.0, %v474
      %v476 = vpop.f32.mrb[0].mxu0
      %v477 = vpop.f32.mrb[0].mxu0
      %v478 = vadd.f32 0.0, %v477
      %v479 = vpop.f32.mrb[0].mxu0
      %480 = vmatprep.mubr.bf16.mxu0 0
      %481 = vmatmul.mubr.bf16.gmra.mrb[0].mxu0 %v385
      %v482 = vpop.f32.mrb[0].mxu0
      %v483 = vadd.f32 0.0, %v482
      %v484 = vpop.f32.mrb[0].mxu0
      %v485 = vpop.f32.mrb[0].mxu0
      %v486 = vadd.f32 0.0, %v485
      %v487 = vpop.f32.mrb[0].mxu0
      %488 = vmatprep.mubr.bf16.mxu0 0
      %489 = vmatmul.mubr.bf16.gmra.mrb[0].mxu0 %v388
      %v490 = vpop.f32.mrb[0].mxu0
      %v491 = vadd.f32 0.0, %v490
      %v492 = vpop.f32.mrb[0].mxu0
      %v493 = vpop.f32.mrb[0].mxu0
      %v494 = vadd.f32 0.0, %v493
      %v495 = vpop.f32.mrb[0].mxu0
      %496 = vmatprep.mubr.bf16.mxu0 0
      %497 = vmatmul.mubr.bf16.gmra.mrb[0].mxu0 %v391
      %v498 = vpop.f32.mrb[0].mxu0
      %v499 = vadd.f32 0.0, %v498
      %v500 = vpop.f32.mrb[0].mxu0
      %v501 = vpop.f32.mrb[0].mxu0
      %v502 = vadd.f32 0.0, %v501
      %v503 = vpop.f32.mrb[0].mxu0
      %504 = vmatprep.mubr.bf16.mxu0 0
      %505 = vmatmul.mubr.bf16.gmra.mrb[0].mxu0 %v394
      %v506 = vpop.f32.mrb[0].mxu0
      %v507 = vadd.f32 0.0, %v506
      %v508 = vpop.f32.mrb[0].mxu0
      %v509 = vpop.f32.mrb[0].mxu0
      %v510 = vadd.f32 0.0, %v509
      %v511 = vpop.f32.mrb[0].mxu0
      %512 = vmatprep.mubr.bf16.mxu0 0
      %513 = vmatmul.mubr.bf16.gmra.mrb[0].mxu0 %v397
      %v514 = vpop.f32.mrb[0].mxu0
      %v515 = vadd.f32 0.0, %v514
      %v516 = vpop.f32.mrb[0].mxu0
      %v517 = vpop.f32.mrb[0].mxu0
      %v518 = vadd.f32 0.0, %v517
      %v519 = vpop.f32.mrb[0].mxu0
      %520 = vmatprep.mubr.bf16.mxu0 0
      %521 = vmatmul.mubr.bf16.gmra.mrb[0].mxu0 %v400
      %v522 = vpop.f32.mrb[0].mxu0
      %v523 = vadd.f32 0.0, %v522
      %v524 = vpop.f32.mrb[0].mxu0
      %v525 = vpop.f32.mrb[0].mxu0
      %v526 = vadd.f32 0.0, %v525
      %v527 = vpop.f32.mrb[0].mxu0
      %528 = vmatprep.mubr.bf16.mxu0 0
      %529 = vmatmul.mubr.bf16.gmra.mrb[0].mxu0 %v403
      %v530 = vpop.f32.mrb[0].mxu0
      %v531 = vadd.f32 0.0, %v530
      %v532 = vpop.f32.mrb[0].mxu0
      %v533 = vpop.f32.mrb[0].mxu0
      %v534 = vadd.f32 0.0, %v533
      %v535 = vpop.f32.mrb[0].mxu0
      %536 = vmatprep.mubr.bf16.mxu0 0
      %537 = vmatmul.mubr.bf16.gmra.mrb[0].mxu0 %v406
      %v538 = vpop.f32.mrb[0].mxu0
      %v539 = vadd.f32 0.0, %v538
      %v540 = vpop.f32.mrb[0].mxu0
      %v541 = vpop.f32.mrb[0].mxu0
      %v542 = vadd.f32 0.0, %v541
      %v543 = vpop.f32.mrb[0].mxu0
      %544 = vmatprep.mubr.bf16.mxu0 0
      %545 = vmatmul.mubr.bf16.gmra.mrb[0].mxu0 %v409
      %v546 = vpop.f32.mrb[0].mxu0
      %v547 = vadd.f32 0.0, %v546
      %v548 = vpop.f32.mrb[0].mxu0
      %v549 = vpop.f32.mrb[0].mxu0
      %v550 = vadd.f32 0.0, %v549
      %v551 = vpop.f32.mrb[0].mxu0
      %552 = vmatprep.mubr.bf16.mxu0 0
      %553 = vmatmul.mubr.bf16.gmra.mrb[0].mxu0 %v412
      %v554 = vpop.f32.mrb[0].mxu0
      %v555 = vadd.f32 0.0, %v554
      %v556 = vpop.f32.mrb[0].mxu0
      %v557 = vpop.f32.mrb[0].mxu0
      %v558 = vadd.f32 0.0, %v557
      %v559 = vpop.f32.mrb[0].mxu0
      %560 = vmatprep.mubr.bf16.mxu0 0
      %561 = vmatmul.mubr.bf16.gmra.mrb[0].mxu0 %v415
      %v562 = vpop.f32.mrb[0].mxu0
      %v563 = vadd.f32 0.0, %v562
      %v564 = vpop.f32.mrb[0].mxu0
      %v565 = vpop.f32.mrb[0].mxu0
      %v566 = vadd.f32 0.0, %v565
      %v567 = vpop.f32.mrb[0].mxu0
      %568 = vmatprep.mubr.bf16.mxu0 0
      %569 = vmatmul.mubr.bf16.gmra.mrb[0].mxu0 %v418
      %v570 = vpop.f32.mrb[0].mxu0
      %v571 = vadd.f32 0.0, %v570
      %v572 = vpop.f32.mrb[0].mxu0
      %v573 = vpop.f32.mrb[0].mxu0
      %v574 = vadd.f32 0.0, %v573
      %v575 = vpop.f32.mrb[0].mxu0
      %576 = vmatprep.mubr.bf16.mxu0 0
      %577 = vmatmul.mubr.bf16.gmra.mrb[0].mxu0 %v421
      %v578 = vpop.f32.mrb[0].mxu0
      %v579 = vadd.f32 0.0, %v578
      %v580 = vpop.f32.mrb[0].mxu0
      %v581 = vpop.f32.mrb[0].mxu0
      %v582 = vadd.f32 0.0, %v581
      %v583 = vpop.f32.mrb[0].mxu0
      %584 = vmatprep.mubr.bf16.mxu0 0
      %585 = vmatmul.mubr.bf16.gmra.mrb[0].mxu0 %v424
      %v586 = vpop.f32.mrb[0].mxu0
      %v587 = vadd.f32 0.0, %v586
      %v588 = vpop.f32.mrb[0].mxu0
      %v589 = vpop.f32.mrb[0].mxu0
      %v590 = vadd.f32 0.0, %v589
      %v591 = vpop.f32.mrb[0].mxu0
      %592 = vdwg.mxu0
      %vm593 = vcmask 146432
      %v594 = vsel %vm593, %v467, -inf
      %595 = vmax.xlane.f32.xlu0 %v594
      %v596 = vpop.xlane.xlu0 %595
      %v597 = vsel %vm593, %v470, -inf
      %598 = vmax.xlane.f32.xlu0 %v597
      %v599 = vpop.xlane.xlu0 %598
      %v600 = vsel %vm593, %v475, -inf
      %601 = vmax.xlane.f32.xlu0 %v600
      %v602 = vpop.xlane.xlu0 %601
      %v603 = vsel %vm593, %v478, -inf
      %604 = vmax.xlane.f32.xlu0 %v603
      %v605 = vpop.xlane.xlu0 %604
      %v606 = vsel %vm593, %v483, -inf
      %607 = vmax.xlane.f32.xlu0 %v606
      %v608 = vpop.xlane.xlu0 %607
      %v609 = vsel %vm593, %v486, -inf
      %610 = vmax.xlane.f32.xlu0 %v609
      %v611 = vpop.xlane.xlu0 %610
      %v612 = vsel %vm593, %v491, -inf
      %613 = vmax.xlane.f32.xlu0 %v612
      %v614 = vpop.xlane.xlu0 %613
      %v615 = vsel %vm593, %v494, -inf
      %616 = vmax.xlane.f32.xlu0 %v615
      %v617 = vpop.xlane.xlu0 %616
      %v618 = vsel %vm593, %v499, -inf
      %619 = vmax.xlane.f32.xlu0 %v618
      %v620 = vpop.xlane.xlu0 %619
      %v621 = vsel %vm593, %v502, -inf
      %622 = vmax.xlane.f32.xlu0 %v621
      %v623 = vpop.xlane.xlu0 %622
      %v624 = vsel %vm593, %v507, -inf
      %625 = vmax.xlane.f32.xlu0 %v624
      %v626 = vpop.xlane.xlu0 %625
      %v627 = vsel %vm593, %v510, -inf
      %628 = vmax.xlane.f32.xlu0 %v627
      %v629 = vpop.xlane.xlu0 %628
      %v630 = vsel %vm593, %v515, -inf
      %631 = vmax.xlane.f32.xlu0 %v630
      %v632 = vpop.xlane.xlu0 %631
      %v633 = vsel %vm593, %v518, -inf
      %634 = vmax.xlane.f32.xlu0 %v633
      %v635 = vpop.xlane.xlu0 %634
      %v636 = vsel %vm593, %v523, -inf
      %637 = vmax.xlane.f32.xlu0 %v636
      %v638 = vpop.xlane.xlu0 %637
      %v639 = vsel %vm593, %v526, -inf
      %640 = vmax.xlane.f32.xlu0 %v639
      %v641 = vpop.xlane.xlu0 %640
      %v642 = vsel %vm593, %v531, -inf
      %643 = vmax.xlane.f32.xlu0 %v642
      %v644 = vpop.xlane.xlu0 %643
      %v645 = vsel %vm593, %v534, -inf
      %646 = vmax.xlane.f32.xlu0 %v645
      %v647 = vpop.xlane.xlu0 %646
      %v648 = vsel %vm593, %v539, -inf
      %649 = vmax.xlane.f32.xlu0 %v648
      %v650 = vpop.xlane.xlu0 %649
      %v651 = vsel %vm593, %v542, -inf
      %652 = vmax.xlane.f32.xlu0 %v651
      %v653 = vpop.xlane.xlu0 %652
      %v654 = vsel %vm593, %v547, -inf
      %655 = vmax.xlane.f32.xlu0 %v654
      %v656 = vpop.xlane.xlu0 %655
      %v657 = vsel %vm593, %v550, -inf
      %658 = vmax.xlane.f32.xlu0 %v657
      %v659 = vpop.xlane.xlu0 %658
      %v660 = vsel %vm593, %v555, -inf
      %661 = vmax.xlane.f32.xlu0 %v660
      %v662 = vpop.xlane.xlu0 %661
      %v663 = vsel %vm593, %v558, -inf
      %664 = vmax.xlane.f32.xlu0 %v663
      %v665 = vpop.xlane.xlu0 %664
      %v666 = vsel %vm593, %v563, -inf
      %667 = vmax.xlane.f32.xlu0 %v666
      %v668 = vpop.xlane.xlu0 %667
      %v669 = vsel %vm593, %v566, -inf
      %670 = vmax.xlane.f32.xlu0 %v669
      %v671 = vpop.xlane.xlu0 %670
      %v672 = vsel %vm593, %v571, -inf
      %673 = vmax.xlane.f32.xlu0 %v672
      %v674 = vpop.xlane.xlu0 %673
      %v675 = vsel %vm593, %v574, -inf
      %676 = vmax.xlane.f32.xlu0 %v675
      %v677 = vpop.xlane.xlu0 %676
      %v678 = vsel %vm593, %v579, -inf
      %679 = vmax.xlane.f32.xlu0 %v678
      %v680 = vpop.xlane.xlu0 %679
      %v681 = vsel %vm593, %v582, -inf
      %682 = vmax.xlane.f32.xlu0 %v681
      %v683 = vpop.xlane.xlu0 %682
      %v684 = vsel %vm593, %v587, -inf
      %685 = vmax.xlane.f32.xlu0 %v684
      %v686 = vpop.xlane.xlu0 %685
      %v687 = vsel %vm593, %v590, -inf
      %688 = vmax.xlane.f32.xlu0 %v687
      %v689 = vpop.xlane.xlu0 %688
      %v690 = vsub.f32 %v467, %v596
      %v691 = vsub.f32 %v470, %v599
      %v692 = vsub.f32 %v475, %v602
      %v693 = vsub.f32 %v478, %v605
      %v694 = vsub.f32 %v483, %v608
      %v695 = vsub.f32 %v486, %v611
      %v696 = vsub.f32 %v491, %v614
      %v697 = vsub.f32 %v494, %v617
      %v698 = vsub.f32 %v499, %v620
      %v699 = vsub.f32 %v502, %v623
      %v700 = vsub.f32 %v507, %v626
      %v701 = vsub.f32 %v510, %v629
      %v702 = vsub.f32 %v515, %v632
      %v703 = vsub.f32 %v518, %v635
      %v704 = vsub.f32 %v523, %v638
      %v705 = vsub.f32 %v526, %v641
      %v706 = vsub.f32 %v531, %v644
      %v707 = vsub.f32 %v534, %v647
      %v708 = vsub.f32 %v539, %v650
      %v709 = vsub.f32 %v542, %v653
      %v710 = vsub.f32 %v547, %v656
      %v711 = vsub.f32 %v550, %v659
      %v712 = vsub.f32 %v555, %v662
      %v713 = vsub.f32 %v558, %v665
      %v714 = vsub.f32 %v563, %v668
      %v715 = vsub.f32 %v566, %v671
      %v716 = vsub.f32 %v571, %v674
      %v717 = vsub.f32 %v574, %v677
      %v718 = vsub.f32 %v579, %v680
      %v719 = vsub.f32 %v582, %v683
      %v720 = vsub.f32 %v587, %v686
      %v721 = vsub.f32 %v590, %v689
      %v722 = vmul.f32 %v690, 1.442695
      %v723 = vpow.pop %v722
      %v724 = vmul.f32 %v691, 1.442695
      %v725 = vpow.pop %v724
      %v726 = vmul.f32 %v692, 1.442695
      %v727 = vpow.pop %v726
      %v728 = vmul.f32 %v693, 1.442695
      %v729 = vpow.pop %v728
      %v730 = vmul.f32 %v694, 1.442695
      %v731 = vpow.pop %v730
      %v732 = vmul.f32 %v695, 1.442695
      %v733 = vpow.pop %v732
      %v734 = vmul.f32 %v696, 1.442695
      %v735 = vpow.pop %v734
      %v736 = vmul.f32 %v697, 1.442695
      %v737 = vpow.pop %v736
      %v738 = vmul.f32 %v698, 1.442695
      %v739 = vpow.pop %v738
      %v740 = vmul.f32 %v699, 1.442695
      %v741 = vpow.pop %v740
      %v742 = vmul.f32 %v700, 1.442695
      %v743 = vpow.pop %v742
      %v744 = vmul.f32 %v701, 1.442695
      %v745 = vpow.pop %v744
      %v746 = vmul.f32 %v702, 1.442695
      %v747 = vpow.pop %v746
      %v748 = vmul.f32 %v703, 1.442695
      %v749 = vpow.pop %v748
      %v750 = vmul.f32 %v704, 1.442695
      %v751 = vpow.pop %v750
      %v752 = vmul.f32 %v705, 1.442695
      %v753 = vpow.pop %v752
      %v754 = vmul.f32 %v706, 1.442695
      %v755 = vpow.pop %v754
      %v756 = vmul.f32 %v707, 1.442695
      %v757 = vpow.pop %v756
      %v758 = vmul.f32 %v708, 1.442695
      %v759 = vpow.pop %v758
      %v760 = vmul.f32 %v709, 1.442695
      %v761 = vpow.pop %v760
      %v762 = vmul.f32 %v710, 1.442695
      %v763 = vpow.pop %v762
      %v764 = vmul.f32 %v711, 1.442695
      %v765 = vpow.pop %v764
      %v766 = vmul.f32 %v712, 1.442695
      %v767 = vpow.pop %v766
      %v768 = vmul.f32 %v713, 1.442695
      %v769 = vpow.pop %v768
      %v770 = vmul.f32 %v714, 1.442695
      %v771 = vpow.pop %v770
      %v772 = vmul.f32 %v715, 1.442695
      %v773 = vpow.pop %v772
      %v774 = vmul.f32 %v716, 1.442695
      %v775 = vpow.pop %v774
      %v776 = vmul.f32 %v717, 1.442695
      %v777 = vpow.pop %v776
      %v778 = vmul.f32 %v718, 1.442695
      %v779 = vpow.pop %v778
      %v780 = vmul.f32 %v719, 1.442695
      %v781 = vpow.pop %v780
      %v782 = vmul.f32 %v720, 1.442695
      %v783 = vpow.pop %v782
      %v784 = vmul.f32 %v721, 1.442695
      %v785 = vpow.pop %v784
      %v786 = vsel %vm593, %v723, 0.0
      %787 = vadd.xlane.f32.xlu0 %v786
      %v788 = vpop.xlane.xlu0 %787
      %v789 = vsel %vm593, %v725, 0.0
      %790 = vadd.xlane.f32.xlu0 %v789
      %v791 = vpop.xlane.xlu0 %790
      %v792 = vsel %vm593, %v727, 0.0
      %793 = vadd.xlane.f32.xlu0 %v792
      %v794 = vpop.xlane.xlu0 %793
      %v795 = vsel %vm593, %v729, 0.0
      %796 = vadd.xlane.f32.xlu0 %v795
      %v797 = vpop.xlane.xlu0 %796
      %v798 = vsel %vm593, %v731, 0.0
      %799 = vadd.xlane.f32.xlu0 %v798
      %v800 = vpop.xlane.xlu0 %799
      %v801 = vsel %vm593, %v733, 0.0
      %802 = vadd.xlane.f32.xlu0 %v801
      %v803 = vpop.xlane.xlu0 %802
      %v804 = vsel %vm593, %v735, 0.0
      %805 = vadd.xlane.f32.xlu0 %v804
      %v806 = vpop.xlane.xlu0 %805
      %v807 = vsel %vm593, %v737, 0.0
      %808 = vadd.xlane.f32.xlu0 %v807
      %v809 = vpop.xlane.xlu0 %808
      %v810 = vsel %vm593, %v739, 0.0
      %811 = vadd.xlane.f32.xlu0 %v810
      %v812 = vpop.xlane.xlu0 %811
      %v813 = vsel %vm593, %v741, 0.0
      %814 = vadd.xlane.f32.xlu0 %v813
      %v815 = vpop.xlane.xlu0 %814
      %v816 = vsel %vm593, %v743, 0.0
      %817 = vadd.xlane.f32.xlu0 %v816
      %v818 = vpop.xlane.xlu0 %817
      %v819 = vsel %vm593, %v745, 0.0
      %820 = vadd.xlane.f32.xlu0 %v819
      %v821 = vpop.xlane.xlu0 %820
      %v822 = vsel %vm593, %v747, 0.0
      %823 = vadd.xlane.f32.xlu0 %v822
      %v824 = vpop.xlane.xlu0 %823
      %v825 = vsel %vm593, %v749, 0.0
      %826 = vadd.xlane.f32.xlu0 %v825
      %v827 = vpop.xlane.xlu0 %826
      %v828 = vsel %vm593, %v751, 0.0
      %829 = vadd.xlane.f32.xlu0 %v828
      %v830 = vpop.xlane.xlu0 %829
      %v831 = vsel %vm593, %v753, 0.0
      %832 = vadd.xlane.f32.xlu0 %v831
      %v833 = vpop.xlane.xlu0 %832
      %v834 = vsel %vm593, %v755, 0.0
      %835 = vadd.xlane.f32.xlu0 %v834
      %v836 = vpop.xlane.xlu0 %835
      %v837 = vsel %vm593, %v757, 0.0
      %838 = vadd.xlane.f32.xlu0 %v837
      %v839 = vpop.xlane.xlu0 %838
      %v840 = vsel %vm593, %v759, 0.0
      %841 = vadd.xlane.f32.xlu0 %v840
      %v842 = vpop.xlane.xlu0 %841
      %v843 = vsel %vm593, %v761, 0.0
      %844 = vadd.xlane.f32.xlu0 %v843
      %v845 = vpop.xlane.xlu0 %844
      %v846 = vsel %vm593, %v763, 0.0
      %847 = vadd.xlane.f32.xlu0 %v846
      %v848 = vpop.xlane.xlu0 %847
      %v849 = vsel %vm593, %v765, 0.0
      %850 = vadd.xlane.f32.xlu0 %v849
      %v851 = vpop.xlane.xlu0 %850
      %v852 = vsel %vm593, %v767, 0.0
      %853 = vadd.xlane.f32.xlu0 %v852
      %v854 = vpop.xlane.xlu0 %853
      %v855 = vsel %vm593, %v769, 0.0
      %856 = vadd.xlane.f32.xlu0 %v855
      %v857 = vpop.xlane.xlu0 %856
      %v858 = vsel %vm593, %v771, 0.0
      %859 = vadd.xlane.f32.xlu0 %v858
      %v860 = vpop.xlane.xlu0 %859
      %v861 = vsel %vm593, %v773, 0.0
      %862 = vadd.xlane.f32.xlu0 %v861
      %v863 = vpop.xlane.xlu0 %862
      %v864 = vsel %vm593, %v775, 0.0
      %865 = vadd.xlane.f32.xlu0 %v864
      %v866 = vpop.xlane.xlu0 %865
      %v867 = vsel %vm593, %v777, 0.0
      %868 = vadd.xlane.f32.xlu0 %v867
      %v869 = vpop.xlane.xlu0 %868
      %v870 = vsel %vm593, %v779, 0.0
      %871 = vadd.xlane.f32.xlu0 %v870
      %v872 = vpop.xlane.xlu0 %871
      %v873 = vsel %vm593, %v781, 0.0
      %874 = vadd.xlane.f32.xlu0 %v873
      %v875 = vpop.xlane.xlu0 %874
      %v876 = vsel %vm593, %v783, 0.0
      %877 = vadd.xlane.f32.xlu0 %v876
      %v878 = vpop.xlane.xlu0 %877
      %v879 = vsel %vm593, %v785, 0.0
      %880 = vadd.xlane.f32.xlu0 %v879
      %v881 = vpop.xlane.xlu0 %880
      %v882 = vrcp.pop %v788
      %v883 = vrcp.pop %v791
      %v884 = vrcp.pop %v794
      %v885 = vrcp.pop %v797
      %v886 = vrcp.pop %v800
      %v887 = vrcp.pop %v803
      %v888 = vrcp.pop %v806
      %v889 = vrcp.pop %v809
      %v890 = vrcp.pop %v812
      %v891 = vrcp.pop %v815
      %v892 = vrcp.pop %v818
      %v893 = vrcp.pop %v821
      %v894 = vrcp.pop %v824
      %v895 = vrcp.pop %v827
      %v896 = vrcp.pop %v830
      %v897 = vrcp.pop %v833
      %v898 = vrcp.pop %v836
      %v899 = vrcp.pop %v839
      %v900 = vrcp.pop %v842
      %v901 = vrcp.pop %v845
      %v902 = vrcp.pop %v848
      %v903 = vrcp.pop %v851
      %v904 = vrcp.pop %v854
      %v905 = vrcp.pop %v857
      %v906 = vrcp.pop %v860
      %v907 = vrcp.pop %v863
      %v908 = vrcp.pop %v866
      %v909 = vrcp.pop %v869
      %v910 = vrcp.pop %v872
      %v911 = vrcp.pop %v875
      %v912 = vrcp.pop %v878
      %v913 = vrcp.pop %v881
      %v914 = vmul.f32 %v723, %v882
      %v915 = vmul.f32 %v725, %v883
      %v916 = vmul.f32 %v727, %v884
      %v917 = vmul.f32 %v729, %v885
      %v918 = vmul.f32 %v731, %v886
      %v919 = vmul.f32 %v733, %v887
      %v920 = vmul.f32 %v735, %v888
      %v921 = vmul.f32 %v737, %v889
      %v922 = vmul.f32 %v739, %v890
      %v923 = vmul.f32 %v741, %v891
      %v924 = vmul.f32 %v743, %v892
      %v925 = vmul.f32 %v745, %v893
      %v926 = vmul.f32 %v747, %v894
      %v927 = vmul.f32 %v749, %v895
      %v928 = vmul.f32 %v751, %v896
      %v929 = vmul.f32 %v753, %v897
      %v930 = vmul.f32 %v755, %v898
      %v931 = vmul.f32 %v757, %v899
      %v932 = vmul.f32 %v759, %v900
      %v933 = vmul.f32 %v761, %v901
      %v934 = vmul.f32 %v763, %v902
      %v935 = vmul.f32 %v765, %v903
      %v936 = vmul.f32 %v767, %v904
      %v937 = vmul.f32 %v769, %v905
      %v938 = vmul.f32 %v771, %v906
      %v939 = vmul.f32 %v773, %v907
      %v940 = vmul.f32 %v775, %v908
      %v941 = vmul.f32 %v777, %v909
      %v942 = vmul.f32 %v779, %v910
      %v943 = vmul.f32 %v781, %v911
      %v944 = vmul.f32 %v783, %v912
      %v945 = vmul.f32 %v785, %v913
      %v946 = vpack.c.bf16 %v915, %v914
      %v947 = vpack.c.bf16 %v917, %v916
      %v948 = vpack.c.bf16 %v919, %v918
      %v949 = vpack.c.bf16 %v921, %v920
      %v950 = vpack.c.bf16 %v923, %v922
      %v951 = vpack.c.bf16 %v925, %v924
      %v952 = vpack.c.bf16 %v927, %v926
      %v953 = vpack.c.bf16 %v929, %v928
      %v954 = vpack.c.bf16 %v931, %v930
      %v955 = vpack.c.bf16 %v933, %v932
      %v956 = vpack.c.bf16 %v935, %v934
      %v957 = vpack.c.bf16 %v937, %v936
      %v958 = vpack.c.bf16 %v939, %v938
      %v959 = vpack.c.bf16 %v941, %v940
      %v960 = vpack.c.bf16 %v943, %v942
      %v961 = vpack.c.bf16 %v945, %v944
      %v965 = vunpack.c.l.b16 %v286
      %v966 = vunpack.c.l.b16 %v287
      %v967 = vunpack.c.l.b16 %v288
      %v968 = vpack.c.b16 %v966, %v965
      %v969 = vpack.c.b16 %v967, %v967
      %v972 = vsel %vm593, %v946, 0
      %v975 = vsel %vm593, %v947, 0
      %v978 = vsel %vm593, %v948, 0
      %v981 = vsel %vm593, %v949, 0
      %v984 = vsel %vm593, %v950, 0
      %v987 = vsel %vm593, %v951, 0
      %v990 = vsel %vm593, %v952, 0
      %v993 = vsel %vm593, %v953, 0
      %v996 = vsel %vm593, %v954, 0
      %v999 = vsel %vm593, %v955, 0
      %v1002 = vsel %vm593, %v956, 0
      %v1005 = vsel %vm593, %v957, 0
      %v1008 = vsel %vm593, %v958, 0
      %v1011 = vsel %vm593, %v959, 0
      %v1014 = vsel %vm593, %v960, 0
      %v1017 = vsel %vm593, %v961, 0
      %vm1019 = vcmask 1040384
      %v1021 = vsel %vm1019, %v969, 0
      %1023 = vmatprep.subr.bf16.mxu0 0
      %1024 = vmatpush1.bf16.msra.mxu0 %v968
      %1025 = vmatprep.subr.bf16.mxu0 0
      %1026 = vmatpush1.bf16.msra.mxu0 %v1021
      %1027 = vmatprep.subr.bf16.mxu0 0
      %1028 = vmatpush1.bf16.msra.mxu0 0
      %1029 = vmatprep.subr.bf16.mxu0 0
      %1030 = vmatpush1.bf16.msra.mxu0 0
      %1031 = vmatprep.subr.bf16.mxu0 0
      %1032 = vmatpush1.bf16.msra.mxu0 0
      %1033 = vmatprep.subr.bf16.mxu0 0
      %1034 = vmatpush1.bf16.msra.mxu0 0
      %1035 = vmatprep.subr.bf16.mxu0 0
      %1036 = vmatpush1.bf16.msra.mxu0 0
      %1037 = vmatprep.subr.bf16.mxu0 0
      %1038 = vmatpush1.bf16.msra.mxu0 0
      %1039 = vmatprep.subr.bf16.mxu0 0
      %1040 = vmatpush1.bf16.msra.mxu0 0
      %1041 = vmatprep.subr.bf16.mxu0 0
      %1042 = vmatpush1.bf16.msra.mxu0 0
      %1043 = vmatprep.subr.bf16.mxu0 0
      %1044 = vmatpush1.bf16.msra.mxu0 0
      %1045 = vmatprep.subr.bf16.mxu0 0
      %1046 = vmatpush1.bf16.msra.mxu0 0
      %1047 = vmatprep.subr.bf16.mxu0 0
      %1048 = vmatpush1.bf16.msra.mxu0 0
      %1049 = vmatprep.subr.bf16.mxu0 0
      %1050 = vmatpush1.bf16.msra.mxu0 0
      %1051 = vmatprep.subr.bf16.mxu0 0
      %1052 = vmatpush1.bf16.msra.mxu0 0
      %1053 = vmatprep.subr.bf16.mxu0 0
      %1054 = vmatpush1.bf16.msra.mxu0 0
      %1055 = vmatprep.mubr.bf16.mxu0 0
      %1056 = vmatmul.mubr.bf16.gmra.mrb[0].mxu0 %v972
      %v1057 = vpop.f32.mrb[0].mxu0
      %v1058 = vadd.f32 0.0, %v1057
      %v1059 = vpop.f32.mrb[0].mxu0
      %v1060 = vpop.f32.mrb[0].mxu0
      %v1061 = vadd.f32 0.0, %v1060
      %v1062 = vpop.f32.mrb[0].mxu0
      %1063 = vmatprep.mubr.bf16.mxu0 0
      %1064 = vmatmul.mubr.bf16.gmra.mrb[0].mxu0 %v975
      %v1065 = vpop.f32.mrb[0].mxu0
      %v1066 = vadd.f32 0.0, %v1065
      %v1067 = vpop.f32.mrb[0].mxu0
      %v1068 = vpop.f32.mrb[0].mxu0
      %v1069 = vadd.f32 0.0, %v1068
      %v1070 = vpop.f32.mrb[0].mxu0
      %1071 = vmatprep.mubr.bf16.mxu0 0
      %1072 = vmatmul.mubr.bf16.gmra.mrb[0].mxu0 %v978
      %v1073 = vpop.f32.mrb[0].mxu0
      %v1074 = vadd.f32 0.0, %v1073
      %v1075 = vpop.f32.mrb[0].mxu0
      %v1076 = vpop.f32.mrb[0].mxu0
      %v1077 = vadd.f32 0.0, %v1076
      %v1078 = vpop.f32.mrb[0].mxu0
      %1079 = vmatprep.mubr.bf16.mxu0 0
      %1080 = vmatmul.mubr.bf16.gmra.mrb[0].mxu0 %v981
      %v1081 = vpop.f32.mrb[0].mxu0
      %v1082 = vadd.f32 0.0, %v1081
      %v1083 = vpop.f32.mrb[0].mxu0
      %v1084 = vpop.f32.mrb[0].mxu0
      %v1085 = vadd.f32 0.0, %v1084
      %v1086 = vpop.f32.mrb[0].mxu0
      %1087 = vmatprep.mubr.bf16.mxu0 0
      %1088 = vmatmul.mubr.bf16.gmra.mrb[0].mxu0 %v984
      %v1089 = vpop.f32.mrb[0].mxu0
      %v1090 = vadd.f32 0.0, %v1089
      %v1091 = vpop.f32.mrb[0].mxu0
      %v1092 = vpop.f32.mrb[0].mxu0
      %v1093 = vadd.f32 0.0, %v1092
      %v1094 = vpop.f32.mrb[0].mxu0
      %1095 = vmatprep.mubr.bf16.mxu0 0
      %1096 = vmatmul.mubr.bf16.gmra.mrb[0].mxu0 %v987
      %v1097 = vpop.f32.mrb[0].mxu0
      %v1098 = vadd.f32 0.0, %v1097
      %v1099 = vpop.f32.mrb[0].mxu0
      %v1100 = vpop.f32.mrb[0].mxu0
      %v1101 = vadd.f32 0.0, %v1100
      %v1102 = vpop.f32.mrb[0].mxu0
      %1103 = vmatprep.mubr.bf16.mxu0 0
      %1104 = vmatmul.mubr.bf16.gmra.mrb[0].mxu0 %v990
      %v1105 = vpop.f32.mrb[0].mxu0
      %v1106 = vadd.f32 0.0, %v1105
      %v1107 = vpop.f32.mrb[0].mxu0
      %v1108 = vpop.f32.mrb[0].mxu0
      %v1109 = vadd.f32 0.0, %v1108
      %v1110 = vpop.f32.mrb[0].mxu0
      %1111 = vmatprep.mubr.bf16.mxu0 0
      %1112 = vmatmul.mubr.bf16.gmra.mrb[0].mxu0 %v993
      %v1113 = vpop.f32.mrb[0].mxu0
      %v1114 = vadd.f32 0.0, %v1113
      %v1115 = vpop.f32.mrb[0].mxu0
      %v1116 = vpop.f32.mrb[0].mxu0
      %v1117 = vadd.f32 0.0, %v1116
      %v1118 = vpop.f32.mrb[0].mxu0
      %1119 = vmatprep.mubr.bf16.mxu0 0
      %1120 = vmatmul.mubr.bf16.gmra.mrb[0].mxu0 %v996
      %v1121 = vpop.f32.mrb[0].mxu0
      %v1122 = vadd.f32 0.0, %v1121
      %v1123 = vpop.f32.mrb[0].mxu0
      %v1124 = vpop.f32.mrb[0].mxu0
      %v1125 = vadd.f32 0.0, %v1124
      %v1126 = vpop.f32.mrb[0].mxu0
      %1127 = vmatprep.mubr.bf16.mxu0 0
      %1128 = vmatmul.mubr.bf16.gmra.mrb[0].mxu0 %v999
      %v1129 = vpop.f32.mrb[0].mxu0
      %v1130 = vadd.f32 0.0, %v1129
      %v1131 = vpop.f32.mrb[0].mxu0
      %v1132 = vpop.f32.mrb[0].mxu0
      %v1133 = vadd.f32 0.0, %v1132
      %v1134 = vpop.f32.mrb[0].mxu0
      %1135 = vmatprep.mubr.bf16.mxu0 0
      %1136 = vmatmul.mubr.bf16.gmra.mrb[0].mxu0 %v1002
      %v1137 = vpop.f32.mrb[0].mxu0
      %v1138 = vadd.f32 0.0, %v1137
      %v1139 = vpop.f32.mrb[0].mxu0
      %v1140 = vpop.f32.mrb[0].mxu0
      %v1141 = vadd.f32 0.0, %v1140
      %v1142 = vpop.f32.mrb[0].mxu0
      %1143 = vmatprep.mubr.bf16.mxu0 0
      %1144 = vmatmul.mubr.bf16.gmra.mrb[0].mxu0 %v1005
      %v1145 = vpop.f32.mrb[0].mxu0
      %v1146 = vadd.f32 0.0, %v1145
      %v1147 = vpop.f32.mrb[0].mxu0
      %v1148 = vpop.f32.mrb[0].mxu0
      %v1149 = vadd.f32 0.0, %v1148
      %v1150 = vpop.f32.mrb[0].mxu0
      %1151 = vmatprep.mubr.bf16.mxu0 0
      %1152 = vmatmul.mubr.bf16.gmra.mrb[0].mxu0 %v1008
      %v1153 = vpop.f32.mrb[0].mxu0
      %v1154 = vadd.f32 0.0, %v1153
      %v1155 = vpop.f32.mrb[0].mxu0
      %v1156 = vpop.f32.mrb[0].mxu0
      %v1157 = vadd.f32 0.0, %v1156
      %v1158 = vpop.f32.mrb[0].mxu0
      %1159 = vmatprep.mubr.bf16.mxu0 0
      %1160 = vmatmul.mubr.bf16.gmra.mrb[0].mxu0 %v1011
      %v1161 = vpop.f32.mrb[0].mxu0
      %v1162 = vadd.f32 0.0, %v1161
      %v1163 = vpop.f32.mrb[0].mxu0
      %v1164 = vpop.f32.mrb[0].mxu0
      %v1165 = vadd.f32 0.0, %v1164
      %v1166 = vpop.f32.mrb[0].mxu0
      %1167 = vmatprep.mubr.bf16.mxu0 0
      %1168 = vmatmul.mubr.bf16.gmra.mrb[0].mxu0 %v1014
      %v1169 = vpop.f32.mrb[0].mxu0
      %v1170 = vadd.f32 0.0, %v1169
      %v1171 = vpop.f32.mrb[0].mxu0
      %v1172 = vpop.f32.mrb[0].mxu0
      %v1173 = vadd.f32 0.0, %v1172
      %v1174 = vpop.f32.mrb[0].mxu0
      %1175 = vmatprep.mubr.bf16.mxu0 0
      %1176 = vmatmul.mubr.bf16.gmra.mrb[0].mxu0 %v1017
      %v1177 = vpop.f32.mrb[0].mxu0
      %v1178 = vadd.f32 0.0, %v1177
      %v1179 = vpop.f32.mrb[0].mxu0
      %v1180 = vpop.f32.mrb[0].mxu0
      %v1181 = vadd.f32 0.0, %v1180
      %v1182 = vpop.f32.mrb[0].mxu0
      %1183 = vdwg.mxu0
      %v1184 = vpack.c.bf16 %v1061, %v1058
      %v1185 = vpack.c.bf16 %v1069, %v1066
      %v1186 = vpack.c.bf16 %v1077, %v1074
      %v1187 = vpack.c.bf16 %v1085, %v1082
      %v1188 = vpack.c.bf16 %v1093, %v1090
      %v1189 = vpack.c.bf16 %v1101, %v1098
      %v1190 = vpack.c.bf16 %v1109, %v1106
      %v1191 = vpack.c.bf16 %v1117, %v1114
      %v1192 = vpack.c.bf16 %v1125, %v1122
      %v1193 = vpack.c.bf16 %v1133, %v1130
      %v1194 = vpack.c.bf16 %v1141, %v1138
      %v1195 = vpack.c.bf16 %v1149, %v1146
      %v1196 = vpack.c.bf16 %v1157, %v1154
      %v1197 = vpack.c.bf16 %v1165, %v1162
      %v1198 = vpack.c.bf16 %v1173, %v1170
      %v1199 = vpack.c.bf16 %v1181, %v1178
      %v1216 = vunpack.c.l.b16 %v1184
      %v1217 = vunpack.c.h.b16 %v1184
      %v1218 = vunpack.c.l.b16 %v1185
      %v1219 = vunpack.c.h.b16 %v1185
      %v1220 = vunpack.c.l.b16 %v1186
      %v1221 = vunpack.c.h.b16 %v1186
      %v1222 = vunpack.c.l.b16 %v1187
      %v1223 = vunpack.c.h.b16 %v1187
      %v1224 = vunpack.c.l.b16 %v1188
      %v1225 = vunpack.c.h.b16 %v1188
      %v1226 = vunpack.c.l.b16 %v1189
      %v1227 = vunpack.c.h.b16 %v1189
      %v1228 = vunpack.c.l.b16 %v1190
      %v1229 = vunpack.c.h.b16 %v1190
      %v1230 = vunpack.c.l.b16 %v1191
      %v1231 = vunpack.c.h.b16 %v1191
      %v1232 = vunpack.c.l.b16 %v1192
      %v1233 = vunpack.c.h.b16 %v1192
      %v1234 = vunpack.c.l.b16 %v1193
      %v1235 = vunpack.c.h.b16 %v1193
      %v1236 = vunpack.c.l.b16 %v1194
      %v1237 = vunpack.c.h.b16 %v1194
      %v1238 = vunpack.c.l.b16 %v1195
      %v1239 = vunpack.c.h.b16 %v1195
      %v1240 = vunpack.c.l.b16 %v1196
      %v1241 = vunpack.c.h.b16 %v1196
      %v1242 = vunpack.c.l.b16 %v1197
      %v1243 = vunpack.c.h.b16 %v1197
      %v1244 = vunpack.c.l.b16 %v1198
      %v1245 = vunpack.c.h.b16 %v1198
      %v1246 = vunpack.c.l.b16 %v1199
      %v1247 = vunpack.c.h.b16 %v1199
      %v1248 = vpack.c.b16 %v1216, %v1216
      %v1249 = vpack.c.b16 %v1217, %v1217
      %v1250 = vpack.c.b16 %v1218, %v1218
      %v1251 = vpack.c.b16 %v1219, %v1219
      %v1252 = vpack.c.b16 %v1220, %v1220
      %v1253 = vpack.c.b16 %v1221, %v1221
      %v1254 = vpack.c.b16 %v1222, %v1222
      %v1255 = vpack.c.b16 %v1223, %v1223
      %v1256 = vpack.c.b16 %v1224, %v1224
      %v1257 = vpack.c.b16 %v1225, %v1225
      %v1258 = vpack.c.b16 %v1226, %v1226
      %v1259 = vpack.c.b16 %v1227, %v1227
      %v1260 = vpack.c.b16 %v1228, %v1228
      %v1261 = vpack.c.b16 %v1229, %v1229
      %v1262 = vpack.c.b16 %v1230, %v1230
      %v1263 = vpack.c.b16 %v1231, %v1231
      %v1264 = vpack.c.b16 %v1232, %v1232
      %v1265 = vpack.c.b16 %v1233, %v1233
      %v1266 = vpack.c.b16 %v1234, %v1234
      %v1267 = vpack.c.b16 %v1235, %v1235
      %v1268 = vpack.c.b16 %v1236, %v1236
      %v1269 = vpack.c.b16 %v1237, %v1237
      %v1270 = vpack.c.b16 %v1238, %v1238
      %v1271 = vpack.c.b16 %v1239, %v1239
      %v1272 = vpack.c.b16 %v1240, %v1240
      %v1273 = vpack.c.b16 %v1241, %v1241
      %v1274 = vpack.c.b16 %v1242, %v1242
      %v1275 = vpack.c.b16 %v1243, %v1243
      %v1276 = vpack.c.b16 %v1244, %v1244
      %v1277 = vpack.c.b16 %v1245, %v1245
      %v1278 = vpack.c.b16 %v1246, %v1246
      %v1279 = vpack.c.b16 %v1247, %v1247
      %vm1312 = vcmask 125952
      %1313 = vst.msk [vmem:[%s248] sm:$0xf] %vm1312, %v1248
      %1314 = vst.msk [vmem:[%s248 + $0x4] sm:$0xf] %vm1312, %v1249
      %1315 = vst.msk [vmem:[%s248 + $0x8] sm:$0xf] %vm1312, %v1250
      %1316 = vst.msk [vmem:[%s248 + $0xc] sm:$0xf] %vm1312, %v1251
      %1317 = vst.msk [vmem:[%s248 + $0x10] sm:$0xf] %vm1312, %v1252
      %1318 = vst.msk [vmem:[%s248 + $0x14] sm:$0xf] %vm1312, %v1253
      %1319 = vst.msk [vmem:[%s248 + $0x18] sm:$0xf] %vm1312, %v1254
      %1320 = vst.msk [vmem:[%s248 + $0x1c] sm:$0xf] %vm1312, %v1255
      %1321 = vst.msk [vmem:[%s248 + $0x20] sm:$0xf] %vm1312, %v1256
      %1322 = vst.msk [vmem:[%s248 + $0x24] sm:$0xf] %vm1312, %v1257
      %1323 = vst.msk [vmem:[%s248 + $0x28] sm:$0xf] %vm1312, %v1258
      %1324 = vst.msk [vmem:[%s248 + $0x2c] sm:$0xf] %vm1312, %v1259
      %1325 = vst.msk [vmem:[%s248 + $0x30] sm:$0xf] %vm1312, %v1260
      %1326 = vst.msk [vmem:[%s248 + $0x34] sm:$0xf] %vm1312, %v1261
      %1327 = vst.msk [vmem:[%s248 + $0x38] sm:$0xf] %vm1312, %v1262
      %1328 = vst.msk [vmem:[%s248 + $0x3c] sm:$0xf] %vm1312, %v1263
      %1329 = vst.msk [vmem:[%s248 + $0x40] sm:$0xf] %vm1312, %v1264
      %1330 = vst.msk [vmem:[%s248 + $0x44] sm:$0xf] %vm1312, %v1265
      %1331 = vst.msk [vmem:[%s248 + $0x48] sm:$0xf] %vm1312, %v1266
      %1332 = vst.msk [vmem:[%s248 + $0x4c] sm:$0xf] %vm1312, %v1267
      %1333 = vst.msk [vmem:[%s248 + $0x50] sm:$0xf] %vm1312, %v1268
      %1334 = vst.msk [vmem:[%s248 + $0x54] sm:$0xf] %vm1312, %v1269
      %1335 = vst.msk [vmem:[%s248 + $0x58] sm:$0xf] %vm1312, %v1270
      %1336 = vst.msk [vmem:[%s248 + $0x5c] sm:$0xf] %vm1312, %v1271
      %1337 = vst.msk [vmem:[%s248 + $0x60] sm:$0xf] %vm1312, %v1272
      %1338 = vst.msk [vmem:[%s248 + $0x64] sm:$0xf] %vm1312, %v1273
      %1339 = vst.msk [vmem:[%s248 + $0x68] sm:$0xf] %vm1312, %v1274
      %1340 = vst.msk [vmem:[%s248 + $0x6c] sm:$0xf] %vm1312, %v1275
      %1341 = vst.msk [vmem:[%s248 + $0x70] sm:$0xf] %vm1312, %v1276
      %1342 = vst.msk [vmem:[%s248 + $0x74] sm:$0xf] %vm1312, %v1277
      %1343 = vst.msk [vmem:[%s248 + $0x78] sm:$0xf] %vm1312, %v1278
      %1344 = vst.msk [vmem:[%s248 + $0x7c] sm:$0xf] %vm1312, %v1279
      %s1345 = smul.u32 32, %s19
      %p1346 = scmp.lt.s32.totalorder %s18, 3
      %s1347 = scalar_select %p1346, %s18, 3
      %p1348 = scmp.lt.s32.totalorder %s1345, 31
      %s1349 = scalar_select %p1348, %s1345, 31
      %s1350 = smul.addr %s1347, 32
      %s1351 = sadd.s32 %s1349, %s1350
      %s1352 = smul.addr %s1351, 4
      %s1353 = scalar_lea.vmem %s3, %s1352
      // Predicated region
      $region33: #{dpsa3d_forward.4} parent=31 // pred_check
        %p1354 = pneg %p126
      $region34: #{dpsa3d_forward.4} parent=31 // pred_check_branch
        %1356 = sbr.rel (%p1354) target = $region36
      $region35: #{dpsa3d_forward.4} parent=31 // pred_region
        %s1357 = smul.u32 32, %s19
      $region36: #{dpsa3d_forward.4} parent=31 // pred_fallthru
        _
    $region32: #{dpsa3d_forward.4} parent=5 // pred_fallthru
      _
    %p1358 = scmp.le.s32.totalorder 2, %s9
    // Predicated region
    $region37: #{dpsa3d_forward.4} parent=5 // pred_check
      %p1359 = pneg %p1358
    $region38: #{dpsa3d_forward.4} parent=5 // pred_check_branch
      %1361 = sbr.rel (%p1359) target = $region40
    $region39: #{dpsa3d_forward.4} parent=5 // pred_region
      %s1362 = ssub.s32 %s9, 2
      // Predicated region
      $region41: #{dpsa3d_forward.4} parent=39 // pred_check
        %p1363 = pneg %p132
      $region42: #{dpsa3d_forward.4} parent=39 // pred_check_branch
        %1365 = sbr.rel (%p1363) target = $region44
      $region43: #{dpsa3d_forward.4} parent=39 // pred_region
        %s1366 = smul.u32 32, %s21
        %p1367 = scmp.lt.s32.totalorder %s20, 3
        %s1368 = scalar_select %p1367, %s20, 3
        %p1369 = scmp.lt.s32.totalorder %s1366, 31
        %s1370 = scalar_select %p1369, %s1366, 31
        %s1371 = smul.addr %s1368, 32
        %s1372 = sadd.s32 %s1370, %s1371
        %s1373 = smul.addr %s1372, 4
        %s1374 = scalar_lea.vmem %s3, %s1373
      $region44: #{dpsa3d_forward.4} parent=39 // pred_fallthru
        _
    $region40: #{dpsa3d_forward.4} parent=5 // pred_fallthru
      _
  $region6: #{dpsa3d_forward.4} parent=0 // loop_footer
    %s13 = sadd.s32 1, %s9
  $region7: #{dpsa3d_forward.4} parent=0 // loop_footer_branch
    %8 = sbr.rel target = $region3
  $region8: #{dpsa3d_forward.4} parent=0 // loop_exit
    _

// kernel: dpsa3d_forward.5
$region0: #{dpsa3d_forward.5}
  #allocation0 [shape = 'u32[]', space=smem, size = 0x4, offset = 0x4, fixed_abs, tag = 'smem constant byte address 0x4 - core index']
  #allocation1 [shape = 'u32[144,128]{1,0:T(1,128)}', space=vmem, size = 0x12000, scoped, tag = 'internal scratch']
  %s0 = inlined_call_operand.vmem [shape: bf16[32,512], index: 0, kind: input, shape index: {}]
  %s1 = inlined_call_operand.vmem [shape: bf16[512,128], index: 1, kind: input, shape index: {}]
  %s2 = inlined_call_operand.vmem [shape: f32[1,128], index: 2, kind: input, shape index: {}]
  %s3 = inlined_call_operand.vmem [shape: f32[32,128], index: 3, kind: output, shape index: {}]
  %s4 = sld [smem:[#allocation0]]
  $region22: #{dpsa3d_forward.5} parent=0
    _
  %s6 = ssub.s32 1, %s4
  %s7 = scalar_select 0, %s6, %s4
  // Predicated region
  $region2: #{dpsa3d_forward.5} parent=0 // pred_check
    _
  $region3: #{dpsa3d_forward.5} parent=0 // pred_check_branch
    %9 = sbr.rel (0) target = $region5
  $region4: #{dpsa3d_forward.5} parent=0 // pred_region
    _
  $region5: #{dpsa3d_forward.5} parent=0 // pred_fallthru
    _
  // Predicated region
  $region6: #{dpsa3d_forward.5} parent=0 // pred_check
    _
  $region7: #{dpsa3d_forward.5} parent=0 // pred_check_branch
    %11 = sbr.rel (0) target = $region9
  $region8: #{dpsa3d_forward.5} parent=0 // pred_region
    _
  $region9: #{dpsa3d_forward.5} parent=0 // pred_fallthru
    _
  // Predicated region
  $region10: #{dpsa3d_forward.5} parent=0 // pred_check
    _
  $region11: #{dpsa3d_forward.5} parent=0 // pred_check_branch
    %13 = sbr.rel (0) target = $region13
  $region12: #{dpsa3d_forward.5} parent=0 // pred_region
    _
  $region13: #{dpsa3d_forward.5} parent=0 // pred_fallthru
    _
  %v15 = vld [vmem:[%s0] sm:$0xff]
  %v16 = vld [vmem:[%s0 + $0x8] sm:$0xff]
  %v17 = vld [vmem:[%s0 + $0x10] sm:$0xff]
  %v18 = vld [vmem:[%s0 + $0x18] sm:$0xff]
  %v19 = vld [vmem:[%s0 + $0x20] sm:$0xff]
  %v20 = vld [vmem:[%s0 + $0x28] sm:$0xff]
  %v21 = vld [vmem:[%s0 + $0x30] sm:$0xff]
  %v22 = vld [vmem:[%s0 + $0x38] sm:$0xff]
  %v23 = vld [vmem:[%s1] sm:$0xf]
  %v24 = vld [vmem:[%s1 + $0x4] sm:$0xf]
  %v25 = vld [vmem:[%s1 + $0x8] sm:$0xf]
  %v26 = vld [vmem:[%s1 + $0xc] sm:$0xf]
  %v27 = vld [vmem:[%s1 + $0x10] sm:$0xf]
  %v28 = vld [vmem:[%s1 + $0x14] sm:$0xf]
  %v29 = vld [vmem:[%s1 + $0x18] sm:$0xf]
  %v30 = vld [vmem:[%s1 + $0x1c] sm:$0xf]
  %v31 = vld [vmem:[%s1 + $0x20] sm:$0xf]
  %v32 = vld [vmem:[%s1 + $0x24] sm:$0xf]
  %v33 = vld [vmem:[%s1 + $0x28] sm:$0xf]
  %v34 = vld [vmem:[%s1 + $0x2c] sm:$0xf]
  %v35 = vld [vmem:[%s1 + $0x30] sm:$0xf]
  %v36 = vld [vmem:[%s1 + $0x34] sm:$0xf]
  %v37 = vld [vmem:[%s1 + $0x38] sm:$0xf]
  %v38 = vld [vmem:[%s1 + $0x3c] sm:$0xf]
  %v39 = vld [vmem:[%s1 + $0x40] sm:$0xf]
  %v40 = vld [vmem:[%s1 + $0x44] sm:$0xf]
  %v41 = vld [vmem:[%s1 + $0x48] sm:$0xf]
  %v42 = vld [vmem:[%s1 + $0x4c] sm:$0xf]
  %v43 = vld [vmem:[%s1 + $0x50] sm:$0xf]
  %v44 = vld [vmem:[%s1 + $0x54] sm:$0xf]
  %v45 = vld [vmem:[%s1 + $0x58] sm:$0xf]
  %v46 = vld [vmem:[%s1 + $0x5c] sm:$0xf]
  %v47 = vld [vmem:[%s1 + $0x60] sm:$0xf]
  %v48 = vld [vmem:[%s1 + $0x64] sm:$0xf]
  %v49 = vld [vmem:[%s1 + $0x68] sm:$0xf]
  %v50 = vld [vmem:[%s1 + $0x6c] sm:$0xf]
  %v51 = vld [vmem:[%s1 + $0x70] sm:$0xf]
  %v52 = vld [vmem:[%s1 + $0x74] sm:$0xf]
  %v53 = vld [vmem:[%s1 + $0x78] sm:$0xf]
  %v54 = vld [vmem:[%s1 + $0x7c] sm:$0xf]
  %v55 = vld [vmem:[%s1 + $0x80] sm:$0xf]
  %v56 = vld [vmem:[%s1 + $0x84] sm:$0xf]
  %v57 = vld [vmem:[%s1 + $0x88] sm:$0xf]
  %v58 = vld [vmem:[%s1 + $0x8c] sm:$0xf]
  %v59 = vld [vmem:[%s1 + $0x90] sm:$0xf]
  %v60 = vld [vmem:[%s1 + $0x94] sm:$0xf]
  %v61 = vld [vmem:[%s1 + $0x98] sm:$0xf]
  %v62 = vld [vmem:[%s1 + $0x9c] sm:$0xf]
  %v63 = vld [vmem:[%s1 + $0xa0] sm:$0xf]
  %v64 = vld [vmem:[%s1 + $0xa4] sm:$0xf]
  %v65 = vld [vmem:[%s1 + $0xa8] sm:$0xf]
  %v66 = vld [vmem:[%s1 + $0xac] sm:$0xf]
  %v67 = vld [vmem:[%s1 + $0xb0] sm:$0xf]
  %v68 = vld [vmem:[%s1 + $0xb4] sm:$0xf]
  %v69 = vld [vmem:[%s1 + $0xb8] sm:$0xf]
  %v70 = vld [vmem:[%s1 + $0xbc] sm:$0xf]
  %v71 = vld [vmem:[%s1 + $0xc0] sm:$0xf]
  %v72 = vld [vmem:[%s1 + $0xc4] sm:$0xf]
  %v73 = vld [vmem:[%s1 + $0xc8] sm:$0xf]
  %v74 = vld [vmem:[%s1 + $0xcc] sm:$0xf]
  %v75 = vld [vmem:[%s1 + $0xd0] sm:$0xf]
  %v76 = vld [vmem:[%s1 + $0xd4] sm:$0xf]
  %v77 = vld [vmem:[%s1 + $0xd8] sm:$0xf]
  %v78 = vld [vmem:[%s1 + $0xdc] sm:$0xf]
  %v79 = vld [vmem:[%s1 + $0xe0] sm:$0xf]
  %v80 = vld [vmem:[%s1 + $0xe4] sm:$0xf]
  %v81 = vld [vmem:[%s1 + $0xe8] sm:$0xf]
  %v82 = vld [vmem:[%s1 + $0xec] sm:$0xf]
  %v83 = vld [vmem:[%s1 + $0xf0] sm:$0xf]
  %v84 = vld [vmem:[%s1 + $0xf4] sm:$0xf]
  %v85 = vld [vmem:[%s1 + $0xf8] sm:$0xf]
  %v86 = vld [vmem:[%s1 + $0xfc] sm:$0xf]
  %v87 = vld [vmem:[%s2] sm:$0x1]
  %v89 = vlaneseq
  %v90 = vshrl.u32 %v89, 7
  %v91 = vsub.s32 0, %v90
  %v92 = vrot.slane %v87, %v91
  %v102 = vunpack.c.l.b16 %v15
  %v103 = vunpack.c.h.b16 %v15
  %v104 = vunpack.c.l.b16 %v16
  %v105 = vunpack.c.h.b16 %v16
  %v106 = vunpack.c.l.b16 %v17
  %v107 = vunpack.c.h.b16 %v17
  %v108 = vunpack.c.l.b16 %v18
  %v109 = vunpack.c.h.b16 %v18
  %v110 = vunpack.c.l.b16 %v19
  %v111 = vunpack.c.h.b16 %v19
  %v112 = vunpack.c.l.b16 %v20
  %v113 = vunpack.c.h.b16 %v20
  %v114 = vunpack.c.l.b16 %v21
  %v115 = vunpack.c.h.b16 %v21
  %v116 = vunpack.c.l.b16 %v22
  %v117 = vunpack.c.h.b16 %v22
  %v118 = vpack.c.b16 %v106, %v102
  %v119 = vpack.c.b16 %v107, %v103
  %v120 = vpack.c.b16 %v108, %v104
  %v121 = vpack.c.b16 %v109, %v105
  %v122 = vpack.c.b16 %v114, %v110
  %v123 = vpack.c.b16 %v115, %v111
  %v124 = vpack.c.b16 %v116, %v112
  %v125 = vpack.c.b16 %v117, %v113
  %v198 = vunpack.c.l.b16 %v23
  %v199 = vunpack.c.l.b16 %v24
  %v200 = vunpack.c.l.b16 %v25
  %v201 = vunpack.c.l.b16 %v26
  %v202 = vunpack.c.l.b16 %v27
  %v203 = vunpack.c.l.b16 %v28
  %v204 = vunpack.c.l.b16 %v29
  %v205 = vunpack.c.l.b16 %v30
  %v206 = vunpack.c.l.b16 %v31
  %v207 = vunpack.c.l.b16 %v32
  %v208 = vunpack.c.l.b16 %v33
  %v209 = vunpack.c.l.b16 %v34
  %v210 = vunpack.c.l.b16 %v35
  %v211 = vunpack.c.l.b16 %v36
  %v212 = vunpack.c.l.b16 %v37
  %v213 = vunpack.c.l.b16 %v38
  %v214 = vunpack.c.l.b16 %v39
  %v215 = vunpack.c.l.b16 %v40
  %v216 = vunpack.c.l.b16 %v41
  %v217 = vunpack.c.l.b16 %v42
  %v218 = vunpack.c.l.b16 %v43
  %v219 = vunpack.c.l.b16 %v44
  %v220 = vunpack.c.l.b16 %v45
  %v221 = vunpack.c.l.b16 %v46
  %v222 = vunpack.c.l.b16 %v47
  %v223 = vunpack.c.l.b16 %v48
  %v224 = vunpack.c.l.b16 %v49
  %v225 = vunpack.c.l.b16 %v50
  %v226 = vunpack.c.l.b16 %v51
  %v227 = vunpack.c.l.b16 %v52
  %v228 = vunpack.c.l.b16 %v53
  %v229 = vunpack.c.l.b16 %v54
  %v230 = vunpack.c.l.b16 %v55
  %v231 = vunpack.c.l.b16 %v56
  %v232 = vunpack.c.l.b16 %v57
  %v233 = vunpack.c.l.b16 %v58
  %v234 = vunpack.c.l.b16 %v59
  %v235 = vunpack.c.l.b16 %v60
  %v236 = vunpack.c.l.b16 %v61
  %v237 = vunpack.c.l.b16 %v62
  %v238 = vunpack.c.l.b16 %v63
  %v239 = vunpack.c.l.b16 %v64
  %v240 = vunpack.c.l.b16 %v65
  %v241 = vunpack.c.l.b16 %v66
  %v242 = vunpack.c.l.b16 %v67
  %v243 = vunpack.c.l.b16 %v68
  %v244 = vunpack.c.l.b16 %v69
  %v245 = vunpack.c.l.b16 %v70
  %v246 = vunpack.c.l.b16 %v71
  %v247 = vunpack.c.l.b16 %v72
  %v248 = vunpack.c.l.b16 %v73
  %v249 = vunpack.c.l.b16 %v74
  %v250 = vunpack.c.l.b16 %v75
  %v251 = vunpack.c.l.b16 %v76
  %v252 = vunpack.c.l.b16 %v77
  %v253 = vunpack.c.l.b16 %v78
  %v254 = vunpack.c.l.b16 %v79
  %v255 = vunpack.c.l.b16 %v80
  %v256 = vunpack.c.l.b16 %v81
  %v257 = vunpack.c.l.b16 %v82
  %v258 = vunpack.c.l.b16 %v83
  %v259 = vunpack.c.l.b16 %v84
  %v260 = vunpack.c.l.b16 %v85
  %v261 = vunpack.c.l.b16 %v86
  %v262 = vpack.c.b16 %v199, %v198
  %v263 = vpack.c.b16 %v201, %v200
  %v264 = vpack.c.b16 %v203, %v202
  %v265 = vpack.c.b16 %v205, %v204
  %v266 = vpack.c.b16 %v207, %v206
  %v267 = vpack.c.b16 %v209, %v208
  %v268 = vpack.c.b16 %v211, %v210
  %v269 = vpack.c.b16 %v213, %v212
  %v270 = vpack.c.b16 %v215, %v214
  %v271 = vpack.c.b16 %v217, %v216
  %v272 = vpack.c.b16 %v219, %v218
  %v273 = vpack.c.b16 %v221, %v220
  %v274 = vpack.c.b16 %v223, %v222
  %v275 = vpack.c.b16 %v225, %v224
  %v276 = vpack.c.b16 %v227, %v226
  %v277 = vpack.c.b16 %v229, %v228
  %v278 = vpack.c.b16 %v231, %v230
  %v279 = vpack.c.b16 %v233, %v232
  %v280 = vpack.c.b16 %v235, %v234
  %v281 = vpack.c.b16 %v237, %v236
  %v282 = vpack.c.b16 %v239, %v238
  %v283 = vpack.c.b16 %v241, %v240
  %v284 = vpack.c.b16 %v243, %v242
  %v285 = vpack.c.b16 %v245, %v244
  %v286 = vpack.c.b16 %v247, %v246
  %v287 = vpack.c.b16 %v249, %v248
  %v288 = vpack.c.b16 %v251, %v250
  %v289 = vpack.c.b16 %v253, %v252
  %v290 = vpack.c.b16 %v255, %v254
  %v291 = vpack.c.b16 %v257, %v256
  %v292 = vpack.c.b16 %v259, %v258
  %v293 = vpack.c.b16 %v261, %v260
  %326 = vmatprep.subr.bf16.mxu0 0
  %327 = vmatpush1.bf16.msra.mxu0 %v262
  %328 = vmatprep.subr.bf16.mxu0 0
  %329 = vmatpush1.bf16.msra.mxu0 %v263
  %330 = vmatprep.subr.bf16.mxu0 0
  %331 = vmatpush1.bf16.msra.mxu0 %v264
  %332 = vmatprep.subr.bf16.mxu0 0
  %333 = vmatpush1.bf16.msra.mxu0 %v265
  %334 = vmatprep.subr.bf16.mxu0 0
  %335 = vmatpush1.bf16.msra.mxu0 %v266
  %336 = vmatprep.subr.bf16.mxu0 0
  %337 = vmatpush1.bf16.msra.mxu0 %v267
  %338 = vmatprep.subr.bf16.mxu0 0
  %339 = vmatpush1.bf16.msra.mxu0 %v268
  %340 = vmatprep.subr.bf16.mxu0 0
  %341 = vmatpush1.bf16.msra.mxu0 %v269
  %342 = vmatprep.subr.bf16.mxu0 0
  %343 = vmatpush1.bf16.msra.mxu0 %v270
  %344 = vmatprep.subr.bf16.mxu0 0
  %345 = vmatpush1.bf16.msra.mxu0 %v271
  %346 = vmatprep.subr.bf16.mxu0 0
  %347 = vmatpush1.bf16.msra.mxu0 %v272
  %348 = vmatprep.subr.bf16.mxu0 0
  %349 = vmatpush1.bf16.msra.mxu0 %v273
  %350 = vmatprep.subr.bf16.mxu0 0
  %351 = vmatpush1.bf16.msra.mxu0 %v274
  %352 = vmatprep.subr.bf16.mxu0 0
  %353 = vmatpush1.bf16.msra.mxu0 %v275
  %354 = vmatprep.subr.bf16.mxu0 0
  %355 = vmatpush1.bf16.msra.mxu0 %v276
  %356 = vmatprep.subr.bf16.mxu0 0
  %357 = vmatpush1.bf16.msra.mxu0 %v277
  %358 = vmatprep.mubr.bf16.mxu0 %v119
  %359 = vmatmul.mubr.bf16.gmra.mrb[0].mxu0 %v118
  %v360 = vpop.f32.mrb[0].mxu0
  %v361 = vadd.f32 %v92, %v360
  %v362 = vpop.f32.mrb[0].mxu0
  %v363 = vpop.f32.mrb[0].mxu0
  %v364 = vadd.f32 %v92, %v363
  %v365 = vpop.f32.mrb[0].mxu0
  %366 = vmatprep.mubr.bf16.mxu0 %v123
  %367 = vmatmul.mubr.bf16.gmra.mrb[0].mxu0 %v122
  %v368 = vpop.f32.mrb[0].mxu0
  %v369 = vadd.f32 %v92, %v368
  %v370 = vpop.f32.mrb[0].mxu0
  %v371 = vpop.f32.mrb[0].mxu0
  %v372 = vadd.f32 %v92, %v371
  %v373 = vpop.f32.mrb[0].mxu0
  %374 = vdwg.mxu0
  %375 = vmatprep.subr.bf16.mxu0 0
  %376 = vmatpush1.bf16.msra.mxu0 %v278
  %377 = vmatprep.subr.bf16.mxu0 0
  %378 = vmatpush1.bf16.msra.mxu0 %v279
  %379 = vmatprep.subr.bf16.mxu0 0
  %380 = vmatpush1.bf16.msra.mxu0 %v280
  %381 = vmatprep.subr.bf16.mxu0 0
  %382 = vmatpush1.bf16.msra.mxu0 %v281
  %383 = vmatprep.subr.bf16.mxu0 0
  %384 = vmatpush1.bf16.msra.mxu0 %v282
  %385 = vmatprep.subr.bf16.mxu0 0
  %386 = vmatpush1.bf16.msra.mxu0 %v283
  %387 = vmatprep.subr.bf16.mxu0 0
  %388 = vmatpush1.bf16.msra.mxu0 %v284
  %389 = vmatprep.subr.bf16.mxu0 0
  %390 = vmatpush1.bf16.msra.mxu0 %v285
  %391 = vmatprep.subr.bf16.mxu0 0
  %392 = vmatpush1.bf16.msra.mxu0 %v286
  %393 = vmatprep.subr.bf16.mxu0 0
  %394 = vmatpush1.bf16.msra.mxu0 %v287
  %395 = vmatprep.subr.bf16.mxu0 0
  %396 = vmatpush1.bf16.msra.mxu0 %v288
  %397 = vmatprep.subr.bf16.mxu0 0
  %398 = vmatpush1.bf16.msra.mxu0 %v289
  %399 = vmatprep.subr.bf16.mxu0 0
  %400 = vmatpush1.bf16.msra.mxu0 %v290
  %401 = vmatprep.subr.bf16.mxu0 0
  %402 = vmatpush1.bf16.msra.mxu0 %v291
  %403 = vmatprep.subr.bf16.mxu0 0
  %404 = vmatpush1.bf16.msra.mxu0 %v292
  %405 = vmatprep.subr.bf16.mxu0 0
  %406 = vmatpush1.bf16.msra.mxu0 %v293
  %407 = vmatprep.mubr.bf16.mxu0 %v121
  %408 = vmatmul.mubr.bf16.gmra.mrb[0].mxu0 %v120
  %v409 = vpop.f32.mrb[0].mxu0
  %v410 = vadd.f32 %v361, %v409
  %v411 = vpop.f32.mrb[0].mxu0
  %v412 = vpop.f32.mrb[0].mxu0
  %v413 = vadd.f32 %v364, %v412
  %v414 = vpop.f32.mrb[0].mxu0
  %415 = vmatprep.mubr.bf16.mxu0 %v125
  %416 = vmatmul.mubr.bf16.gmra.mrb[0].mxu0 %v124
  %v417 = vpop.f32.mrb[0].mxu0
  %v418 = vadd.f32 %v369, %v417
  %v419 = vpop.f32.mrb[0].mxu0
  %v420 = vpop.f32.mrb[0].mxu0
  %v421 = vadd.f32 %v372, %v420
  %v422 = vpop.f32.mrb[0].mxu0
  %423 = vdwg.mxu0
  %424 = vst [vmem:[%s3] sm:$0xff] %v410
  %425 = vst [vmem:[%s3 + $0x8] sm:$0xff] %v413
  %426 = vst [vmem:[%s3 + $0x10] sm:$0xff] %v418
  %427 = vst [vmem:[%s3 + $0x18] sm:$0xff] %v421
  // Predicated region
  $region14: #{dpsa3d_forward.5} parent=0 // pred_check
    _
  $region15: #{dpsa3d_forward.5} parent=0 // pred_check_branch
    %429 = sbr.rel (0) target = $region17
  $region16: #{dpsa3d_forward.5} parent=0 // pred_region
    _
  $region17: #{dpsa3d_forward.5} parent=0 // pred_fallthru
    _
  // Predicated region
  $region18: #{dpsa3d_forward.5} parent=0 // pred_check
    _
  $region19: #{dpsa3d_forward.5} parent=0 // pred_check_branch
    %431 = sbr.rel (0) target = $region21
  $region20: #{dpsa3d_forward.5} parent=0 // pred_region
    _
  $region21: #{dpsa3d_forward.5} parent=0 // pred_fallthru
    _

</llo_original>
